<compile_context>
chip_gen: v5e
topology: v5e:2x2
jax: 0.10.0
libtpu: 0.0.40
codegen_flags: <defaults>
</compile_context>

<pallas_src>
import functools
import math

import jax
import jax.numpy as jnp
from jax import lax
from jax.experimental import pallas as pl
from jax.experimental.pallas import tpu as pltpu


# MXU operand dtype (accumulation stays f32). bf16 is native on v5e/v6e/v7x and
# halves the taps-scratch VMEM footprint.
_MXU_DTYPE = jnp.bfloat16

# Target flattened-spatial lanes per grid tile (whole padded rows). Keeps VMEM
# usage to a few MiB while staying lane-dense (>> 128 lanes).
_DEFAULT_MAX_TILE_LANES = 8192


# ----------------------------------------------------------------------------
# Pallas kernel: fused 3x3 conv tile (taps -> single matmul -> bias -> ReLU)
# ----------------------------------------------------------------------------
def _conv3x3_kernel(x_ref, w_ref, b_ref, o_ref, taps_ref, *,
                    wp, t_out, cin, relu, has_bias):
    """One (batch, row-tile) grid step.

    x_ref   : (1, 1, cin, tile_len)  zero-padded flattened spatial tile with a
              one-row halo above/below and a +-1 element margin
              (tile_len = t_out + 2*wp + 2).
    w_ref   : (cout, 9*cin)          taps stacked along K (resident).
    b_ref   : (cout, 1)              bias (resident).
    o_ref   : (1, 1, cout, t_out)    lane-dense output (spatial on lanes).
    taps_ref: (9*cin, t_out)         VMEM scratch, MXU dtype.
    """
    # Build the K-stacked operand from 9 statically shifted windows of the
    # padded tile (pure in-VMEM copies; no HBM duplication).
    for ky in range(3):
        for kx in range(3):
            t = ky * 3 + kx
            off = ky * wp + kx
            win = x_ref[0, 0, :, pl.ds(off, t_out)]          # (cin, t_out)
            taps_ref[pl.ds(t * cin, cin), :] = win.astype(taps_ref.dtype)

    # Single K = 9*cin matmul on the MXU, f32 accumulation.
    acc = jnp.dot(w_ref[...], taps_ref[...],
                  preferred_element_type=jnp.float32)        # (cout, t_out)
    if has_bias:
        acc = acc + b_ref[...].astype(jnp.float32)           # broadcast on lanes
    if relu:
        acc = jnp.maximum(acc, 0.0)
    o_ref[0, 0] = acc.astype(o_ref.dtype)


# ----------------------------------------------------------------------------
# Conv wrapper (layout glue in JAX, heavy compute in the kernel above)
# ----------------------------------------------------------------------------
def _pick_tile_rows(h, wp, max_lanes):
    """Largest divisor of h whose row-tile fits the lane budget."""
    best = 1
    for d in range(1, h + 1):
        if h % d == 0 and d * wp <= max_lanes:
            best = d
    return best


def conv3x3(x, w_oihw, bias=None, *, relu=False, weight_scale=None,
            max_tile_lanes=_DEFAULT_MAX_TILE_LANES):
    """3x3 conv, stride 1, padding 1. x: (N, Cin, H, W) -> (N, Cout, H, W)."""
    n, cin, h, w = x.shape
    cout = w_oihw.shape[0]
    hp, wp = h + 2, w + 2

    # Pad input channels to a multiple of 8 so in-kernel tap stacking is
    # sublane-aligned (extra channels are zeros -> no effect on the conv).
    cin_p = max(8, ((cin + 7) // 8) * 8)

    # Fold in/out scales into the weights at trace time (bias stays unscaled).
    wmat = w_oihw if weight_scale is None else w_oihw * weight_scale
    wmat = jnp.transpose(wmat, (0, 2, 3, 1))                 # (cout, 3, 3, cin)
    if cin_p != cin:
        wmat = jnp.pad(wmat, ((0, 0), (0, 0), (0, 0), (0, cin_p - cin)))
    wmat = wmat.reshape(cout, 9 * cin_p).astype(_MXU_DTYPE)

    has_bias = bias is not None
    b = bias if has_bias else jnp.zeros((cout,), jnp.float32)
    b = b.reshape(cout, 1).astype(jnp.float32)

    # Zero-pad spatially, flatten spatial, add a 1-element margin so every tap
    # window is one contiguous slice of the flattened buffer (boundary outputs
    # that mix rows land in the padded columns, which are discarded below).
    xpad = jnp.pad(x, ((0, 0), (0, cin_p - cin), (1, 1), (1, 1)))
    flat = xpad.reshape(n, cin_p, hp * wp)
    ext = jnp.pad(flat, ((0, 0), (0, 0), (1, 1)))            # (n, cin_p, hp*wp+2)

    th = _pick_tile_rows(h, wp, max_tile_lanes)              # rows per tile
    num_tiles = h // th
    t_out = th * wp
    tile_len = (th + 2) * wp + 2
    # Overlapping row-tiles with a 1-row halo (~(th+2)/th duplication, tiny).
    tiles = [lax.slice_in_dim(ext, i * t_out, i * t_out + tile_len, axis=2)
             for i in range(num_tiles)]
    x_tiles = jnp.stack(tiles, axis=1)                       # (n, nt, cin_p, tile_len)

    kernel = functools.partial(_conv3x3_kernel, wp=wp, t_out=t_out, cin=cin_p,
                               relu=relu, has_bias=has_bias)
    out = pl.pallas_call(
        kernel,
        out_shape=jax.ShapeDtypeStruct((n, num_tiles, cout, t_out), x.dtype),
        grid=(n, num_tiles),
        in_specs=[
            pl.BlockSpec((1, 1, cin_p, tile_len), lambda ni, ti: (ni, ti, 0, 0)),
            pl.BlockSpec((cout, 9 * cin_p), lambda ni, ti: (0, 0)),  # resident
            pl.BlockSpec((cout, 1), lambda ni, ti: (0, 0)),          # resident
        ],
        out_specs=pl.BlockSpec((1, 1, cout, t_out), lambda ni, ti: (ni, ti, 0, 0)),
        scratch_shapes=[pltpu.VMEM((9 * cin_p, t_out), _MXU_DTYPE)],
        compiler_params=pltpu.CompilerParams(
            dimension_semantics=("parallel", "parallel")),
    )(x_tiles, wmat, b)

    # Un-tile: (n, nt, cout, th*wp) -> (n, cout, h, wp); drop padded columns.
    out = out.reshape(n, num_tiles, cout, th, wp)
    out = jnp.transpose(out, (0, 2, 1, 3, 4)).reshape(n, cout, h, wp)
    return out[:, :, :, 1:1 + w]


# ----------------------------------------------------------------------------
# Model pieces
# ----------------------------------------------------------------------------
def attention_map(h, p, stride=16):
    """Squeeze-excite gate of AttentionBlock. h: (N,C,H,W) -> gate (N,C,H,W).

    The pooled branch is ceil(H/16) x ceil(W/16) spatial -- tiny -- so the pool,
    1x1 convs, sigmoid and nearest upsample stay in plain JAX.
    """
    # TODO(synk): the gate broadcast/multiply could be folded into conv2's
    # Pallas kernel (pass the pooled gate and expand in-kernel); kept as
    # XLA-fused glue here.
    k = 2 * stride - 1
    pad = stride - 1
    dims = (1, 1, k, k)
    strides = (1, 1, stride, stride)
    padding = [(0, 0), (0, 0), (pad, pad), (pad, pad)]
    # AvgPool2d(count_include_pad=False): divide by number of valid elements.
    sums = lax.reduce_window(h, 0.0, lax.add, dims, strides, padding)
    cnt = lax.reduce_window(jnp.ones_like(h[:, :1]), 0.0, lax.add,
                            dims, strides, padding)
    pooled = sums / cnt
    t = jnp.maximum(jnp.einsum('nchw,cd->ndhw', pooled, p['w1'])
                    + p['b1'][None, :, None, None], 0.0)
    t = jax.nn.sigmoid(jnp.einsum('ndhw,dc->nchw', t, p['w2'])
                       + p['b2'][None, :, None, None])
    t = jnp.repeat(jnp.repeat(t, stride, axis=2), stride, axis=3)  # nearest up
    return t[:, :, :h.shape[2], :h.shape[3]]                       # crop


def res_block(x, p, in_scale, out_scale, max_tile_lanes):
    # conv1(x * in_scale) + bias, ReLU: in_scale folded into weights, ReLU fused.
    h = conv3x3(x, p['c1w'], p['c1b'], relu=True, weight_scale=in_scale,
                max_tile_lanes=max_tile_lanes)
    # Gate multiply is fused by XLA into conv2's padding/tiling glue.
    h = h * attention_map(h, p['att'])
    # conv2 (no bias), * (2*out_scale) folded into weights; residual add fused
    # by XLA into the un-tiling slice.
    r = conv3x3(h, p['c2w'], None, weight_scale=2.0 * out_scale,
                max_tile_lanes=max_tile_lanes)
    return r + x


def pixel_shuffle(t, r):
    n, c, h, w = t.shape
    co = c // (r * r)
    t = t.reshape(n, co, r, r, h, w)
    t = jnp.transpose(t, (0, 1, 4, 2, 5, 3))
    return t.reshape(n, co, h * r, w * r)


def ninasr_forward(x, params, *, n_resblocks, scale,
                   max_tile_lanes=_DEFAULT_MAX_TILE_LANES):
    head = conv3x3(x, params['head_w'], max_tile_lanes=max_tile_lanes)  # no bias
    res = head
    out_scale = 4.0 / n_resblocks
    expected_variance = 1.0
    for i in range(n_resblocks):
        in_scale = 1.0 / math.sqrt(expected_variance)
        res = res_block(res, params['blocks'][i], in_scale, out_scale,
                        max_tile_lanes)
        expected_variance += out_scale ** 2
    res = res + head                                        # outer skip
    t = conv3x3(res, params['tail_w'], params['tail_b'],
                max_tile_lanes=max_tile_lanes)
    return pixel_shuffle(t, scale)


# ----------------------------------------------------------------------------
# Deterministic synthetic parameters (PyTorch OIHW conv layout)
# ----------------------------------------------------------------------------
def init_params(key, n_channels, n_resblocks, n_feats, scale,
                expansion=2.0, reduction=4):
    mid = int(n_feats * expansion)
    keys = iter(jax.random.split(key, 3 + 6 * n_resblocks))

    def conv_w(k, cout, cin, ksz=3):
        std = math.sqrt(2.0 / (cin * ksz * ksz))            # kaiming-like
        return jax.random.normal(k, (cout, cin, ksz, ksz), jnp.float32) * std

    params = {
        'head_w': conv_w(next(keys), n_feats, n_channels),
        'tail_w': conv_w(next(keys), n_channels * scale ** 2, n_feats),
        'tail_b': jax.random.normal(next(keys), (n_channels * scale ** 2,),
                                    jnp.float32) * 0.01,
        'blocks': [],
    }
    for _ in range(n_resblocks):
        blk = {
            'c1w': conv_w(next(keys), mid, n_feats),
            'c1b': jnp.zeros((mid,), jnp.float32),           # nn.init.zeros_
            'c2w': conv_w(next(keys), n_feats, mid),         # bias=False
            'att': {
                'w1': jax.random.normal(next(keys), (mid, mid // reduction),
                                        jnp.float32) * math.sqrt(1.0 / mid),
                'b1': jnp.zeros((mid // reduction,), jnp.float32),
                'w2': jax.random.normal(next(keys), (mid // reduction, mid),
                                        jnp.float32) * math.sqrt(reduction / mid),
                'b2': jnp.zeros((mid,), jnp.float32),
            },
        }
        params['blocks'].append(blk)
    return params


# ----------------------------------------------------------------------------
if __name__ == "__main__":
    n_channels, n_resblocks, n_feats, scale = 3, 2, 8, 2
    B, H, W = 2, 16, 16

    key = jax.random.PRNGKey(0)
    kp, kx = jax.random.split(key)
    params = init_params(kp, n_channels, n_resblocks, n_feats, scale)
    x = jax.random.normal(kx, (B, n_channels, H, W), jnp.float32)   # NCHW input

    fwd = jax.jit(functools.partial(ninasr_forward,
                                    n_resblocks=n_resblocks, scale=scale))
    y = fwd(x, params)
    jax.block_until_ready(y)
    assert y.shape == (B, n_channels, H * scale, W * scale), y.shape
    assert jnp.isfinite(y).all()

    # Self-check: force the multi-tile (halo) spatial-grid path and compare.
    fwd_tiled = jax.jit(functools.partial(ninasr_forward,
                                          n_resblocks=n_resblocks, scale=scale,
                                          max_tile_lanes=4 * (W + 2)))
    y2 = fwd_tiled(x, params)
    jax.block_until_ready(y2)
    assert jnp.allclose(y, y2, atol=1e-4, rtol=1e-4), \
        float(jnp.max(jnp.abs(y - y2)))

    print("KERNEL_OK")
</pallas_src>

<mosaic_0001>
module attributes {stable_mosaic.version = 11 : i64} {
  func.func @_conv3x3_kernel(%arg0: i32, %arg1: i32, %arg2: memref<1x1x8x326xf32, #tpu.memory_space<vmem>>, %arg3: memref<16x72xbf16, #tpu.memory_space<vmem>>, %arg4: memref<16x1xf32, #tpu.memory_space<vmem>>, %arg5: memref<1x1x16x288xf32, #tpu.memory_space<vmem>>, %arg6: memref<72x288xbf16, #tpu.memory_space<vmem>>) attributes {dimension_semantics = [#tpu.dimension_semantics<parallel>, #tpu.dimension_semantics<parallel>], iteration_bounds = array<i64: 2, 1>, scalar_prefetch = 0 : i64, scratch_operands = 1 : i64, tpu.core_type = #tpu.core_type<tc>, window_params = [{transform_indices = @transform_0, window_bounds = array<i64: 1, 1, 8, 326>}, {pipeline_mode = #tpu.pipeline_mode<synchronous>, transform_indices = @transform_1, window_bounds = array<i64: 16, 72>}, {pipeline_mode = #tpu.pipeline_mode<synchronous>, transform_indices = @transform_2, window_bounds = array<i64: 16, 1>}, {transform_indices = @transform_3, window_bounds = array<i64: 1, 1, 16, 288>}]} {
    %c0 = arith.constant 0 : index
    %c0_0 = arith.constant 0 : index
    %c0_1 = arith.constant 0 : index
    %c0_2 = arith.constant 0 : index
    %0 = vector.load %arg2[%c0, %c0_0, %c0_1, %c0_2] : memref<1x1x8x326xf32, #tpu.memory_space<vmem>>, vector<1x1x8x288xf32>
    %1 = vector.shape_cast %0 : vector<1x1x8x288xf32> to vector<8x288xf32>
    %2 = arith.truncf %1 : vector<8x288xf32> to vector<8x288xbf16>
    %c0_3 = arith.constant 0 : index
    %c0_4 = arith.constant 0 : index
    %3 = vector.load %arg6[%c0_3, %c0_4] : memref<72x288xbf16, #tpu.memory_space<vmem>>, vector<8x288xbf16>
    tpu.vector_store %arg6[%c0_3, %c0_4], %2 {strides = array<i32>} : memref<72x288xbf16, #tpu.memory_space<vmem>>, vector<8x288xbf16>,
    %c0_5 = arith.constant 0 : index
    %c0_6 = arith.constant 0 : index
    %c0_7 = arith.constant 0 : index
    %c1 = arith.constant 1 : index
    %4 = vector.load %arg2[%c0_5, %c0_6, %c0_7, %c1] : memref<1x1x8x326xf32, #tpu.memory_space<vmem>>, vector<1x1x8x288xf32>
    %5 = vector.shape_cast %4 : vector<1x1x8x288xf32> to vector<8x288xf32>
    %6 = arith.truncf %5 : vector<8x288xf32> to vector<8x288xbf16>
    %c8 = arith.constant 8 : index
    %c0_8 = arith.constant 0 : index
    %7 = vector.load %arg6[%c8, %c0_8] : memref<72x288xbf16, #tpu.memory_space<vmem>>, vector<8x288xbf16>
    tpu.vector_store %arg6[%c8, %c0_8], %6 {strides = array<i32>} : memref<72x288xbf16, #tpu.memory_space<vmem>>, vector<8x288xbf16>,
    %c0_9 = arith.constant 0 : index
    %c0_10 = arith.constant 0 : index
    %c0_11 = arith.constant 0 : index
    %c2 = arith.constant 2 : index
    %8 = vector.load %arg2[%c0_9, %c0_10, %c0_11, %c2] : memref<1x1x8x326xf32, #tpu.memory_space<vmem>>, vector<1x1x8x288xf32>
    %9 = vector.shape_cast %8 : vector<1x1x8x288xf32> to vector<8x288xf32>
    %10 = arith.truncf %9 : vector<8x288xf32> to vector<8x288xbf16>
    %c16 = arith.constant 16 : index
    %c0_12 = arith.constant 0 : index
    %11 = vector.load %arg6[%c16, %c0_12] : memref<72x288xbf16, #tpu.memory_space<vmem>>, vector<8x288xbf16>
    tpu.vector_store %arg6[%c16, %c0_12], %10 {strides = array<i32>} : memref<72x288xbf16, #tpu.memory_space<vmem>>, vector<8x288xbf16>,
    %c0_13 = arith.constant 0 : index
    %c0_14 = arith.constant 0 : index
    %c0_15 = arith.constant 0 : index
    %c18 = arith.constant 18 : index
    %12 = vector.load %arg2[%c0_13, %c0_14, %c0_15, %c18] : memref<1x1x8x326xf32, #tpu.memory_space<vmem>>, vector<1x1x8x288xf32>
    %13 = vector.shape_cast %12 : vector<1x1x8x288xf32> to vector<8x288xf32>
    %14 = arith.truncf %13 : vector<8x288xf32> to vector<8x288xbf16>
    %c24 = arith.constant 24 : index
    %c0_16 = arith.constant 0 : index
    %15 = vector.load %arg6[%c24, %c0_16] : memref<72x288xbf16, #tpu.memory_space<vmem>>, vector<8x288xbf16>
    tpu.vector_store %arg6[%c24, %c0_16], %14 {strides = array<i32>} : memref<72x288xbf16, #tpu.memory_space<vmem>>, vector<8x288xbf16>,
    %c0_17 = arith.constant 0 : index
    %c0_18 = arith.constant 0 : index
    %c0_19 = arith.constant 0 : index
    %c19 = arith.constant 19 : index
    %16 = vector.load %arg2[%c0_17, %c0_18, %c0_19, %c19] : memref<1x1x8x326xf32, #tpu.memory_space<vmem>>, vector<1x1x8x288xf32>
    %17 = vector.shape_cast %16 : vector<1x1x8x288xf32> to vector<8x288xf32>
    %18 = arith.truncf %17 : vector<8x288xf32> to vector<8x288xbf16>
    %c32 = arith.constant 32 : index
    %c0_20 = arith.constant 0 : index
    %19 = vector.load %arg6[%c32, %c0_20] : memref<72x288xbf16, #tpu.memory_space<vmem>>, vector<8x288xbf16>
    tpu.vector_store %arg6[%c32, %c0_20], %18 {strides = array<i32>} : memref<72x288xbf16, #tpu.memory_space<vmem>>, vector<8x288xbf16>,
    %c0_21 = arith.constant 0 : index
    %c0_22 = arith.constant 0 : index
    %c0_23 = arith.constant 0 : index
    %c20 = arith.constant 20 : index
    %20 = vector.load %arg2[%c0_21, %c0_22, %c0_23, %c20] : memref<1x1x8x326xf32, #tpu.memory_space<vmem>>, vector<1x1x8x288xf32>
    %21 = vector.shape_cast %20 : vector<1x1x8x288xf32> to vector<8x288xf32>
    %22 = arith.truncf %21 : vector<8x288xf32> to vector<8x288xbf16>
    %c40 = arith.constant 40 : index
    %c0_24 = arith.constant 0 : index
    %23 = vector.load %arg6[%c40, %c0_24] : memref<72x288xbf16, #tpu.memory_space<vmem>>, vector<8x288xbf16>
    tpu.vector_store %arg6[%c40, %c0_24], %22 {strides = array<i32>} : memref<72x288xbf16, #tpu.memory_space<vmem>>, vector<8x288xbf16>,
    %c0_25 = arith.constant 0 : index
    %c0_26 = arith.constant 0 : index
    %c0_27 = arith.constant 0 : index
    %c36 = arith.constant 36 : index
    %24 = vector.load %arg2[%c0_25, %c0_26, %c0_27, %c36] : memref<1x1x8x326xf32, #tpu.memory_space<vmem>>, vector<1x1x8x288xf32>
    %25 = vector.shape_cast %24 : vector<1x1x8x288xf32> to vector<8x288xf32>
    %26 = arith.truncf %25 : vector<8x288xf32> to vector<8x288xbf16>
    %c48 = arith.constant 48 : index
    %c0_28 = arith.constant 0 : index
    %27 = vector.load %arg6[%c48, %c0_28] : memref<72x288xbf16, #tpu.memory_space<vmem>>, vector<8x288xbf16>
    tpu.vector_store %arg6[%c48, %c0_28], %26 {strides = array<i32>} : memref<72x288xbf16, #tpu.memory_space<vmem>>, vector<8x288xbf16>,
    %c0_29 = arith.constant 0 : index
    %c0_30 = arith.constant 0 : index
    %c0_31 = arith.constant 0 : index
    %c37 = arith.constant 37 : index
    %28 = vector.load %arg2[%c0_29, %c0_30, %c0_31, %c37] : memref<1x1x8x326xf32, #tpu.memory_space<vmem>>, vector<1x1x8x288xf32>
    %29 = vector.shape_cast %28 : vector<1x1x8x288xf32> to vector<8x288xf32>
    %30 = arith.truncf %29 : vector<8x288xf32> to vector<8x288xbf16>
    %c56 = arith.constant 56 : index
    %c0_32 = arith.constant 0 : index
    %31 = vector.load %arg6[%c56, %c0_32] : memref<72x288xbf16, #tpu.memory_space<vmem>>, vector<8x288xbf16>
    tpu.vector_store %arg6[%c56, %c0_32], %30 {strides = array<i32>} : memref<72x288xbf16, #tpu.memory_space<vmem>>, vector<8x288xbf16>,
    %c0_33 = arith.constant 0 : index
    %c0_34 = arith.constant 0 : index
    %c0_35 = arith.constant 0 : index
    %c38 = arith.constant 38 : index
    %32 = vector.load %arg2[%c0_33, %c0_34, %c0_35, %c38] : memref<1x1x8x326xf32, #tpu.memory_space<vmem>>, vector<1x1x8x288xf32>
    %33 = vector.shape_cast %32 : vector<1x1x8x288xf32> to vector<8x288xf32>
    %34 = arith.truncf %33 : vector<8x288xf32> to vector<8x288xbf16>
    %c64 = arith.constant 64 : index
    %c0_36 = arith.constant 0 : index
    %35 = vector.load %arg6[%c64, %c0_36] : memref<72x288xbf16, #tpu.memory_space<vmem>>, vector<8x288xbf16>
    tpu.vector_store %arg6[%c64, %c0_36], %34 {strides = array<i32>} : memref<72x288xbf16, #tpu.memory_space<vmem>>, vector<8x288xbf16>,
    %c0_37 = arith.constant 0 : index
    %c0_38 = arith.constant 0 : index
    %36 = vector.load %arg3[%c0_37, %c0_38] : memref<16x72xbf16, #tpu.memory_space<vmem>>, vector<16x72xbf16>
    %c0_39 = arith.constant 0 : index
    %c0_40 = arith.constant 0 : index
    %37 = vector.load %arg6[%c0_39, %c0_40] : memref<72x288xbf16, #tpu.memory_space<vmem>>, vector<72x288xbf16>
    %cst = arith.constant dense<0.000000e+00> : vector<16x288xf32>
    %38 = tpu.matmul %36, %37, %cst {dimension_numbers = #tpu.dot_dimension_numbers<[1], [0], [0], [1], [0, 0, 1, 1], [], []>} : vector<16x72xbf16>, vector<72x288xbf16>, vector<16x288xf32> -> vector<16x288xf32>
    %c0_41 = arith.constant 0 : index
    %c0_42 = arith.constant 0 : index
    %39 = vector.load %arg4[%c0_41, %c0_42] : memref<16x1xf32, #tpu.memory_space<vmem>>, vector<16x1xf32>
    %40 = vector.broadcast %39 : vector<16x1xf32> to vector<16x288xf32>
    %41 = arith.addf %38, %40 : vector<16x288xf32>
    %cst_43 = arith.constant 0.000000e+00 : f32
    %42 = vector.broadcast %cst_43 : f32 to vector<16x288xf32>
    %43 = arith.maximumf %41, %42 : vector<16x288xf32>
    %c0_44 = arith.constant 0 : index
    %c0_45 = arith.constant 0 : index
    %c0_46 = arith.constant 0 : index
    %c0_47 = arith.constant 0 : index
    %44 = vector.load %arg5[%c0_44, %c0_45, %c0_46, %c0_47] : memref<1x1x16x288xf32, #tpu.memory_space<vmem>>, vector<1x1x16x288xf32>
    %45 = vector.shape_cast %44 : vector<1x1x16x288xf32> to vector<16x288xf32>
    %46 = vector.shape_cast %43 : vector<16x288xf32> to vector<1x1x16x288xf32>
    tpu.vector_store %arg5[%c0_44, %c0_45, %c0_46, %c0_47], %46 {strides = array<i32>} : memref<1x1x16x288xf32, #tpu.memory_space<vmem>>, vector<1x1x16x288xf32>,
    return
  }
  func.func @transform_0(%arg0: i32, %arg1: i32) -> (i32, i32, i32, i32) {
    %c0_i32 = arith.constant 0 : i32
    %c0_i32_0 = arith.constant 0 : i32
    %c0_i32_1 = arith.constant 0 : i32
    return %arg0, %arg1, %c0_i32, %c0_i32_0 : i32, i32, i32, i32
  }
  func.func @transform_1(%arg0: i32, %arg1: i32) -> (i32, i32) {
    %c0_i32 = arith.constant 0 : i32
    %c0_i32_0 = arith.constant 0 : i32
    %c0_i32_1 = arith.constant 0 : i32
    return %c0_i32, %c0_i32_0 : i32, i32
  }
  func.func @transform_2(%arg0: i32, %arg1: i32) -> (i32, i32) {
    %c0_i32 = arith.constant 0 : i32
    %c0_i32_0 = arith.constant 0 : i32
    %c0_i32_1 = arith.constant 0 : i32
    return %c0_i32, %c0_i32_0 : i32, i32
  }
  func.func @transform_3(%arg0: i32, %arg1: i32) -> (i32, i32, i32, i32) {
    %c0_i32 = arith.constant 0 : i32
    %c0_i32_0 = arith.constant 0 : i32
    %c0_i32_1 = arith.constant 0 : i32
    return %arg0, %arg1, %c0_i32, %c0_i32_0 : i32, i32, i32, i32
  }
}

module attributes {stable_mosaic.version = 11 : i64} {
  func.func @_conv3x3_kernel(%arg0: i32, %arg1: i32, %arg2: memref<1x1x8x326xf32, #tpu.memory_space<vmem>>, %arg3: memref<8x72xbf16, #tpu.memory_space<vmem>>, %arg4: memref<8x1xf32, #tpu.memory_space<vmem>>, %arg5: memref<1x1x8x288xf32, #tpu.memory_space<vmem>>, %arg6: memref<72x288xbf16, #tpu.memory_space<vmem>>) attributes {dimension_semantics = [#tpu.dimension_semantics<parallel>, #tpu.dimension_semantics<parallel>], iteration_bounds = array<i64: 2, 1>, scalar_prefetch = 0 : i64, scratch_operands = 1 : i64, tpu.core_type = #tpu.core_type<tc>, window_params = [{transform_indices = @transform_0, window_bounds = array<i64: 1, 1, 8, 326>}, {pipeline_mode = #tpu.pipeline_mode<synchronous>, transform_indices = @transform_1, window_bounds = array<i64: 8, 72>}, {pipeline_mode = #tpu.pipeline_mode<synchronous>, transform_indices = @transform_2, window_bounds = array<i64: 8, 1>}, {transform_indices = @transform_3, window_bounds = array<i64: 1, 1, 8, 288>}]} {
    %c0 = arith.constant 0 : index
    %c0_0 = arith.constant 0 : index
    %c0_1 = arith.constant 0 : index
    %c0_2 = arith.constant 0 : index
    %0 = vector.load %arg2[%c0, %c0_0, %c0_1, %c0_2] : memref<1x1x8x326xf32, #tpu.memory_space<vmem>>, vector<1x1x8x288xf32>
    %1 = vector.shape_cast %0 : vector<1x1x8x288xf32> to vector<8x288xf32>
    %2 = arith.truncf %1 : vector<8x288xf32> to vector<8x288xbf16>
    %c0_3 = arith.constant 0 : index
    %c0_4 = arith.constant 0 : index
    %3 = vector.load %arg6[%c0_3, %c0_4] : memref<72x288xbf16, #tpu.memory_space<vmem>>, vector<8x288xbf16>
    tpu.vector_store %arg6[%c0_3, %c0_4], %2 {strides = array<i32>} : memref<72x288xbf16, #tpu.memory_space<vmem>>, vector<8x288xbf16>,
    %c0_5 = arith.constant 0 : index
    %c0_6 = arith.constant 0 : index
    %c0_7 = arith.constant 0 : index
    %c1 = arith.constant 1 : index
    %4 = vector.load %arg2[%c0_5, %c0_6, %c0_7, %c1] : memref<1x1x8x326xf32, #tpu.memory_space<vmem>>, vector<1x1x8x288xf32>
    %5 = vector.shape_cast %4 : vector<1x1x8x288xf32> to vector<8x288xf32>
    %6 = arith.truncf %5 : vector<8x288xf32> to vector<8x288xbf16>
    %c8 = arith.constant 8 : index
    %c0_8 = arith.constant 0 : index
    %7 = vector.load %arg6[%c8, %c0_8] : memref<72x288xbf16, #tpu.memory_space<vmem>>, vector<8x288xbf16>
    tpu.vector_store %arg6[%c8, %c0_8], %6 {strides = array<i32>} : memref<72x288xbf16, #tpu.memory_space<vmem>>, vector<8x288xbf16>,
    %c0_9 = arith.constant 0 : index
    %c0_10 = arith.constant 0 : index
    %c0_11 = arith.constant 0 : index
    %c2 = arith.constant 2 : index
    %8 = vector.load %arg2[%c0_9, %c0_10, %c0_11, %c2] : memref<1x1x8x326xf32, #tpu.memory_space<vmem>>, vector<1x1x8x288xf32>
    %9 = vector.shape_cast %8 : vector<1x1x8x288xf32> to vector<8x288xf32>
    %10 = arith.truncf %9 : vector<8x288xf32> to vector<8x288xbf16>
    %c16 = arith.constant 16 : index
    %c0_12 = arith.constant 0 : index
    %11 = vector.load %arg6[%c16, %c0_12] : memref<72x288xbf16, #tpu.memory_space<vmem>>, vector<8x288xbf16>
    tpu.vector_store %arg6[%c16, %c0_12], %10 {strides = array<i32>} : memref<72x288xbf16, #tpu.memory_space<vmem>>, vector<8x288xbf16>,
    %c0_13 = arith.constant 0 : index
    %c0_14 = arith.constant 0 : index
    %c0_15 = arith.constant 0 : index
    %c18 = arith.constant 18 : index
    %12 = vector.load %arg2[%c0_13, %c0_14, %c0_15, %c18] : memref<1x1x8x326xf32, #tpu.memory_space<vmem>>, vector<1x1x8x288xf32>
    %13 = vector.shape_cast %12 : vector<1x1x8x288xf32> to vector<8x288xf32>
    %14 = arith.truncf %13 : vector<8x288xf32> to vector<8x288xbf16>
    %c24 = arith.constant 24 : index
    %c0_16 = arith.constant 0 : index
    %15 = vector.load %arg6[%c24, %c0_16] : memref<72x288xbf16, #tpu.memory_space<vmem>>, vector<8x288xbf16>
    tpu.vector_store %arg6[%c24, %c0_16], %14 {strides = array<i32>} : memref<72x288xbf16, #tpu.memory_space<vmem>>, vector<8x288xbf16>,
    %c0_17 = arith.constant 0 : index
    %c0_18 = arith.constant 0 : index
    %c0_19 = arith.constant 0 : index
    %c19 = arith.constant 19 : index
    %16 = vector.load %arg2[%c0_17, %c0_18, %c0_19, %c19] : memref<1x1x8x326xf32, #tpu.memory_space<vmem>>, vector<1x1x8x288xf32>
    %17 = vector.shape_cast %16 : vector<1x1x8x288xf32> to vector<8x288xf32>
    %18 = arith.truncf %17 : vector<8x288xf32> to vector<8x288xbf16>
    %c32 = arith.constant 32 : index
    %c0_20 = arith.constant 0 : index
    %19 = vector.load %arg6[%c32, %c0_20] : memref<72x288xbf16, #tpu.memory_space<vmem>>, vector<8x288xbf16>
    tpu.vector_store %arg6[%c32, %c0_20], %18 {strides = array<i32>} : memref<72x288xbf16, #tpu.memory_space<vmem>>, vector<8x288xbf16>,
    %c0_21 = arith.constant 0 : index
    %c0_22 = arith.constant 0 : index
    %c0_23 = arith.constant 0 : index
    %c20 = arith.constant 20 : index
    %20 = vector.load %arg2[%c0_21, %c0_22, %c0_23, %c20] : memref<1x1x8x326xf32, #tpu.memory_space<vmem>>, vector<1x1x8x288xf32>
    %21 = vector.shape_cast %20 : vector<1x1x8x288xf32> to vector<8x288xf32>
    %22 = arith.truncf %21 : vector<8x288xf32> to vector<8x288xbf16>
    %c40 = arith.constant 40 : index
    %c0_24 = arith.constant 0 : index
    %23 = vector.load %arg6[%c40, %c0_24] : memref<72x288xbf16, #tpu.memory_space<vmem>>, vector<8x288xbf16>
    tpu.vector_store %arg6[%c40, %c0_24], %22 {strides = array<i32>} : memref<72x288xbf16, #tpu.memory_space<vmem>>, vector<8x288xbf16>,
    %c0_25 = arith.constant 0 : index
    %c0_26 = arith.constant 0 : index
    %c0_27 = arith.constant 0 : index
    %c36 = arith.constant 36 : index
    %24 = vector.load %arg2[%c0_25, %c0_26, %c0_27, %c36] : memref<1x1x8x326xf32, #tpu.memory_space<vmem>>, vector<1x1x8x288xf32>
    %25 = vector.shape_cast %24 : vector<1x1x8x288xf32> to vector<8x288xf32>
    %26 = arith.truncf %25 : vector<8x288xf32> to vector<8x288xbf16>
    %c48 = arith.constant 48 : index
    %c0_28 = arith.constant 0 : index
    %27 = vector.load %arg6[%c48, %c0_28] : memref<72x288xbf16, #tpu.memory_space<vmem>>, vector<8x288xbf16>
    tpu.vector_store %arg6[%c48, %c0_28], %26 {strides = array<i32>} : memref<72x288xbf16, #tpu.memory_space<vmem>>, vector<8x288xbf16>,
    %c0_29 = arith.constant 0 : index
    %c0_30 = arith.constant 0 : index
    %c0_31 = arith.constant 0 : index
    %c37 = arith.constant 37 : index
    %28 = vector.load %arg2[%c0_29, %c0_30, %c0_31, %c37] : memref<1x1x8x326xf32, #tpu.memory_space<vmem>>, vector<1x1x8x288xf32>
    %29 = vector.shape_cast %28 : vector<1x1x8x288xf32> to vector<8x288xf32>
    %30 = arith.truncf %29 : vector<8x288xf32> to vector<8x288xbf16>
    %c56 = arith.constant 56 : index
    %c0_32 = arith.constant 0 : index
    %31 = vector.load %arg6[%c56, %c0_32] : memref<72x288xbf16, #tpu.memory_space<vmem>>, vector<8x288xbf16>
    tpu.vector_store %arg6[%c56, %c0_32], %30 {strides = array<i32>} : memref<72x288xbf16, #tpu.memory_space<vmem>>, vector<8x288xbf16>,
    %c0_33 = arith.constant 0 : index
    %c0_34 = arith.constant 0 : index
    %c0_35 = arith.constant 0 : index
    %c38 = arith.constant 38 : index
    %32 = vector.load %arg2[%c0_33, %c0_34, %c0_35, %c38] : memref<1x1x8x326xf32, #tpu.memory_space<vmem>>, vector<1x1x8x288xf32>
    %33 = vector.shape_cast %32 : vector<1x1x8x288xf32> to vector<8x288xf32>
    %34 = arith.truncf %33 : vector<8x288xf32> to vector<8x288xbf16>
    %c64 = arith.constant 64 : index
    %c0_36 = arith.constant 0 : index
    %35 = vector.load %arg6[%c64, %c0_36] : memref<72x288xbf16, #tpu.memory_space<vmem>>, vector<8x288xbf16>
    tpu.vector_store %arg6[%c64, %c0_36], %34 {strides = array<i32>} : memref<72x288xbf16, #tpu.memory_space<vmem>>, vector<8x288xbf16>,
    %c0_37 = arith.constant 0 : index
    %c0_38 = arith.constant 0 : index
    %36 = vector.load %arg3[%c0_37, %c0_38] : memref<8x72xbf16, #tpu.memory_space<vmem>>, vector<8x72xbf16>
    %c0_39 = arith.constant 0 : index
    %c0_40 = arith.constant 0 : index
    %37 = vector.load %arg6[%c0_39, %c0_40] : memref<72x288xbf16, #tpu.memory_space<vmem>>, vector<72x288xbf16>
    %cst = arith.constant dense<0.000000e+00> : vector<8x288xf32>
    %38 = tpu.matmul %36, %37, %cst {dimension_numbers = #tpu.dot_dimension_numbers<[1], [0], [0], [1], [0, 0, 1, 1], [], []>} : vector<8x72xbf16>, vector<72x288xbf16>, vector<8x288xf32> -> vector<8x288xf32>
    %c0_41 = arith.constant 0 : index
    %c0_42 = arith.constant 0 : index
    %c0_43 = arith.constant 0 : index
    %c0_44 = arith.constant 0 : index
    %39 = vector.load %arg5[%c0_41, %c0_42, %c0_43, %c0_44] : memref<1x1x8x288xf32, #tpu.memory_space<vmem>>, vector<1x1x8x288xf32>
    %40 = vector.shape_cast %39 : vector<1x1x8x288xf32> to vector<8x288xf32>
    %41 = vector.shape_cast %38 : vector<8x288xf32> to vector<1x1x8x288xf32>
    tpu.vector_store %arg5[%c0_41, %c0_42, %c0_43, %c0_44], %41 {strides = array<i32>} : memref<1x1x8x288xf32, #tpu.memory_space<vmem>>, vector<1x1x8x288xf32>,
    return
  }
  func.func @transform_0(%arg0: i32, %arg1: i32) -> (i32, i32, i32, i32) {
    %c0_i32 = arith.constant 0 : i32
    %c0_i32_0 = arith.constant 0 : i32
    %c0_i32_1 = arith.constant 0 : i32
    return %arg0, %arg1, %c0_i32, %c0_i32_0 : i32, i32, i32, i32
  }
  func.func @transform_1(%arg0: i32, %arg1: i32) -> (i32, i32) {
    %c0_i32 = arith.constant 0 : i32
    %c0_i32_0 = arith.constant 0 : i32
    %c0_i32_1 = arith.constant 0 : i32
    return %c0_i32, %c0_i32_0 : i32, i32
  }
  func.func @transform_2(%arg0: i32, %arg1: i32) -> (i32, i32) {
    %c0_i32 = arith.constant 0 : i32
    %c0_i32_0 = arith.constant 0 : i32
    %c0_i32_1 = arith.constant 0 : i32
    return %c0_i32, %c0_i32_0 : i32, i32
  }
  func.func @transform_3(%arg0: i32, %arg1: i32) -> (i32, i32, i32, i32) {
    %c0_i32 = arith.constant 0 : i32
    %c0_i32_0 = arith.constant 0 : i32
    %c0_i32_1 = arith.constant 0 : i32
    return %arg0, %arg1, %c0_i32, %c0_i32_0 : i32, i32, i32, i32
  }
}

module attributes {stable_mosaic.version = 11 : i64} {
  func.func @_conv3x3_kernel(%arg0: i32, %arg1: i32, %arg2: memref<1x1x16x326xf32, #tpu.memory_space<vmem>>, %arg3: memref<8x144xbf16, #tpu.memory_space<vmem>>, %arg4: memref<8x1xf32, #tpu.memory_space<vmem>>, %arg5: memref<1x1x8x288xf32, #tpu.memory_space<vmem>>, %arg6: memref<144x288xbf16, #tpu.memory_space<vmem>>) attributes {dimension_semantics = [#tpu.dimension_semantics<parallel>, #tpu.dimension_semantics<parallel>], iteration_bounds = array<i64: 2, 1>, scalar_prefetch = 0 : i64, scratch_operands = 1 : i64, tpu.core_type = #tpu.core_type<tc>, window_params = [{transform_indices = @transform_0, window_bounds = array<i64: 1, 1, 16, 326>}, {pipeline_mode = #tpu.pipeline_mode<synchronous>, transform_indices = @transform_1, window_bounds = array<i64: 8, 144>}, {pipeline_mode = #tpu.pipeline_mode<synchronous>, transform_indices = @transform_2, window_bounds = array<i64: 8, 1>}, {transform_indices = @transform_3, window_bounds = array<i64: 1, 1, 8, 288>}]} {
    %c0 = arith.constant 0 : index
    %c0_0 = arith.constant 0 : index
    %c0_1 = arith.constant 0 : index
    %c0_2 = arith.constant 0 : index
    %0 = vector.load %arg2[%c0, %c0_0, %c0_1, %c0_2] : memref<1x1x16x326xf32, #tpu.memory_space<vmem>>, vector<1x1x16x288xf32>
    %1 = vector.shape_cast %0 : vector<1x1x16x288xf32> to vector<16x288xf32>
    %2 = arith.truncf %1 : vector<16x288xf32> to vector<16x288xbf16>
    %c0_3 = arith.constant 0 : index
    %c0_4 = arith.constant 0 : index
    %3 = vector.load %arg6[%c0_3, %c0_4] : memref<144x288xbf16, #tpu.memory_space<vmem>>, vector<16x288xbf16>
    tpu.vector_store %arg6[%c0_3, %c0_4], %2 {strides = array<i32>} : memref<144x288xbf16, #tpu.memory_space<vmem>>, vector<16x288xbf16>,
    %c0_5 = arith.constant 0 : index
    %c0_6 = arith.constant 0 : index
    %c0_7 = arith.constant 0 : index
    %c1 = arith.constant 1 : index
    %4 = vector.load %arg2[%c0_5, %c0_6, %c0_7, %c1] : memref<1x1x16x326xf32, #tpu.memory_space<vmem>>, vector<1x1x16x288xf32>
    %5 = vector.shape_cast %4 : vector<1x1x16x288xf32> to vector<16x288xf32>
    %6 = arith.truncf %5 : vector<16x288xf32> to vector<16x288xbf16>
    %c16 = arith.constant 16 : index
    %c0_8 = arith.constant 0 : index
    %7 = vector.load %arg6[%c16, %c0_8] : memref<144x288xbf16, #tpu.memory_space<vmem>>, vector<16x288xbf16>
    tpu.vector_store %arg6[%c16, %c0_8], %6 {strides = array<i32>} : memref<144x288xbf16, #tpu.memory_space<vmem>>, vector<16x288xbf16>,
    %c0_9 = arith.constant 0 : index
    %c0_10 = arith.constant 0 : index
    %c0_11 = arith.constant 0 : index
    %c2 = arith.constant 2 : index
    %8 = vector.load %arg2[%c0_9, %c0_10, %c0_11, %c2] : memref<1x1x16x326xf32, #tpu.memory_space<vmem>>, vector<1x1x16x288xf32>
    %9 = vector.shape_cast %8 : vector<1x1x16x288xf32> to vector<16x288xf32>
    %10 = arith.truncf %9 : vector<16x288xf32> to vector<16x288xbf16>
    %c32 = arith.constant 32 : index
    %c0_12 = arith.constant 0 : index
    %11 = vector.load %arg6[%c32, %c0_12] : memref<144x288xbf16, #tpu.memory_space<vmem>>, vector<16x288xbf16>
    tpu.vector_store %arg6[%c32, %c0_12], %10 {strides = array<i32>} : memref<144x288xbf16, #tpu.memory_space<vmem>>, vector<16x288xbf16>,
    %c0_13 = arith.constant 0 : index
    %c0_14 = arith.constant 0 : index
    %c0_15 = arith.constant 0 : index
    %c18 = arith.constant 18 : index
    %12 = vector.load %arg2[%c0_13, %c0_14, %c0_15, %c18] : memref<1x1x16x326xf32, #tpu.memory_space<vmem>>, vector<1x1x16x288xf32>
    %13 = vector.shape_cast %12 : vector<1x1x16x288xf32> to vector<16x288xf32>
    %14 = arith.truncf %13 : vector<16x288xf32> to vector<16x288xbf16>
    %c48 = arith.constant 48 : index
    %c0_16 = arith.constant 0 : index
    %15 = vector.load %arg6[%c48, %c0_16] : memref<144x288xbf16, #tpu.memory_space<vmem>>, vector<16x288xbf16>
    tpu.vector_store %arg6[%c48, %c0_16], %14 {strides = array<i32>} : memref<144x288xbf16, #tpu.memory_space<vmem>>, vector<16x288xbf16>,
    %c0_17 = arith.constant 0 : index
    %c0_18 = arith.constant 0 : index
    %c0_19 = arith.constant 0 : index
    %c19 = arith.constant 19 : index
    %16 = vector.load %arg2[%c0_17, %c0_18, %c0_19, %c19] : memref<1x1x16x326xf32, #tpu.memory_space<vmem>>, vector<1x1x16x288xf32>
    %17 = vector.shape_cast %16 : vector<1x1x16x288xf32> to vector<16x288xf32>
    %18 = arith.truncf %17 : vector<16x288xf32> to vector<16x288xbf16>
    %c64 = arith.constant 64 : index
    %c0_20 = arith.constant 0 : index
    %19 = vector.load %arg6[%c64, %c0_20] : memref<144x288xbf16, #tpu.memory_space<vmem>>, vector<16x288xbf16>
    tpu.vector_store %arg6[%c64, %c0_20], %18 {strides = array<i32>} : memref<144x288xbf16, #tpu.memory_space<vmem>>, vector<16x288xbf16>,
    %c0_21 = arith.constant 0 : index
    %c0_22 = arith.constant 0 : index
    %c0_23 = arith.constant 0 : index
    %c20 = arith.constant 20 : index
    %20 = vector.load %arg2[%c0_21, %c0_22, %c0_23, %c20] : memref<1x1x16x326xf32, #tpu.memory_space<vmem>>, vector<1x1x16x288xf32>
    %21 = vector.shape_cast %20 : vector<1x1x16x288xf32> to vector<16x288xf32>
    %22 = arith.truncf %21 : vector<16x288xf32> to vector<16x288xbf16>
    %c80 = arith.constant 80 : index
    %c0_24 = arith.constant 0 : index
    %23 = vector.load %arg6[%c80, %c0_24] : memref<144x288xbf16, #tpu.memory_space<vmem>>, vector<16x288xbf16>
    tpu.vector_store %arg6[%c80, %c0_24], %22 {strides = array<i32>} : memref<144x288xbf16, #tpu.memory_space<vmem>>, vector<16x288xbf16>,
    %c0_25 = arith.constant 0 : index
    %c0_26 = arith.constant 0 : index
    %c0_27 = arith.constant 0 : index
    %c36 = arith.constant 36 : index
    %24 = vector.load %arg2[%c0_25, %c0_26, %c0_27, %c36] : memref<1x1x16x326xf32, #tpu.memory_space<vmem>>, vector<1x1x16x288xf32>
    %25 = vector.shape_cast %24 : vector<1x1x16x288xf32> to vector<16x288xf32>
    %26 = arith.truncf %25 : vector<16x288xf32> to vector<16x288xbf16>
    %c96 = arith.constant 96 : index
    %c0_28 = arith.constant 0 : index
    %27 = vector.load %arg6[%c96, %c0_28] : memref<144x288xbf16, #tpu.memory_space<vmem>>, vector<16x288xbf16>
    tpu.vector_store %arg6[%c96, %c0_28], %26 {strides = array<i32>} : memref<144x288xbf16, #tpu.memory_space<vmem>>, vector<16x288xbf16>,
    %c0_29 = arith.constant 0 : index
    %c0_30 = arith.constant 0 : index
    %c0_31 = arith.constant 0 : index
    %c37 = arith.constant 37 : index
    %28 = vector.load %arg2[%c0_29, %c0_30, %c0_31, %c37] : memref<1x1x16x326xf32, #tpu.memory_space<vmem>>, vector<1x1x16x288xf32>
    %29 = vector.shape_cast %28 : vector<1x1x16x288xf32> to vector<16x288xf32>
    %30 = arith.truncf %29 : vector<16x288xf32> to vector<16x288xbf16>
    %c112 = arith.constant 112 : index
    %c0_32 = arith.constant 0 : index
    %31 = vector.load %arg6[%c112, %c0_32] : memref<144x288xbf16, #tpu.memory_space<vmem>>, vector<16x288xbf16>
    tpu.vector_store %arg6[%c112, %c0_32], %30 {strides = array<i32>} : memref<144x288xbf16, #tpu.memory_space<vmem>>, vector<16x288xbf16>,
    %c0_33 = arith.constant 0 : index
    %c0_34 = arith.constant 0 : index
    %c0_35 = arith.constant 0 : index
    %c38 = arith.constant 38 : index
    %32 = vector.load %arg2[%c0_33, %c0_34, %c0_35, %c38] : memref<1x1x16x326xf32, #tpu.memory_space<vmem>>, vector<1x1x16x288xf32>
    %33 = vector.shape_cast %32 : vector<1x1x16x288xf32> to vector<16x288xf32>
    %34 = arith.truncf %33 : vector<16x288xf32> to vector<16x288xbf16>
    %c128 = arith.constant 128 : index
    %c0_36 = arith.constant 0 : index
    %35 = vector.load %arg6[%c128, %c0_36] : memref<144x288xbf16, #tpu.memory_space<vmem>>, vector<16x288xbf16>
    tpu.vector_store %arg6[%c128, %c0_36], %34 {strides = array<i32>} : memref<144x288xbf16, #tpu.memory_space<vmem>>, vector<16x288xbf16>,
    %c0_37 = arith.constant 0 : index
    %c0_38 = arith.constant 0 : index
    %36 = vector.load %arg3[%c0_37, %c0_38] : memref<8x144xbf16, #tpu.memory_space<vmem>>, vector<8x144xbf16>
    %c0_39 = arith.constant 0 : index
    %c0_40 = arith.constant 0 : index
    %37 = vector.load %arg6[%c0_39, %c0_40] : memref<144x288xbf16, #tpu.memory_space<vmem>>, vector<144x288xbf16>
    %cst = arith.constant dense<0.000000e+00> : vector<8x288xf32>
    %38 = tpu.matmul %36, %37, %cst {dimension_numbers = #tpu.dot_dimension_numbers<[1], [0], [0], [1], [0, 0, 1, 1], [], []>} : vector<8x144xbf16>, vector<144x288xbf16>, vector<8x288xf32> -> vector<8x288xf32>
    %c0_41 = arith.constant 0 : index
    %c0_42 = arith.constant 0 : index
    %c0_43 = arith.constant 0 : index
    %c0_44 = arith.constant 0 : index
    %39 = vector.load %arg5[%c0_41, %c0_42, %c0_43, %c0_44] : memref<1x1x8x288xf32, #tpu.memory_space<vmem>>, vector<1x1x8x288xf32>
    %40 = vector.shape_cast %39 : vector<1x1x8x288xf32> to vector<8x288xf32>
    %41 = vector.shape_cast %38 : vector<8x288xf32> to vector<1x1x8x288xf32>
    tpu.vector_store %arg5[%c0_41, %c0_42, %c0_43, %c0_44], %41 {strides = array<i32>} : memref<1x1x8x288xf32, #tpu.memory_space<vmem>>, vector<1x1x8x288xf32>,
    return
  }
  func.func @transform_0(%arg0: i32, %arg1: i32) -> (i32, i32, i32, i32) {
    %c0_i32 = arith.constant 0 : i32
    %c0_i32_0 = arith.constant 0 : i32
    %c0_i32_1 = arith.constant 0 : i32
    return %arg0, %arg1, %c0_i32, %c0_i32_0 : i32, i32, i32, i32
  }
  func.func @transform_1(%arg0: i32, %arg1: i32) -> (i32, i32) {
    %c0_i32 = arith.constant 0 : i32
    %c0_i32_0 = arith.constant 0 : i32
    %c0_i32_1 = arith.constant 0 : i32
    return %c0_i32, %c0_i32_0 : i32, i32
  }
  func.func @transform_2(%arg0: i32, %arg1: i32) -> (i32, i32) {
    %c0_i32 = arith.constant 0 : i32
    %c0_i32_0 = arith.constant 0 : i32
    %c0_i32_1 = arith.constant 0 : i32
    return %c0_i32, %c0_i32_0 : i32, i32
  }
  func.func @transform_3(%arg0: i32, %arg1: i32) -> (i32, i32, i32, i32) {
    %c0_i32 = arith.constant 0 : i32
    %c0_i32_0 = arith.constant 0 : i32
    %c0_i32_1 = arith.constant 0 : i32
    return %arg0, %arg1, %c0_i32, %c0_i32_0 : i32, i32, i32, i32
  }
}

module attributes {stable_mosaic.version = 11 : i64} {
  func.func @_conv3x3_kernel(%arg0: i32, %arg1: i32, %arg2: memref<1x1x8x326xf32, #tpu.memory_space<vmem>>, %arg3: memref<12x72xbf16, #tpu.memory_space<vmem>>, %arg4: memref<12x1xf32, #tpu.memory_space<vmem>>, %arg5: memref<1x1x12x288xf32, #tpu.memory_space<vmem>>, %arg6: memref<72x288xbf16, #tpu.memory_space<vmem>>) attributes {dimension_semantics = [#tpu.dimension_semantics<parallel>, #tpu.dimension_semantics<parallel>], iteration_bounds = array<i64: 2, 1>, scalar_prefetch = 0 : i64, scratch_operands = 1 : i64, tpu.core_type = #tpu.core_type<tc>, window_params = [{transform_indices = @transform_0, window_bounds = array<i64: 1, 1, 8, 326>}, {pipeline_mode = #tpu.pipeline_mode<synchronous>, transform_indices = @transform_1, window_bounds = array<i64: 12, 72>}, {pipeline_mode = #tpu.pipeline_mode<synchronous>, transform_indices = @transform_2, window_bounds = array<i64: 12, 1>}, {transform_indices = @transform_3, window_bounds = array<i64: 1, 1, 12, 288>}]} {
    %c0 = arith.constant 0 : index
    %c0_0 = arith.constant 0 : index
    %c0_1 = arith.constant 0 : index
    %c0_2 = arith.constant 0 : index
    %0 = vector.load %arg2[%c0, %c0_0, %c0_1, %c0_2] : memref<1x1x8x326xf32, #tpu.memory_space<vmem>>, vector<1x1x8x288xf32>
    %1 = vector.shape_cast %0 : vector<1x1x8x288xf32> to vector<8x288xf32>
    %2 = arith.truncf %1 : vector<8x288xf32> to vector<8x288xbf16>
    %c0_3 = arith.constant 0 : index
    %c0_4 = arith.constant 0 : index
    %3 = vector.load %arg6[%c0_3, %c0_4] : memref<72x288xbf16, #tpu.memory_space<vmem>>, vector<8x288xbf16>
    tpu.vector_store %arg6[%c0_3, %c0_4], %2 {strides = array<i32>} : memref<72x288xbf16, #tpu.memory_space<vmem>>, vector<8x288xbf16>,
    %c0_5 = arith.constant 0 : index
    %c0_6 = arith.constant 0 : index
    %c0_7 = arith.constant 0 : index
    %c1 = arith.constant 1 : index
    %4 = vector.load %arg2[%c0_5, %c0_6, %c0_7, %c1] : memref<1x1x8x326xf32, #tpu.memory_space<vmem>>, vector<1x1x8x288xf32>
    %5 = vector.shape_cast %4 : vector<1x1x8x288xf32> to vector<8x288xf32>
    %6 = arith.truncf %5 : vector<8x288xf32> to vector<8x288xbf16>
    %c8 = arith.constant 8 : index
    %c0_8 = arith.constant 0 : index
    %7 = vector.load %arg6[%c8, %c0_8] : memref<72x288xbf16, #tpu.memory_space<vmem>>, vector<8x288xbf16>
    tpu.vector_store %arg6[%c8, %c0_8], %6 {strides = array<i32>} : memref<72x288xbf16, #tpu.memory_space<vmem>>, vector<8x288xbf16>,
    %c0_9 = arith.constant 0 : index
    %c0_10 = arith.constant 0 : index
    %c0_11 = arith.constant 0 : index
    %c2 = arith.constant 2 : index
    %8 = vector.load %arg2[%c0_9, %c0_10, %c0_11, %c2] : memref<1x1x8x326xf32, #tpu.memory_space<vmem>>, vector<1x1x8x288xf32>
    %9 = vector.shape_cast %8 : vector<1x1x8x288xf32> to vector<8x288xf32>
    %10 = arith.truncf %9 : vector<8x288xf32> to vector<8x288xbf16>
    %c16 = arith.constant 16 : index
    %c0_12 = arith.constant 0 : index
    %11 = vector.load %arg6[%c16, %c0_12] : memref<72x288xbf16, #tpu.memory_space<vmem>>, vector<8x288xbf16>
    tpu.vector_store %arg6[%c16, %c0_12], %10 {strides = array<i32>} : memref<72x288xbf16, #tpu.memory_space<vmem>>, vector<8x288xbf16>,
    %c0_13 = arith.constant 0 : index
    %c0_14 = arith.constant 0 : index
    %c0_15 = arith.constant 0 : index
    %c18 = arith.constant 18 : index
    %12 = vector.load %arg2[%c0_13, %c0_14, %c0_15, %c18] : memref<1x1x8x326xf32, #tpu.memory_space<vmem>>, vector<1x1x8x288xf32>
    %13 = vector.shape_cast %12 : vector<1x1x8x288xf32> to vector<8x288xf32>
    %14 = arith.truncf %13 : vector<8x288xf32> to vector<8x288xbf16>
    %c24 = arith.constant 24 : index
    %c0_16 = arith.constant 0 : index
    %15 = vector.load %arg6[%c24, %c0_16] : memref<72x288xbf16, #tpu.memory_space<vmem>>, vector<8x288xbf16>
    tpu.vector_store %arg6[%c24, %c0_16], %14 {strides = array<i32>} : memref<72x288xbf16, #tpu.memory_space<vmem>>, vector<8x288xbf16>,
    %c0_17 = arith.constant 0 : index
    %c0_18 = arith.constant 0 : index
    %c0_19 = arith.constant 0 : index
    %c19 = arith.constant 19 : index
    %16 = vector.load %arg2[%c0_17, %c0_18, %c0_19, %c19] : memref<1x1x8x326xf32, #tpu.memory_space<vmem>>, vector<1x1x8x288xf32>
    %17 = vector.shape_cast %16 : vector<1x1x8x288xf32> to vector<8x288xf32>
    %18 = arith.truncf %17 : vector<8x288xf32> to vector<8x288xbf16>
    %c32 = arith.constant 32 : index
    %c0_20 = arith.constant 0 : index
    %19 = vector.load %arg6[%c32, %c0_20] : memref<72x288xbf16, #tpu.memory_space<vmem>>, vector<8x288xbf16>
    tpu.vector_store %arg6[%c32, %c0_20], %18 {strides = array<i32>} : memref<72x288xbf16, #tpu.memory_space<vmem>>, vector<8x288xbf16>,
    %c0_21 = arith.constant 0 : index
    %c0_22 = arith.constant 0 : index
    %c0_23 = arith.constant 0 : index
    %c20 = arith.constant 20 : index
    %20 = vector.load %arg2[%c0_21, %c0_22, %c0_23, %c20] : memref<1x1x8x326xf32, #tpu.memory_space<vmem>>, vector<1x1x8x288xf32>
    %21 = vector.shape_cast %20 : vector<1x1x8x288xf32> to vector<8x288xf32>
    %22 = arith.truncf %21 : vector<8x288xf32> to vector<8x288xbf16>
    %c40 = arith.constant 40 : index
    %c0_24 = arith.constant 0 : index
    %23 = vector.load %arg6[%c40, %c0_24] : memref<72x288xbf16, #tpu.memory_space<vmem>>, vector<8x288xbf16>
    tpu.vector_store %arg6[%c40, %c0_24], %22 {strides = array<i32>} : memref<72x288xbf16, #tpu.memory_space<vmem>>, vector<8x288xbf16>,
    %c0_25 = arith.constant 0 : index
    %c0_26 = arith.constant 0 : index
    %c0_27 = arith.constant 0 : index
    %c36 = arith.constant 36 : index
    %24 = vector.load %arg2[%c0_25, %c0_26, %c0_27, %c36] : memref<1x1x8x326xf32, #tpu.memory_space<vmem>>, vector<1x1x8x288xf32>
    %25 = vector.shape_cast %24 : vector<1x1x8x288xf32> to vector<8x288xf32>
    %26 = arith.truncf %25 : vector<8x288xf32> to vector<8x288xbf16>
    %c48 = arith.constant 48 : index
    %c0_28 = arith.constant 0 : index
    %27 = vector.load %arg6[%c48, %c0_28] : memref<72x288xbf16, #tpu.memory_space<vmem>>, vector<8x288xbf16>
    tpu.vector_store %arg6[%c48, %c0_28], %26 {strides = array<i32>} : memref<72x288xbf16, #tpu.memory_space<vmem>>, vector<8x288xbf16>,
    %c0_29 = arith.constant 0 : index
    %c0_30 = arith.constant 0 : index
    %c0_31 = arith.constant 0 : index
    %c37 = arith.constant 37 : index
    %28 = vector.load %arg2[%c0_29, %c0_30, %c0_31, %c37] : memref<1x1x8x326xf32, #tpu.memory_space<vmem>>, vector<1x1x8x288xf32>
    %29 = vector.shape_cast %28 : vector<1x1x8x288xf32> to vector<8x288xf32>
    %30 = arith.truncf %29 : vector<8x288xf32> to vector<8x288xbf16>
    %c56 = arith.constant 56 : index
    %c0_32 = arith.constant 0 : index
    %31 = vector.load %arg6[%c56, %c0_32] : memref<72x288xbf16, #tpu.memory_space<vmem>>, vector<8x288xbf16>
    tpu.vector_store %arg6[%c56, %c0_32], %30 {strides = array<i32>} : memref<72x288xbf16, #tpu.memory_space<vmem>>, vector<8x288xbf16>,
    %c0_33 = arith.constant 0 : index
    %c0_34 = arith.constant 0 : index
    %c0_35 = arith.constant 0 : index
    %c38 = arith.constant 38 : index
    %32 = vector.load %arg2[%c0_33, %c0_34, %c0_35, %c38] : memref<1x1x8x326xf32, #tpu.memory_space<vmem>>, vector<1x1x8x288xf32>
    %33 = vector.shape_cast %32 : vector<1x1x8x288xf32> to vector<8x288xf32>
    %34 = arith.truncf %33 : vector<8x288xf32> to vector<8x288xbf16>
    %c64 = arith.constant 64 : index
    %c0_36 = arith.constant 0 : index
    %35 = vector.load %arg6[%c64, %c0_36] : memref<72x288xbf16, #tpu.memory_space<vmem>>, vector<8x288xbf16>
    tpu.vector_store %arg6[%c64, %c0_36], %34 {strides = array<i32>} : memref<72x288xbf16, #tpu.memory_space<vmem>>, vector<8x288xbf16>,
    %c0_37 = arith.constant 0 : index
    %c0_38 = arith.constant 0 : index
    %36 = vector.load %arg3[%c0_37, %c0_38] : memref<12x72xbf16, #tpu.memory_space<vmem>>, vector<12x72xbf16>
    %c0_39 = arith.constant 0 : index
    %c0_40 = arith.constant 0 : index
    %37 = vector.load %arg6[%c0_39, %c0_40] : memref<72x288xbf16, #tpu.memory_space<vmem>>, vector<72x288xbf16>
    %cst = arith.constant dense<0.000000e+00> : vector<12x288xf32>
    %38 = tpu.matmul %36, %37, %cst {dimension_numbers = #tpu.dot_dimension_numbers<[1], [0], [0], [1], [0, 0, 1, 1], [], []>} : vector<12x72xbf16>, vector<72x288xbf16>, vector<12x288xf32> -> vector<12x288xf32>
    %c0_41 = arith.constant 0 : index
    %c0_42 = arith.constant 0 : index
    %39 = vector.load %arg4[%c0_41, %c0_42] : memref<12x1xf32, #tpu.memory_space<vmem>>, vector<12x1xf32>
    %40 = vector.broadcast %39 : vector<12x1xf32> to vector<12x288xf32>
    %41 = arith.addf %38, %40 : vector<12x288xf32>
    %c0_43 = arith.constant 0 : index
    %c0_44 = arith.constant 0 : index
    %c0_45 = arith.constant 0 : index
    %c0_46 = arith.constant 0 : index
    %42 = vector.load %arg5[%c0_43, %c0_44, %c0_45, %c0_46] : memref<1x1x12x288xf32, #tpu.memory_space<vmem>>, vector<1x1x12x288xf32>
    %43 = vector.shape_cast %42 : vector<1x1x12x288xf32> to vector<12x288xf32>
    %44 = vector.shape_cast %41 : vector<12x288xf32> to vector<1x1x12x288xf32>
    tpu.vector_store %arg5[%c0_43, %c0_44, %c0_45, %c0_46], %44 {strides = array<i32>} : memref<1x1x12x288xf32, #tpu.memory_space<vmem>>, vector<1x1x12x288xf32>,
    return
  }
  func.func @transform_0(%arg0: i32, %arg1: i32) -> (i32, i32, i32, i32) {
    %c0_i32 = arith.constant 0 : i32
    %c0_i32_0 = arith.constant 0 : i32
    %c0_i32_1 = arith.constant 0 : i32
    return %arg0, %arg1, %c0_i32, %c0_i32_0 : i32, i32, i32, i32
  }
  func.func @transform_1(%arg0: i32, %arg1: i32) -> (i32, i32) {
    %c0_i32 = arith.constant 0 : i32
    %c0_i32_0 = arith.constant 0 : i32
    %c0_i32_1 = arith.constant 0 : i32
    return %c0_i32, %c0_i32_0 : i32, i32
  }
  func.func @transform_2(%arg0: i32, %arg1: i32) -> (i32, i32) {
    %c0_i32 = arith.constant 0 : i32
    %c0_i32_0 = arith.constant 0 : i32
    %c0_i32_1 = arith.constant 0 : i32
    return %c0_i32, %c0_i32_0 : i32, i32
  }
  func.func @transform_3(%arg0: i32, %arg1: i32) -> (i32, i32, i32, i32) {
    %c0_i32 = arith.constant 0 : i32
    %c0_i32_0 = arith.constant 0 : i32
    %c0_i32_1 = arith.constant 0 : i32
    return %arg0, %arg1, %c0_i32, %c0_i32_0 : i32, i32, i32, i32
  }
}

</mosaic_0001>

<llo_original>
// kernel: ninasr_forward.6
$region0: #{ninasr_forward.6}
  #allocation0 [shape = 'u32[]', space=smem, size = 0x4, offset = 0x4, fixed_abs, tag = 'smem constant byte address 0x4 - core index']
  #allocation1 [shape = 'u32[72,128]{1,0:T(1,128)}', space=vmem, size = 0x9000, scoped, tag = 'internal scratch']
  #allocation2 [shape = 'bf16[72,288]{1,0:T(8,128)(2,1)}', space=vmem, size = 0xd800, scoped, tag = 'scratch operand']
  %s0 = inlined_call_operand.vmem [shape: f32[2,1,8,326], index: 0, kind: input, shape index: {}]
  %s1 = inlined_call_operand.vmem [shape: bf16[8,72], index: 1, kind: input, shape index: {}]
  %s2 = inlined_call_operand.vmem [shape: f32[8,1], index: 2, kind: input, shape index: {}]
  %s3 = inlined_call_operand.vmem [shape: f32[2,1,8,288], index: 3, kind: output, shape index: {}]
  %s4 = sld [smem:[#allocation0]]
  $region45: #{ninasr_forward.6} parent=0
    _
  %s6 = ssub.s32 1, %s4
  %s7 = scalar_select 0, %s6, %s4
  loop: start=0, step=1, limit=4
  $region2: #{ninasr_forward.6} parent=0 // loop_pre_header
    _
  $region3: #{ninasr_forward.6} parent=0 // loop_header
    %s9 = sphi 0, %s13
    %p10 = scmp.ge.s32.totalorder %s9, 4
    %s16 = sphi 0, %s28
    %s17 = sphi 0, %s24
    %s18 = sphi 0, %s16
    %s19 = sphi 0, %s17
    %s20 = sphi 0, %s18
    %s21 = sphi 0, %s19
    %s33 = sphi 0, %s35
    %s36 = sphi 0, %s33
    %s37 = sphi 0, %s36
    %s53 = sphi 0, %s37
    %s57 = sphi 0, %s57
    %s59 = sphi 0, %s57
    %s60 = sphi 0, %s59
    %s74 = sphi 0, %s60
    %s78 = sphi 0, %s78
    %s80 = sphi 0, %s78
    %s81 = sphi 0, %s80
    %s95 = sphi 0, %s81
    %s103 = sphi 0, %s105
    %s106 = sphi 0, %s103
    %s107 = sphi 0, %s106
    %s123 = sphi 0, %s107
  $region4: #{ninasr_forward.6} parent=0 // loop_header_branch
    %12 = sbr.rel (%p10) target = $region8
  $region5: #{ninasr_forward.6} parent=0 // loop_body
    %s14 = ssub.s32 %s9, 1
    %s15 = ssub.s32 %s9, 2
    %s22 = sadd.s32 1, %s17
    %p23 = scmp.ge.s32.totalorder %s22, 1
    %s24 = scalar_select %p23, 0, %s22
    %s25 = sadd.s32 1, %s16
    %s26 = scalar_select %p23, %s25, %s16
    %p27 = scmp.ge.s32.totalorder %s26, 2
    %s28 = scalar_select %p27, 0, %s26
    %s29 = ssub.s32 %s16, %s28
    %s30 = ssub.s32 %s17, %s24
    %s31 = sor.u32 %s29, %s30
    %p32 = scmp.eq.s32.totalorder %s31, 0
    %s34 = sadd.s32 %s33, 1
    %s35 = scalar_select %p32, %s33, %s34
    %p38 = pneg %p32
    %p39 = scmp.eq.s32.totalorder %s9, 1
    %p40 = por %p38, %p39
    %p41 = scmp.ne.s32.totalorder %s33, %s36
    %p42 = scmp.eq.s32.totalorder %s9, 0
    %p43 = por %p41, %p42
    %p44 = scmp.ne.s32.totalorder %s33, %s36
    %p45 = scmp.eq.s32.totalorder %s14, 1
    %p46 = por %p44, %p45
    %p47 = scmp.ne.s32.totalorder %s36, %s37
    %p48 = scmp.eq.s32.totalorder %s14, 0
    %p49 = por %p47, %p48
    %p50 = scmp.ne.s32.totalorder %s36, %s37
    %p51 = scmp.eq.s32.totalorder %s15, 1
    %p52 = por %p50, %p51
    %p54 = scmp.ne.s32.totalorder %s37, %s53
    %p55 = scmp.eq.s32.totalorder %s15, 0
    %p56 = por %p54, %p55
    %s58 = sadd.s32 %s57, 1
    %p61 = scmp.eq.s32.totalorder %s9, 1
    %p62 = scmp.ne.s32.totalorder %s57, %s59
    %p63 = scmp.eq.s32.totalorder %s9, 0
    %p64 = por %p62, %p63
    %p65 = scmp.ne.s32.totalorder %s57, %s59
    %p66 = scmp.eq.s32.totalorder %s14, 1
    %p67 = por %p65, %p66
    %p68 = scmp.ne.s32.totalorder %s59, %s60
    %p69 = scmp.eq.s32.totalorder %s14, 0
    %p70 = por %p68, %p69
    %p71 = scmp.ne.s32.totalorder %s59, %s60
    %p72 = scmp.eq.s32.totalorder %s15, 1
    %p73 = por %p71, %p72
    %p75 = scmp.ne.s32.totalorder %s60, %s74
    %p76 = scmp.eq.s32.totalorder %s15, 0
    %p77 = por %p75, %p76
    %s79 = sadd.s32 %s78, 1
    %p82 = scmp.eq.s32.totalorder %s9, 1
    %p83 = scmp.ne.s32.totalorder %s78, %s80
    %p84 = scmp.eq.s32.totalorder %s9, 0
    %p85 = por %p83, %p84
    %p86 = scmp.ne.s32.totalorder %s78, %s80
    %p87 = scmp.eq.s32.totalorder %s14, 1
    %p88 = por %p86, %p87
    %p89 = scmp.ne.s32.totalorder %s80, %s81
    %p90 = scmp.eq.s32.totalorder %s14, 0
    %p91 = por %p89, %p90
    %p92 = scmp.ne.s32.totalorder %s80, %s81
    %p93 = scmp.eq.s32.totalorder %s15, 1
    %p94 = por %p92, %p93
    %p96 = scmp.ne.s32.totalorder %s81, %s95
    %p97 = scmp.eq.s32.totalorder %s15, 0
    %p98 = por %p96, %p97
    %s99 = ssub.s32 %s16, %s28
    %s100 = ssub.s32 %s17, %s24
    %s101 = sor.u32 %s99, %s100
    %p102 = scmp.eq.s32.totalorder %s101, 0
    %s104 = sadd.s32 %s103, 1
    %s105 = scalar_select %p102, %s103, %s104
    %p108 = pneg %p102
    %p109 = scmp.eq.s32.totalorder %s9, 1
    %p110 = por %p108, %p109
    %p111 = scmp.ne.s32.totalorder %s103, %s106
    %p112 = scmp.eq.s32.totalorder %s9, 0
    %p113 = por %p111, %p112
    %p114 = scmp.ne.s32.totalorder %s103, %s106
    %p115 = scmp.eq.s32.totalorder %s14, 1
    %p116 = por %p114, %p115
    %p117 = scmp.ne.s32.totalorder %s106, %s107
    %p118 = scmp.eq.s32.totalorder %s14, 0
    %p119 = por %p117, %p118
    %p120 = scmp.ne.s32.totalorder %s106, %s107
    %p121 = scmp.eq.s32.totalorder %s15, 1
    %p122 = por %p120, %p121
    %p124 = scmp.ne.s32.totalorder %s107, %s123
    %p125 = scmp.eq.s32.totalorder %s15, 0
    %p126 = por %p124, %p125
    %p127 = scmp.le.s32.totalorder 1, %s9
    %p128 = scmp.lt.s32.totalorder %s9, 3
    %p129 = pnand %p127, %p128
    %p130 = pneg %p129
    // Predicated region
    $region9: #{ninasr_forward.6} parent=5 // pred_check
      _
    $region10: #{ninasr_forward.6} parent=5 // pred_check_branch
      %132 = sbr.rel (%p129) target = $region12
    $region11: #{ninasr_forward.6} parent=5 // pred_region
      %s133 = ssub.s32 %s9, 1
      // Predicated region
      $region13: #{ninasr_forward.6} parent=11 // pred_check
        %p134 = pneg %p70
      $region14: #{ninasr_forward.6} parent=11 // pred_check_branch
        %136 = sbr.rel (%p134) target = $region16
      $region15: #{ninasr_forward.6} parent=11 // pred_region
        _
      $region16: #{ninasr_forward.6} parent=11 // pred_fallthru
        _
      // Predicated region
      $region17: #{ninasr_forward.6} parent=11 // pred_check
        %p137 = pneg %p91
      $region18: #{ninasr_forward.6} parent=11 // pred_check_branch
        %139 = sbr.rel (%p137) target = $region20
      $region19: #{ninasr_forward.6} parent=11 // pred_region
        _
      $region20: #{ninasr_forward.6} parent=11 // pred_fallthru
        _
    $region12: #{ninasr_forward.6} parent=5 // pred_fallthru
      _
    %p140 = scmp.lt.s32.totalorder %s9, 2
    // Predicated region
    $region21: #{ninasr_forward.6} parent=5 // pred_check
      %p141 = pneg %p140
    $region22: #{ninasr_forward.6} parent=5 // pred_check_branch
      %143 = sbr.rel (%p141) target = $region24
    $region23: #{ninasr_forward.6} parent=5 // pred_region
      // Predicated region
      $region25: #{ninasr_forward.6} parent=23 // pred_check
        %p144 = pneg %p43
      $region26: #{ninasr_forward.6} parent=23 // pred_check_branch
        %146 = sbr.rel (%p144) target = $region28
      $region27: #{ninasr_forward.6} parent=23 // pred_region
        %p147 = scmp.lt.s32.totalorder %s16, 1
        %s148 = scalar_select %p147, %s16, 1
        %p149 = scmp.lt.s32.totalorder %s17, 0
        %s150 = scalar_select %p149, %s17, 0
        %s151 = smul.addr %s150, 3
        %s152 = smul.addr %s148, 3
        %s153 = sadd.s32 %s151, %s152
        %s154 = smul.addr %s153, 8
        %s155 = scalar_lea.vmem %s0, %s154
      $region28: #{ninasr_forward.6} parent=23 // pred_fallthru
        _
    $region24: #{ninasr_forward.6} parent=5 // pred_fallthru
      _
    %p156 = scmp.le.s32.totalorder 1, %s9
    %p157 = scmp.lt.s32.totalorder %s9, 3
    %p158 = pnand %p156, %p157
    %p159 = pneg %p158
    // Predicated region
    $region29: #{ninasr_forward.6} parent=5 // pred_check
      _
    $region30: #{ninasr_forward.6} parent=5 // pred_check_branch
      %161 = sbr.rel (%p158) target = $region32
    $region31: #{ninasr_forward.6} parent=5 // pred_region
      %s162 = ssub.s32 %s9, 1
      %p163 = scmp.lt.s32.totalorder %s18, 1
      %s164 = scalar_select %p163, %s18, 1
      %p165 = scmp.lt.s32.totalorder %s19, 0
      %s166 = scalar_select %p165, %s19, 0
      %s167 = smul.addr %s166, 3
      %s168 = smul.addr %s164, 3
      %s169 = sadd.s32 %s167, %s168
      %s170 = smul.addr %s169, 8
      %s171 = scalar_lea.vmem %s0, %s170
      %p172 = pneg %p49
      %p173 = pneg %p46
      %p174 = pneg %p70
      %p175 = pneg %p67
      %p176 = pneg %p91
      %p177 = pneg %p88
      %p178 = pneg %p119
      %p179 = pneg %p116
      %p180 = scmp.lt.s32.totalorder %s18, 1
      %s181 = scalar_select %p180, %s18, 1
      %p182 = scmp.lt.s32.totalorder %s19, 0
      %s183 = scalar_select %p182, %s19, 0
      %s184 = smul.addr %s183, 3
      %s185 = smul.addr %s181, 3
      %s186 = sadd.s32 %s184, %s185
      %s187 = smul.addr %s186, 8
      %s188 = scalar_lea.vmem %s3, %s187
      %p189 = scmp.lt.s32.totalorder %s18, 1
      %s190 = scalar_select %p189, %s18, 1
      %p191 = scmp.lt.s32.totalorder %s19, 0
      %s192 = scalar_select %p191, %s19, 0
      %s193 = smul.addr %s192, 3
      %s194 = smul.addr %s190, 3
      %s195 = sadd.s32 %s193, %s194
      %s196 = smul.addr %s195, 8
      %s197 = scalar_lea.vmem %s0, %s196
      %p198 = scmp.lt.s32.totalorder %s18, 1
      %s199 = scalar_select %p198, %s18, 1
      %p200 = scmp.lt.s32.totalorder %s19, 0
      %s201 = scalar_select %p200, %s19, 0
      %s202 = smul.addr %s201, 3
      %s203 = smul.addr %s199, 3
      %s204 = sadd.s32 %s202, %s203
      %s205 = smul.addr %s204, 8
      %s206 = scalar_lea.vmem %s3, %s205
      %v208 = vld [vmem:[%s197] sm:$0xff]
      %v209 = vld [vmem:[%s197 + $0x8] sm:$0xff]
      %v210 = vld [vmem:[%s197 + $0x10] sm:$0xff]
      %v211 = vpack.c.bf16 %v209, %v208
      %v212 = vpack.c.bf16 %v210, %v210
      %213 = vst [vmem:[#allocation2] sm:$0xff] %v211
      %vm214 = vcmask 257024
      %215 = vst.msk [vmem:[#allocation2 + $0x8] sm:$0xf] %vm214, %v212
      %v216 = vld [vmem:[%s197] sm:$0xff]
      %v217 = vld [vmem:[%s197 + $0x8] sm:$0xff]
      %v218 = vld [vmem:[%s197 + $0x10] sm:$0xff]
      %v219 = vpack.c.bf16 %v217, %v216
      %v220 = vpack.c.bf16 %v218, %v218
      %223 = vrot.lane.b32.xlu0 %v219, 127
      %v224 = vpop.permute.xlu0 %223
      %225 = vrot.lane.b32.xlu0 %v220, 127
      %v226 = vpop.permute.xlu0 %225
      %v227 = vrot.slane %v224, 4
      %v228 = vrot.slane %v226, 4
      %vm229 = vcmask 1043456
      %v230 = vsel %vm229, %v227, %v228
      %vm231 = vcmask 1039360
      %v232 = vsel %vm231, %v224, %v230
      %235 = vst [vmem:[#allocation2 + $0xc] sm:$0xff] %v232
      %236 = vst.msk [vmem:[#allocation2 + $0x14] sm:$0xf] %vm214, %v226
      %v237 = vld [vmem:[%s197] sm:$0xff]
      %v238 = vld [vmem:[%s197 + $0x8] sm:$0xff]
      %v239 = vld [vmem:[%s197 + $0x10] sm:$0xff]
      %v240 = vpack.c.bf16 %v238, %v237
      %v241 = vpack.c.bf16 %v239, %v239
      %244 = vrot.lane.b32.xlu0 %v240, 126
      %v245 = vpop.permute.xlu0 %244
      %246 = vrot.lane.b32.xlu0 %v241, 126
      %v247 = vpop.permute.xlu0 %246
      %v248 = vrot.slane %v245, 4
      %v249 = vrot.slane %v247, 4
      %v250 = vsel %vm229, %v248, %v249
      %vm251 = vcmask 1031168
      %v252 = vsel %vm251, %v245, %v250
      %255 = vst [vmem:[#allocation2 + $0x18] sm:$0xff] %v252
      %256 = vst.msk [vmem:[#allocation2 + $0x20] sm:$0xf] %vm214, %v247
      %v257 = vld [vmem:[%s197] sm:$0xff]
      %v258 = vld [vmem:[%s197 + $0x8] sm:$0xff]
      %v259 = vld [vmem:[%s197 + $0x10] sm:$0xff]
      %v260 = vpack.c.bf16 %v258, %v257
      %v261 = vpack.c.bf16 %v259, %v259
      %264 = vrot.lane.b32.xlu0 %v260, 110
      %v265 = vpop.permute.xlu0 %264
      %266 = vrot.lane.b32.xlu0 %v261, 110
      %v267 = vpop.permute.xlu0 %266
      %v268 = vrot.slane %v265, 4
      %v269 = vrot.slane %v267, 4
      %v270 = vsel %vm229, %v268, %v269
      %vm271 = vcmask 900096
      %v272 = vsel %vm271, %v265, %v270
      %275 = vst [vmem:[#allocation2 + $0x24] sm:$0xff] %v272
      %276 = vst.msk [vmem:[#allocation2 + $0x2c] sm:$0xf] %vm214, %v267
      %v277 = vld [vmem:[%s197] sm:$0xff]
      %v278 = vld [vmem:[%s197 + $0x8] sm:$0xff]
      %v279 = vld [vmem:[%s197 + $0x10] sm:$0xff]
      %v280 = vpack.c.bf16 %v278, %v277
      %v281 = vpack.c.bf16 %v279, %v279
      %284 = vrot.lane.b32.xlu0 %v280, 109
      %v285 = vpop.permute.xlu0 %284
      %286 = vrot.lane.b32.xlu0 %v281, 109
      %v287 = vpop.permute.xlu0 %286
      %v288 = vrot.slane %v285, 4
      %v289 = vrot.slane %v287, 4
      %v290 = vsel %vm229, %v288, %v289
      %vm291 = vcmask 891904
      %v292 = vsel %vm291, %v285, %v290
      %295 = vst [vmem:[#allocation2 + $0x30] sm:$0xff] %v292
      %296 = vst.msk [vmem:[#allocation2 + $0x38] sm:$0xf] %vm214, %v287
      %v297 = vld [vmem:[%s197] sm:$0xff]
      %v298 = vld [vmem:[%s197 + $0x8] sm:$0xff]
      %v299 = vld [vmem:[%s197 + $0x10] sm:$0xff]
      %v300 = vpack.c.bf16 %v298, %v297
      %v301 = vpack.c.bf16 %v299, %v299
      %304 = vrot.lane.b32.xlu0 %v300, 108
      %v305 = vpop.permute.xlu0 %304
      %306 = vrot.lane.b32.xlu0 %v301, 108
      %v307 = vpop.permute.xlu0 %306
      %v308 = vrot.slane %v305, 4
      %v309 = vrot.slane %v307, 4
      %v310 = vsel %vm229, %v308, %v309
      %vm311 = vcmask 883712
      %v312 = vsel %vm311, %v305, %v310
      %315 = vst [vmem:[#allocation2 + $0x3c] sm:$0xff] %v312
      %316 = vst.msk [vmem:[#allocation2 + $0x44] sm:$0xf] %vm214, %v307
      %v317 = vld [vmem:[%s197] sm:$0xff]
      %v318 = vld [vmem:[%s197 + $0x8] sm:$0xff]
      %v319 = vld [vmem:[%s197 + $0x10] sm:$0xff]
      %v320 = vpack.c.bf16 %v318, %v317
      %v321 = vpack.c.bf16 %v319, %v319
      %324 = vrot.lane.b32.xlu0 %v320, 92
      %v325 = vpop.permute.xlu0 %324
      %326 = vrot.lane.b32.xlu0 %v321, 92
      %v327 = vpop.permute.xlu0 %326
      %v328 = vrot.slane %v325, 4
      %v329 = vrot.slane %v327, 4
      %v330 = vsel %vm229, %v328, %v329
      %vm331 = vcmask 752640
      %v332 = vsel %vm331, %v325, %v330
      %335 = vst [vmem:[#allocation2 + $0x48] sm:$0xff] %v332
      %336 = vst.msk [vmem:[#allocation2 + $0x50] sm:$0xf] %vm214, %v327
      %v337 = vld [vmem:[%s197] sm:$0xff]
      %v338 = vld [vmem:[%s197 + $0x8] sm:$0xff]
      %v339 = vld [vmem:[%s197 + $0x10] sm:$0xff]
      %v340 = vpack.c.bf16 %v338, %v337
      %v341 = vpack.c.bf16 %v339, %v339
      %344 = vrot.lane.b32.xlu0 %v340, 91
      %v345 = vpop.permute.xlu0 %344
      %346 = vrot.lane.b32.xlu0 %v341, 91
      %v347 = vpop.permute.xlu0 %346
      %v348 = vrot.slane %v345, 4
      %v349 = vrot.slane %v347, 4
      %v350 = vsel %vm229, %v348, %v349
      %vm351 = vcmask 744448
      %v352 = vsel %vm351, %v345, %v350
      %355 = vst [vmem:[#allocation2 + $0x54] sm:$0xff] %v352
      %356 = vst.msk [vmem:[#allocation2 + $0x5c] sm:$0xf] %vm214, %v347
      %v357 = vld [vmem:[%s197] sm:$0xff]
      %v358 = vld [vmem:[%s197 + $0x8] sm:$0xff]
      %v359 = vld [vmem:[%s197 + $0x10] sm:$0xff]
      %v360 = vpack.c.bf16 %v358, %v357
      %v361 = vpack.c.bf16 %v359, %v359
      %364 = vrot.lane.b32.xlu0 %v360, 90
      %v365 = vpop.permute.xlu0 %364
      %366 = vrot.lane.b32.xlu0 %v361, 90
      %v367 = vpop.permute.xlu0 %366
      %v368 = vrot.slane %v365, 4
      %v369 = vrot.slane %v367, 4
      %v370 = vsel %vm229, %v368, %v369
      %vm371 = vcmask 736256
      %v372 = vsel %vm371, %v365, %v370
      %375 = vst [vmem:[#allocation2 + $0x60] sm:$0xff] %v372
      %376 = vst.msk [vmem:[#allocation2 + $0x68] sm:$0xf] %vm214, %v367
      %v377 = vld [vmem:[%s1] sm:$0xf]
      %v378 = vld [vmem:[#allocation2] sm:$0xff]
      %v379 = vld [vmem:[#allocation2 + $0x8] sm:$0xf]
      %v380 = vld [vmem:[#allocation2 + $0xc] sm:$0xff]
      %v381 = vld [vmem:[#allocation2 + $0x14] sm:$0xf]
      %v382 = vld [vmem:[#allocation2 + $0x18] sm:$0xff]
      %v383 = vld [vmem:[#allocation2 + $0x20] sm:$0xf]
      %v384 = vld [vmem:[#allocation2 + $0x24] sm:$0xff]
      %v385 = vld [vmem:[#allocation2 + $0x2c] sm:$0xf]
      %v386 = vld [vmem:[#allocation2 + $0x30] sm:$0xff]
      %v387 = vld [vmem:[#allocation2 + $0x38] sm:$0xf]
      %v388 = vld [vmem:[#allocation2 + $0x3c] sm:$0xff]
      %v389 = vld [vmem:[#allocation2 + $0x44] sm:$0xf]
      %v390 = vld [vmem:[#allocation2 + $0x48] sm:$0xff]
      %v391 = vld [vmem:[#allocation2 + $0x50] sm:$0xf]
      %v392 = vld [vmem:[#allocation2 + $0x54] sm:$0xff]
      %v393 = vld [vmem:[#allocation2 + $0x5c] sm:$0xf]
      %v394 = vld [vmem:[#allocation2 + $0x60] sm:$0xff]
      %v395 = vld [vmem:[#allocation2 + $0x68] sm:$0xf]
      %v414 = vunpack.c.l.b16 %v378
      %v415 = vunpack.c.h.b16 %v378
      %v416 = vunpack.c.l.b16 %v379
      %v417 = vunpack.c.l.b16 %v380
      %v418 = vunpack.c.h.b16 %v380
      %v419 = vunpack.c.l.b16 %v381
      %v420 = vunpack.c.l.b16 %v382
      %v421 = vunpack.c.h.b16 %v382
      %v422 = vunpack.c.l.b16 %v383
      %v423 = vunpack.c.l.b16 %v384
      %v424 = vunpack.c.h.b16 %v384
      %v425 = vunpack.c.l.b16 %v385
      %v426 = vunpack.c.l.b16 %v386
      %v427 = vunpack.c.h.b16 %v386
      %v428 = vunpack.c.l.b16 %v387
      %v429 = vunpack.c.l.b16 %v388
      %v430 = vunpack.c.h.b16 %v388
      %v431 = vunpack.c.l.b16 %v389
      %v432 = vunpack.c.l.b16 %v390
      %v433 = vunpack.c.h.b16 %v390
      %v434 = vunpack.c.l.b16 %v391
      %v435 = vunpack.c.l.b16 %v392
      %v436 = vunpack.c.h.b16 %v392
      %v437 = vunpack.c.l.b16 %v393
      %v438 = vunpack.c.l.b16 %v394
      %v439 = vunpack.c.h.b16 %v394
      %v440 = vunpack.c.l.b16 %v395
      %v441 = vpack.c.b16 %v417, %v414
      %v442 = vpack.c.b16 %v418, %v415
      %v443 = vpack.c.b16 %v419, %v416
      %v444 = vpack.c.b16 %v423, %v420
      %v445 = vpack.c.b16 %v424, %v421
      %v446 = vpack.c.b16 %v425, %v422
      %v447 = vpack.c.b16 %v429, %v426
      %v448 = vpack.c.b16 %v430, %v427
      %v449 = vpack.c.b16 %v431, %v428
      %v450 = vpack.c.b16 %v435, %v432
      %v451 = vpack.c.b16 %v436, %v433
      %v452 = vpack.c.b16 %v437, %v434
      %v453 = vpack.c.b16 %v438, %v438
      %v454 = vpack.c.b16 %v439, %v439
      %v455 = vpack.c.b16 %v440, %v440
      %vm468 = vcmask 588800
      %v470 = vsel %vm468, %v377, 0
      %vm472 = vcmask 1043456
      %v474 = vsel %vm472, %v453, 0
      %v477 = vsel %vm472, %v454, 0
      %v480 = vsel %vm472, %v455, 0
      %482 = vmatpush.bf16.msra.mxu0 0
      %483 = vmatpush.bf16.msra.mxu0 0
      %484 = vmatpush.bf16.msra.mxu0 0
      %485 = vmatpush.bf16.msra.mxu0 %v474
      %486 = vmatpush.bf16.msra.mxu0 %v450
      %487 = vmatpush.bf16.msra.mxu0 %v447
      %488 = vmatpush.bf16.msra.mxu0 %v444
      %489 = vmatpush.bf16.msra.mxu0 %v441
      %490 = vmatmul.bf16.gmra.mxu0 %v470
      %v491 = vpop.f32.mrf.mxu0
      %v492 = vadd.f32 0.0, %v491
      %v493 = vpop.f32.mrf.mxu0
      %494 = vdwg.mxu0
      %495 = vmatpush.bf16.msra.mxu0 0
      %496 = vmatpush.bf16.msra.mxu0 0
      %497 = vmatpush.bf16.msra.mxu0 0
      %498 = vmatpush.bf16.msra.mxu0 %v477
      %499 = vmatpush.bf16.msra.mxu0 %v451
      %500 = vmatpush.bf16.msra.mxu0 %v448
      %501 = vmatpush.bf16.msra.mxu0 %v445
      %502 = vmatpush.bf16.msra.mxu0 %v442
      %503 = vmatmul.bf16.gmra.mxu0 %v470
      %v504 = vpop.f32.mrf.mxu0
      %v505 = vadd.f32 0.0, %v504
      %v506 = vpop.f32.mrf.mxu0
      %507 = vdwg.mxu0
      %508 = vmatpush.bf16.msra.mxu0 0
      %509 = vmatpush.bf16.msra.mxu0 0
      %510 = vmatpush.bf16.msra.mxu0 0
      %511 = vmatpush.bf16.msra.mxu0 %v480
      %512 = vmatpush.bf16.msra.mxu0 %v452
      %513 = vmatpush.bf16.msra.mxu0 %v449
      %514 = vmatpush.bf16.msra.mxu0 %v446
      %515 = vmatpush.bf16.msra.mxu0 %v443
      %516 = vmatmul.bf16.gmra.mxu0 %v470
      %v517 = vpop.f32.mrf.mxu0
      %v518 = vadd.f32 0.0, %v517
      %v519 = vpop.f32.mrf.mxu0
      %520 = vdwg.mxu0
      %521 = vst [vmem:[%s206] sm:$0xff] %v492
      %522 = vst [vmem:[%s206 + $0x8] sm:$0xff] %v505
      %vm523 = vcmask 261120
      %524 = vst.msk [vmem:[%s206 + $0x10] sm:$0xff] %vm523, %v518
      %p525 = scmp.lt.s32.totalorder %s18, 1
      %s526 = scalar_select %p525, %s18, 1
      %p527 = scmp.lt.s32.totalorder %s19, 0
      %s528 = scalar_select %p527, %s19, 0
      %s529 = smul.addr %s528, 3
      %s530 = smul.addr %s526, 3
      %s531 = sadd.s32 %s529, %s530
      %s532 = smul.addr %s531, 8
      %s533 = scalar_lea.vmem %s3, %s532
      // Predicated region
      $region33: #{ninasr_forward.6} parent=31 // pred_check
        %p534 = pneg %p116
      $region34: #{ninasr_forward.6} parent=31 // pred_check_branch
        %536 = sbr.rel (%p534) target = $region36
      $region35: #{ninasr_forward.6} parent=31 // pred_region
        _
      $region36: #{ninasr_forward.6} parent=31 // pred_fallthru
        _
    $region32: #{ninasr_forward.6} parent=5 // pred_fallthru
      _
    %p537 = scmp.le.s32.totalorder 2, %s9
    // Predicated region
    $region37: #{ninasr_forward.6} parent=5 // pred_check
      %p538 = pneg %p537
    $region38: #{ninasr_forward.6} parent=5 // pred_check_branch
      %540 = sbr.rel (%p538) target = $region40
    $region39: #{ninasr_forward.6} parent=5 // pred_region
      %s541 = ssub.s32 %s9, 2
      // Predicated region
      $region41: #{ninasr_forward.6} parent=39 // pred_check
        %p542 = pneg %p122
      $region42: #{ninasr_forward.6} parent=39 // pred_check_branch
        %544 = sbr.rel (%p542) target = $region44
      $region43: #{ninasr_forward.6} parent=39 // pred_region
        %p545 = scmp.lt.s32.totalorder %s20, 1
        %s546 = scalar_select %p545, %s20, 1
        %p547 = scmp.lt.s32.totalorder %s21, 0
        %s548 = scalar_select %p547, %s21, 0
        %s549 = smul.addr %s548, 3
        %s550 = smul.addr %s546, 3
        %s551 = sadd.s32 %s549, %s550
        %s552 = smul.addr %s551, 8
        %s553 = scalar_lea.vmem %s3, %s552
      $region44: #{ninasr_forward.6} parent=39 // pred_fallthru
        _
    $region40: #{ninasr_forward.6} parent=5 // pred_fallthru
      _
  $region6: #{ninasr_forward.6} parent=0 // loop_footer
    %s13 = sadd.s32 1, %s9
  $region7: #{ninasr_forward.6} parent=0 // loop_footer_branch
    %8 = sbr.rel target = $region3
  $region8: #{ninasr_forward.6} parent=0 // loop_exit
    _

// kernel: ninasr_forward.7
$region0: #{ninasr_forward.7}
  #allocation0 [shape = 'u32[]', space=smem, size = 0x4, offset = 0x4, fixed_abs, tag = 'smem constant byte address 0x4 - core index']
  #allocation1 [shape = 'u32[72,128]{1,0:T(1,128)}', space=vmem, size = 0x9000, scoped, tag = 'internal scratch']
  #allocation2 [shape = 'bf16[72,288]{1,0:T(8,128)(2,1)}', space=vmem, size = 0xd800, scoped, tag = 'scratch operand']
  %s0 = inlined_call_operand.vmem [shape: f32[2,1,8,326], index: 0, kind: input, shape index: {}]
  %s1 = inlined_call_operand.vmem [shape: bf16[16,72], index: 1, kind: input, shape index: {}]
  %s2 = inlined_call_operand.vmem [shape: f32[16,1], index: 2, kind: input, shape index: {}]
  %s3 = inlined_call_operand.vmem [shape: f32[2,1,16,288], index: 3, kind: output, shape index: {}]
  %s4 = sld [smem:[#allocation0]]
  $region45: #{ninasr_forward.7} parent=0
    _
  %s6 = ssub.s32 1, %s4
  %s7 = scalar_select 0, %s6, %s4
  loop: start=0, step=1, limit=4
  $region2: #{ninasr_forward.7} parent=0 // loop_pre_header
    _
  $region3: #{ninasr_forward.7} parent=0 // loop_header
    %s9 = sphi 0, %s13
    %p10 = scmp.ge.s32.totalorder %s9, 4
    %s16 = sphi 0, %s28
    %s17 = sphi 0, %s24
    %s18 = sphi 0, %s16
    %s19 = sphi 0, %s17
    %s20 = sphi 0, %s18
    %s21 = sphi 0, %s19
    %s33 = sphi 0, %s35
    %s36 = sphi 0, %s33
    %s37 = sphi 0, %s36
    %s53 = sphi 0, %s37
    %s57 = sphi 0, %s57
    %s59 = sphi 0, %s57
    %s60 = sphi 0, %s59
    %s74 = sphi 0, %s60
    %s78 = sphi 0, %s78
    %s80 = sphi 0, %s78
    %s81 = sphi 0, %s80
    %s95 = sphi 0, %s81
    %s103 = sphi 0, %s105
    %s106 = sphi 0, %s103
    %s107 = sphi 0, %s106
    %s123 = sphi 0, %s107
  $region4: #{ninasr_forward.7} parent=0 // loop_header_branch
    %12 = sbr.rel (%p10) target = $region8
  $region5: #{ninasr_forward.7} parent=0 // loop_body
    %s14 = ssub.s32 %s9, 1
    %s15 = ssub.s32 %s9, 2
    %s22 = sadd.s32 1, %s17
    %p23 = scmp.ge.s32.totalorder %s22, 1
    %s24 = scalar_select %p23, 0, %s22
    %s25 = sadd.s32 1, %s16
    %s26 = scalar_select %p23, %s25, %s16
    %p27 = scmp.ge.s32.totalorder %s26, 2
    %s28 = scalar_select %p27, 0, %s26
    %s29 = ssub.s32 %s16, %s28
    %s30 = ssub.s32 %s17, %s24
    %s31 = sor.u32 %s29, %s30
    %p32 = scmp.eq.s32.totalorder %s31, 0
    %s34 = sadd.s32 %s33, 1
    %s35 = scalar_select %p32, %s33, %s34
    %p38 = pneg %p32
    %p39 = scmp.eq.s32.totalorder %s9, 1
    %p40 = por %p38, %p39
    %p41 = scmp.ne.s32.totalorder %s33, %s36
    %p42 = scmp.eq.s32.totalorder %s9, 0
    %p43 = por %p41, %p42
    %p44 = scmp.ne.s32.totalorder %s33, %s36
    %p45 = scmp.eq.s32.totalorder %s14, 1
    %p46 = por %p44, %p45
    %p47 = scmp.ne.s32.totalorder %s36, %s37
    %p48 = scmp.eq.s32.totalorder %s14, 0
    %p49 = por %p47, %p48
    %p50 = scmp.ne.s32.totalorder %s36, %s37
    %p51 = scmp.eq.s32.totalorder %s15, 1
    %p52 = por %p50, %p51
    %p54 = scmp.ne.s32.totalorder %s37, %s53
    %p55 = scmp.eq.s32.totalorder %s15, 0
    %p56 = por %p54, %p55
    %s58 = sadd.s32 %s57, 1
    %p61 = scmp.eq.s32.totalorder %s9, 1
    %p62 = scmp.ne.s32.totalorder %s57, %s59
    %p63 = scmp.eq.s32.totalorder %s9, 0
    %p64 = por %p62, %p63
    %p65 = scmp.ne.s32.totalorder %s57, %s59
    %p66 = scmp.eq.s32.totalorder %s14, 1
    %p67 = por %p65, %p66
    %p68 = scmp.ne.s32.totalorder %s59, %s60
    %p69 = scmp.eq.s32.totalorder %s14, 0
    %p70 = por %p68, %p69
    %p71 = scmp.ne.s32.totalorder %s59, %s60
    %p72 = scmp.eq.s32.totalorder %s15, 1
    %p73 = por %p71, %p72
    %p75 = scmp.ne.s32.totalorder %s60, %s74
    %p76 = scmp.eq.s32.totalorder %s15, 0
    %p77 = por %p75, %p76
    %s79 = sadd.s32 %s78, 1
    %p82 = scmp.eq.s32.totalorder %s9, 1
    %p83 = scmp.ne.s32.totalorder %s78, %s80
    %p84 = scmp.eq.s32.totalorder %s9, 0
    %p85 = por %p83, %p84
    %p86 = scmp.ne.s32.totalorder %s78, %s80
    %p87 = scmp.eq.s32.totalorder %s14, 1
    %p88 = por %p86, %p87
    %p89 = scmp.ne.s32.totalorder %s80, %s81
    %p90 = scmp.eq.s32.totalorder %s14, 0
    %p91 = por %p89, %p90
    %p92 = scmp.ne.s32.totalorder %s80, %s81
    %p93 = scmp.eq.s32.totalorder %s15, 1
    %p94 = por %p92, %p93
    %p96 = scmp.ne.s32.totalorder %s81, %s95
    %p97 = scmp.eq.s32.totalorder %s15, 0
    %p98 = por %p96, %p97
    %s99 = ssub.s32 %s16, %s28
    %s100 = ssub.s32 %s17, %s24
    %s101 = sor.u32 %s99, %s100
    %p102 = scmp.eq.s32.totalorder %s101, 0
    %s104 = sadd.s32 %s103, 1
    %s105 = scalar_select %p102, %s103, %s104
    %p108 = pneg %p102
    %p109 = scmp.eq.s32.totalorder %s9, 1
    %p110 = por %p108, %p109
    %p111 = scmp.ne.s32.totalorder %s103, %s106
    %p112 = scmp.eq.s32.totalorder %s9, 0
    %p113 = por %p111, %p112
    %p114 = scmp.ne.s32.totalorder %s103, %s106
    %p115 = scmp.eq.s32.totalorder %s14, 1
    %p116 = por %p114, %p115
    %p117 = scmp.ne.s32.totalorder %s106, %s107
    %p118 = scmp.eq.s32.totalorder %s14, 0
    %p119 = por %p117, %p118
    %p120 = scmp.ne.s32.totalorder %s106, %s107
    %p121 = scmp.eq.s32.totalorder %s15, 1
    %p122 = por %p120, %p121
    %p124 = scmp.ne.s32.totalorder %s107, %s123
    %p125 = scmp.eq.s32.totalorder %s15, 0
    %p126 = por %p124, %p125
    %p127 = scmp.le.s32.totalorder 1, %s9
    %p128 = scmp.lt.s32.totalorder %s9, 3
    %p129 = pnand %p127, %p128
    %p130 = pneg %p129
    // Predicated region
    $region9: #{ninasr_forward.7} parent=5 // pred_check
      _
    $region10: #{ninasr_forward.7} parent=5 // pred_check_branch
      %132 = sbr.rel (%p129) target = $region12
    $region11: #{ninasr_forward.7} parent=5 // pred_region
      %s133 = ssub.s32 %s9, 1
      // Predicated region
      $region13: #{ninasr_forward.7} parent=11 // pred_check
        %p134 = pneg %p70
      $region14: #{ninasr_forward.7} parent=11 // pred_check_branch
        %136 = sbr.rel (%p134) target = $region16
      $region15: #{ninasr_forward.7} parent=11 // pred_region
        _
      $region16: #{ninasr_forward.7} parent=11 // pred_fallthru
        _
      // Predicated region
      $region17: #{ninasr_forward.7} parent=11 // pred_check
        %p137 = pneg %p91
      $region18: #{ninasr_forward.7} parent=11 // pred_check_branch
        %139 = sbr.rel (%p137) target = $region20
      $region19: #{ninasr_forward.7} parent=11 // pred_region
        _
      $region20: #{ninasr_forward.7} parent=11 // pred_fallthru
        _
    $region12: #{ninasr_forward.7} parent=5 // pred_fallthru
      _
    %p140 = scmp.lt.s32.totalorder %s9, 2
    // Predicated region
    $region21: #{ninasr_forward.7} parent=5 // pred_check
      %p141 = pneg %p140
    $region22: #{ninasr_forward.7} parent=5 // pred_check_branch
      %143 = sbr.rel (%p141) target = $region24
    $region23: #{ninasr_forward.7} parent=5 // pred_region
      // Predicated region
      $region25: #{ninasr_forward.7} parent=23 // pred_check
        %p144 = pneg %p43
      $region26: #{ninasr_forward.7} parent=23 // pred_check_branch
        %146 = sbr.rel (%p144) target = $region28
      $region27: #{ninasr_forward.7} parent=23 // pred_region
        %p147 = scmp.lt.s32.totalorder %s16, 1
        %s148 = scalar_select %p147, %s16, 1
        %p149 = scmp.lt.s32.totalorder %s17, 0
        %s150 = scalar_select %p149, %s17, 0
        %s151 = smul.addr %s150, 3
        %s152 = smul.addr %s148, 3
        %s153 = sadd.s32 %s151, %s152
        %s154 = smul.addr %s153, 8
        %s155 = scalar_lea.vmem %s0, %s154
      $region28: #{ninasr_forward.7} parent=23 // pred_fallthru
        _
    $region24: #{ninasr_forward.7} parent=5 // pred_fallthru
      _
    %p156 = scmp.le.s32.totalorder 1, %s9
    %p157 = scmp.lt.s32.totalorder %s9, 3
    %p158 = pnand %p156, %p157
    %p159 = pneg %p158
    // Predicated region
    $region29: #{ninasr_forward.7} parent=5 // pred_check
      _
    $region30: #{ninasr_forward.7} parent=5 // pred_check_branch
      %161 = sbr.rel (%p158) target = $region32
    $region31: #{ninasr_forward.7} parent=5 // pred_region
      %s162 = ssub.s32 %s9, 1
      %p163 = scmp.lt.s32.totalorder %s18, 1
      %s164 = scalar_select %p163, %s18, 1
      %p165 = scmp.lt.s32.totalorder %s19, 0
      %s166 = scalar_select %p165, %s19, 0
      %s167 = smul.addr %s166, 3
      %s168 = smul.addr %s164, 3
      %s169 = sadd.s32 %s167, %s168
      %s170 = smul.addr %s169, 8
      %s171 = scalar_lea.vmem %s0, %s170
      %p172 = pneg %p49
      %p173 = pneg %p46
      %p174 = pneg %p70
      %p175 = pneg %p67
      %p176 = pneg %p91
      %p177 = pneg %p88
      %p178 = pneg %p119
      %p179 = pneg %p116
      %p180 = scmp.lt.s32.totalorder %s18, 1
      %s181 = scalar_select %p180, %s18, 1
      %p182 = scmp.lt.s32.totalorder %s19, 0
      %s183 = scalar_select %p182, %s19, 0
      %s184 = smul.addr %s183, 6
      %s185 = smul.addr %s181, 6
      %s186 = sadd.s32 %s184, %s185
      %s187 = smul.addr %s186, 8
      %s188 = scalar_lea.vmem %s3, %s187
      %p189 = scmp.lt.s32.totalorder %s18, 1
      %s190 = scalar_select %p189, %s18, 1
      %p191 = scmp.lt.s32.totalorder %s19, 0
      %s192 = scalar_select %p191, %s19, 0
      %s193 = smul.addr %s192, 3
      %s194 = smul.addr %s190, 3
      %s195 = sadd.s32 %s193, %s194
      %s196 = smul.addr %s195, 8
      %s197 = scalar_lea.vmem %s0, %s196
      %p198 = scmp.lt.s32.totalorder %s18, 1
      %s199 = scalar_select %p198, %s18, 1
      %p200 = scmp.lt.s32.totalorder %s19, 0
      %s201 = scalar_select %p200, %s19, 0
      %s202 = smul.addr %s201, 6
      %s203 = smul.addr %s199, 6
      %s204 = sadd.s32 %s202, %s203
      %s205 = smul.addr %s204, 8
      %s206 = scalar_lea.vmem %s3, %s205
      %v208 = vld [vmem:[%s197] sm:$0xff]
      %v209 = vld [vmem:[%s197 + $0x8] sm:$0xff]
      %v210 = vld [vmem:[%s197 + $0x10] sm:$0xff]
      %v211 = vpack.c.bf16 %v209, %v208
      %v212 = vpack.c.bf16 %v210, %v210
      %213 = vst [vmem:[#allocation2] sm:$0xff] %v211
      %vm214 = vcmask 257024
      %215 = vst.msk [vmem:[#allocation2 + $0x8] sm:$0xf] %vm214, %v212
      %v216 = vld [vmem:[%s197] sm:$0xff]
      %v217 = vld [vmem:[%s197 + $0x8] sm:$0xff]
      %v218 = vld [vmem:[%s197 + $0x10] sm:$0xff]
      %v219 = vpack.c.bf16 %v217, %v216
      %v220 = vpack.c.bf16 %v218, %v218
      %223 = vrot.lane.b32.xlu0 %v219, 127
      %v224 = vpop.permute.xlu0 %223
      %225 = vrot.lane.b32.xlu0 %v220, 127
      %v226 = vpop.permute.xlu0 %225
      %v227 = vrot.slane %v224, 4
      %v228 = vrot.slane %v226, 4
      %vm229 = vcmask 1043456
      %v230 = vsel %vm229, %v227, %v228
      %vm231 = vcmask 1039360
      %v232 = vsel %vm231, %v224, %v230
      %235 = vst [vmem:[#allocation2 + $0xc] sm:$0xff] %v232
      %236 = vst.msk [vmem:[#allocation2 + $0x14] sm:$0xf] %vm214, %v226
      %v237 = vld [vmem:[%s197] sm:$0xff]
      %v238 = vld [vmem:[%s197 + $0x8] sm:$0xff]
      %v239 = vld [vmem:[%s197 + $0x10] sm:$0xff]
      %v240 = vpack.c.bf16 %v238, %v237
      %v241 = vpack.c.bf16 %v239, %v239
      %244 = vrot.lane.b32.xlu0 %v240, 126
      %v245 = vpop.permute.xlu0 %244
      %246 = vrot.lane.b32.xlu0 %v241, 126
      %v247 = vpop.permute.xlu0 %246
      %v248 = vrot.slane %v245, 4
      %v249 = vrot.slane %v247, 4
      %v250 = vsel %vm229, %v248, %v249
      %vm251 = vcmask 1031168
      %v252 = vsel %vm251, %v245, %v250
      %255 = vst [vmem:[#allocation2 + $0x18] sm:$0xff] %v252
      %256 = vst.msk [vmem:[#allocation2 + $0x20] sm:$0xf] %vm214, %v247
      %v257 = vld [vmem:[%s197] sm:$0xff]
      %v258 = vld [vmem:[%s197 + $0x8] sm:$0xff]
      %v259 = vld [vmem:[%s197 + $0x10] sm:$0xff]
      %v260 = vpack.c.bf16 %v258, %v257
      %v261 = vpack.c.bf16 %v259, %v259
      %264 = vrot.lane.b32.xlu0 %v260, 110
      %v265 = vpop.permute.xlu0 %264
      %266 = vrot.lane.b32.xlu0 %v261, 110
      %v267 = vpop.permute.xlu0 %266
      %v268 = vrot.slane %v265, 4
      %v269 = vrot.slane %v267, 4
      %v270 = vsel %vm229, %v268, %v269
      %vm271 = vcmask 900096
      %v272 = vsel %vm271, %v265, %v270
      %275 = vst [vmem:[#allocation2 + $0x24] sm:$0xff] %v272
      %276 = vst.msk [vmem:[#allocation2 + $0x2c] sm:$0xf] %vm214, %v267
      %v277 = vld [vmem:[%s197] sm:$0xff]
      %v278 = vld [vmem:[%s197 + $0x8] sm:$0xff]
      %v279 = vld [vmem:[%s197 + $0x10] sm:$0xff]
      %v280 = vpack.c.bf16 %v278, %v277
      %v281 = vpack.c.bf16 %v279, %v279
      %284 = vrot.lane.b32.xlu0 %v280, 109
      %v285 = vpop.permute.xlu0 %284
      %286 = vrot.lane.b32.xlu0 %v281, 109
      %v287 = vpop.permute.xlu0 %286
      %v288 = vrot.slane %v285, 4
      %v289 = vrot.slane %v287, 4
      %v290 = vsel %vm229, %v288, %v289
      %vm291 = vcmask 891904
      %v292 = vsel %vm291, %v285, %v290
      %295 = vst [vmem:[#allocation2 + $0x30] sm:$0xff] %v292
      %296 = vst.msk [vmem:[#allocation2 + $0x38] sm:$0xf] %vm214, %v287
      %v297 = vld [vmem:[%s197] sm:$0xff]
      %v298 = vld [vmem:[%s197 + $0x8] sm:$0xff]
      %v299 = vld [vmem:[%s197 + $0x10] sm:$0xff]
      %v300 = vpack.c.bf16 %v298, %v297
      %v301 = vpack.c.bf16 %v299, %v299
      %304 = vrot.lane.b32.xlu0 %v300, 108
      %v305 = vpop.permute.xlu0 %304
      %306 = vrot.lane.b32.xlu0 %v301, 108
      %v307 = vpop.permute.xlu0 %306
      %v308 = vrot.slane %v305, 4
      %v309 = vrot.slane %v307, 4
      %v310 = vsel %vm229, %v308, %v309
      %vm311 = vcmask 883712
      %v312 = vsel %vm311, %v305, %v310
      %315 = vst [vmem:[#allocation2 + $0x3c] sm:$0xff] %v312
      %316 = vst.msk [vmem:[#allocation2 + $0x44] sm:$0xf] %vm214, %v307
      %v317 = vld [vmem:[%s197] sm:$0xff]
      %v318 = vld [vmem:[%s197 + $0x8] sm:$0xff]
      %v319 = vld [vmem:[%s197 + $0x10] sm:$0xff]
      %v320 = vpack.c.bf16 %v318, %v317
      %v321 = vpack.c.bf16 %v319, %v319
      %324 = vrot.lane.b32.xlu0 %v320, 92
      %v325 = vpop.permute.xlu0 %324
      %326 = vrot.lane.b32.xlu0 %v321, 92
      %v327 = vpop.permute.xlu0 %326
      %v328 = vrot.slane %v325, 4
      %v329 = vrot.slane %v327, 4
      %v330 = vsel %vm229, %v328, %v329
      %vm331 = vcmask 752640
      %v332 = vsel %vm331, %v325, %v330
      %335 = vst [vmem:[#allocation2 + $0x48] sm:$0xff] %v332
      %336 = vst.msk [vmem:[#allocation2 + $0x50] sm:$0xf] %vm214, %v327
      %v337 = vld [vmem:[%s197] sm:$0xff]
      %v338 = vld [vmem:[%s197 + $0x8] sm:$0xff]
      %v339 = vld [vmem:[%s197 + $0x10] sm:$0xff]
      %v340 = vpack.c.bf16 %v338, %v337
      %v341 = vpack.c.bf16 %v339, %v339
      %344 = vrot.lane.b32.xlu0 %v340, 91
      %v345 = vpop.permute.xlu0 %344
      %346 = vrot.lane.b32.xlu0 %v341, 91
      %v347 = vpop.permute.xlu0 %346
      %v348 = vrot.slane %v345, 4
      %v349 = vrot.slane %v347, 4
      %v350 = vsel %vm229, %v348, %v349
      %vm351 = vcmask 744448
      %v352 = vsel %vm351, %v345, %v350
      %355 = vst [vmem:[#allocation2 + $0x54] sm:$0xff] %v352
      %356 = vst.msk [vmem:[#allocation2 + $0x5c] sm:$0xf] %vm214, %v347
      %v357 = vld [vmem:[%s197] sm:$0xff]
      %v358 = vld [vmem:[%s197 + $0x8] sm:$0xff]
      %v359 = vld [vmem:[%s197 + $0x10] sm:$0xff]
      %v360 = vpack.c.bf16 %v358, %v357
      %v361 = vpack.c.bf16 %v359, %v359
      %364 = vrot.lane.b32.xlu0 %v360, 90
      %v365 = vpop.permute.xlu0 %364
      %366 = vrot.lane.b32.xlu0 %v361, 90
      %v367 = vpop.permute.xlu0 %366
      %v368 = vrot.slane %v365, 4
      %v369 = vrot.slane %v367, 4
      %v370 = vsel %vm229, %v368, %v369
      %vm371 = vcmask 736256
      %v372 = vsel %vm371, %v365, %v370
      %375 = vst [vmem:[#allocation2 + $0x60] sm:$0xff] %v372
      %376 = vst.msk [vmem:[#allocation2 + $0x68] sm:$0xf] %vm214, %v367
      %v377 = vld [vmem:[%s1] sm:$0xf]
      %v378 = vld [vmem:[%s1 + $0x4] sm:$0xf]
      %v379 = vld [vmem:[#allocation2] sm:$0xff]
      %v380 = vld [vmem:[#allocation2 + $0x8] sm:$0xf]
      %v381 = vld [vmem:[#allocation2 + $0xc] sm:$0xff]
      %v382 = vld [vmem:[#allocation2 + $0x14] sm:$0xf]
      %v383 = vld [vmem:[#allocation2 + $0x18] sm:$0xff]
      %v384 = vld [vmem:[#allocation2 + $0x20] sm:$0xf]
      %v385 = vld [vmem:[#allocation2 + $0x24] sm:$0xff]
      %v386 = vld [vmem:[#allocation2 + $0x2c] sm:$0xf]
      %v387 = vld [vmem:[#allocation2 + $0x30] sm:$0xff]
      %v388 = vld [vmem:[#allocation2 + $0x38] sm:$0xf]
      %v389 = vld [vmem:[#allocation2 + $0x3c] sm:$0xff]
      %v390 = vld [vmem:[#allocation2 + $0x44] sm:$0xf]
      %v391 = vld [vmem:[#allocation2 + $0x48] sm:$0xff]
      %v392 = vld [vmem:[#allocation2 + $0x50] sm:$0xf]
      %v393 = vld [vmem:[#allocation2 + $0x54] sm:$0xff]
      %v394 = vld [vmem:[#allocation2 + $0x5c] sm:$0xf]
      %v395 = vld [vmem:[#allocation2 + $0x60] sm:$0xff]
      %v396 = vld [vmem:[#allocation2 + $0x68] sm:$0xf]
      %v397 = vld [vmem:[%s2] sm:$0xff]
      %v398 = vld [vmem:[%s2 + $0x8] sm:$0xff]
      %400 = vset.pattern.permute.xlu0 0
      %401 = vperm.xlu0 %400, %v397
      %v402 = vpop.permute.xlu0 %401
      %405 = vset.pattern.permute.xlu0 0
      %406 = vperm.xlu0 %405, %v398
      %v407 = vpop.permute.xlu0 %406
      %v411 = vunpack.c.l.b16 %v377
      %v412 = vunpack.c.l.b16 %v378
      %v413 = vpack.c.b16 %v412, %v411
      %v432 = vunpack.c.l.b16 %v379
      %v433 = vunpack.c.h.b16 %v379
      %v434 = vunpack.c.l.b16 %v380
      %v435 = vunpack.c.l.b16 %v381
      %v436 = vunpack.c.h.b16 %v381
      %v437 = vunpack.c.l.b16 %v382
      %v438 = vunpack.c.l.b16 %v383
      %v439 = vunpack.c.h.b16 %v383
      %v440 = vunpack.c.l.b16 %v384
      %v441 = vunpack.c.l.b16 %v385
      %v442 = vunpack.c.h.b16 %v385
      %v443 = vunpack.c.l.b16 %v386
      %v444 = vunpack.c.l.b16 %v387
      %v445 = vunpack.c.h.b16 %v387
      %v446 = vunpack.c.l.b16 %v388
      %v447 = vunpack.c.l.b16 %v389
      %v448 = vunpack.c.h.b16 %v389
      %v449 = vunpack.c.l.b16 %v390
      %v450 = vunpack.c.l.b16 %v391
      %v451 = vunpack.c.h.b16 %v391
      %v452 = vunpack.c.l.b16 %v392
      %v453 = vunpack.c.l.b16 %v393
      %v454 = vunpack.c.h.b16 %v393
      %v455 = vunpack.c.l.b16 %v394
      %v456 = vunpack.c.l.b16 %v395
      %v457 = vunpack.c.h.b16 %v395
      %v458 = vunpack.c.l.b16 %v396
      %v459 = vpack.c.b16 %v435, %v432
      %v460 = vpack.c.b16 %v436, %v433
      %v461 = vpack.c.b16 %v437, %v434
      %v462 = vpack.c.b16 %v441, %v438
      %v463 = vpack.c.b16 %v442, %v439
      %v464 = vpack.c.b16 %v443, %v440
      %v465 = vpack.c.b16 %v447, %v444
      %v466 = vpack.c.b16 %v448, %v445
      %v467 = vpack.c.b16 %v449, %v446
      %v468 = vpack.c.b16 %v453, %v450
      %v469 = vpack.c.b16 %v454, %v451
      %v470 = vpack.c.b16 %v455, %v452
      %v471 = vpack.c.b16 %v456, %v456
      %v472 = vpack.c.b16 %v457, %v457
      %v473 = vpack.c.b16 %v458, %v458
      %vm486 = vcmask 588800
      %v488 = vsel %vm486, %v413, 0
      %vm490 = vcmask 1043456
      %v492 = vsel %vm490, %v471, 0
      %v495 = vsel %vm490, %v472, 0
      %v498 = vsel %vm490, %v473, 0
      %500 = vmatpush.bf16.msra.mxu0 0
      %501 = vmatpush.bf16.msra.mxu0 0
      %502 = vmatpush.bf16.msra.mxu0 0
      %503 = vmatpush.bf16.msra.mxu0 %v492
      %504 = vmatpush.bf16.msra.mxu0 %v468
      %505 = vmatpush.bf16.msra.mxu0 %v465
      %506 = vmatpush.bf16.msra.mxu0 %v462
      %507 = vmatpush.bf16.msra.mxu0 %v459
      %508 = vmatmul.bf16.gmra.mxu0 %v488
      %v509 = vpop.f32.mrf.mxu0
      %v510 = vadd.f32 %v402, %v509
      %v511 = vpop.f32.mrf.mxu0
      %v512 = vadd.f32 %v407, %v511
      %513 = vdwg.mxu0
      %514 = vmatpush.bf16.msra.mxu0 0
      %515 = vmatpush.bf16.msra.mxu0 0
      %516 = vmatpush.bf16.msra.mxu0 0
      %517 = vmatpush.bf16.msra.mxu0 %v495
      %518 = vmatpush.bf16.msra.mxu0 %v469
      %519 = vmatpush.bf16.msra.mxu0 %v466
      %520 = vmatpush.bf16.msra.mxu0 %v463
      %521 = vmatpush.bf16.msra.mxu0 %v460
      %522 = vmatmul.bf16.gmra.mxu0 %v488
      %v523 = vpop.f32.mrf.mxu0
      %v524 = vadd.f32 %v402, %v523
      %v525 = vpop.f32.mrf.mxu0
      %v526 = vadd.f32 %v407, %v525
      %527 = vdwg.mxu0
      %528 = vmatpush.bf16.msra.mxu0 0
      %529 = vmatpush.bf16.msra.mxu0 0
      %530 = vmatpush.bf16.msra.mxu0 0
      %531 = vmatpush.bf16.msra.mxu0 %v498
      %532 = vmatpush.bf16.msra.mxu0 %v470
      %533 = vmatpush.bf16.msra.mxu0 %v467
      %534 = vmatpush.bf16.msra.mxu0 %v464
      %535 = vmatpush.bf16.msra.mxu0 %v461
      %536 = vmatmul.bf16.gmra.mxu0 %v488
      %v537 = vpop.f32.mrf.mxu0
      %v538 = vadd.f32 %v402, %v537
      %v539 = vpop.f32.mrf.mxu0
      %v540 = vadd.f32 %v407, %v539
      %541 = vdwg.mxu0
      %v542 = vmax.f32 %v510, 0.0
      %v543 = vmax.f32 %v524, 0.0
      %v544 = vmax.f32 %v538, 0.0
      %v545 = vmax.f32 %v512, 0.0
      %v546 = vmax.f32 %v526, 0.0
      %v547 = vmax.f32 %v540, 0.0
      %548 = vst [vmem:[%s206] sm:$0xff] %v542
      %549 = vst [vmem:[%s206 + $0x8] sm:$0xff] %v543
      %vm550 = vcmask 261120
      %551 = vst.msk [vmem:[%s206 + $0x10] sm:$0xff] %vm550, %v544
      %552 = vst [vmem:[%s206 + $0x18] sm:$0xff] %v545
      %553 = vst [vmem:[%s206 + $0x20] sm:$0xff] %v546
      %554 = vst.msk [vmem:[%s206 + $0x28] sm:$0xff] %vm550, %v547
      %p555 = scmp.lt.s32.totalorder %s18, 1
      %s556 = scalar_select %p555, %s18, 1
      %p557 = scmp.lt.s32.totalorder %s19, 0
      %s558 = scalar_select %p557, %s19, 0
      %s559 = smul.addr %s558, 6
      %s560 = smul.addr %s556, 6
      %s561 = sadd.s32 %s559, %s560
      %s562 = smul.addr %s561, 8
      %s563 = scalar_lea.vmem %s3, %s562
      // Predicated region
      $region33: #{ninasr_forward.7} parent=31 // pred_check
        %p564 = pneg %p116
      $region34: #{ninasr_forward.7} parent=31 // pred_check_branch
        %566 = sbr.rel (%p564) target = $region36
      $region35: #{ninasr_forward.7} parent=31 // pred_region
        _
      $region36: #{ninasr_forward.7} parent=31 // pred_fallthru
        _
    $region32: #{ninasr_forward.7} parent=5 // pred_fallthru
      _
    %p567 = scmp.le.s32.totalorder 2, %s9
    // Predicated region
    $region37: #{ninasr_forward.7} parent=5 // pred_check
      %p568 = pneg %p567
    $region38: #{ninasr_forward.7} parent=5 // pred_check_branch
      %570 = sbr.rel (%p568) target = $region40
    $region39: #{ninasr_forward.7} parent=5 // pred_region
      %s571 = ssub.s32 %s9, 2
      // Predicated region
      $region41: #{ninasr_forward.7} parent=39 // pred_check
        %p572 = pneg %p122
      $region42: #{ninasr_forward.7} parent=39 // pred_check_branch
        %574 = sbr.rel (%p572) target = $region44
      $region43: #{ninasr_forward.7} parent=39 // pred_region
        %p575 = scmp.lt.s32.totalorder %s20, 1
        %s576 = scalar_select %p575, %s20, 1
        %p577 = scmp.lt.s32.totalorder %s21, 0
        %s578 = scalar_select %p577, %s21, 0
        %s579 = smul.addr %s578, 6
        %s580 = smul.addr %s576, 6
        %s581 = sadd.s32 %s579, %s580
        %s582 = smul.addr %s581, 8
        %s583 = scalar_lea.vmem %s3, %s582
      $region44: #{ninasr_forward.7} parent=39 // pred_fallthru
        _
    $region40: #{ninasr_forward.7} parent=5 // pred_fallthru
      _
  $region6: #{ninasr_forward.7} parent=0 // loop_footer
    %s13 = sadd.s32 1, %s9
  $region7: #{ninasr_forward.7} parent=0 // loop_footer_branch
    %8 = sbr.rel target = $region3
  $region8: #{ninasr_forward.7} parent=0 // loop_exit
    _

// kernel: ninasr_forward.8
$region0: #{ninasr_forward.8}
  #allocation0 [shape = 'u32[]', space=smem, size = 0x4, offset = 0x4, fixed_abs, tag = 'smem constant byte address 0x4 - core index']
  #allocation1 [shape = 'u32[72,128]{1,0:T(1,128)}', space=vmem, size = 0x9000, scoped, tag = 'internal scratch']
  #allocation2 [shape = 'bf16[144,288]{1,0:T(8,128)(2,1)}', space=vmem, size = 0x1b000, scoped, tag = 'scratch operand']
  %s0 = inlined_call_operand.vmem [shape: f32[2,1,16,326], index: 0, kind: input, shape index: {}]
  %s1 = inlined_call_operand.vmem [shape: bf16[8,144], index: 1, kind: input, shape index: {}]
  %s2 = inlined_call_operand.vmem [shape: f32[8,1], index: 2, kind: input, shape index: {}]
  %s3 = inlined_call_operand.vmem [shape: f32[2,1,8,288], index: 3, kind: output, shape index: {}]
  %s4 = sld [smem:[#allocation0]]
  $region45: #{ninasr_forward.8} parent=0
    _
  %s6 = ssub.s32 1, %s4
  %s7 = scalar_select 0, %s6, %s4
  loop: start=0, step=1, limit=4
  $region2: #{ninasr_forward.8} parent=0 // loop_pre_header
    _
  $region3: #{ninasr_forward.8} parent=0 // loop_header
    %s9 = sphi 0, %s13
    %p10 = scmp.ge.s32.totalorder %s9, 4
    %s16 = sphi 0, %s28
    %s17 = sphi 0, %s24
    %s18 = sphi 0, %s16
    %s19 = sphi 0, %s17
    %s20 = sphi 0, %s18
    %s21 = sphi 0, %s19
    %s33 = sphi 0, %s35
    %s36 = sphi 0, %s33
    %s37 = sphi 0, %s36
    %s53 = sphi 0, %s37
    %s57 = sphi 0, %s57
    %s59 = sphi 0, %s57
    %s60 = sphi 0, %s59
    %s74 = sphi 0, %s60
    %s78 = sphi 0, %s78
    %s80 = sphi 0, %s78
    %s81 = sphi 0, %s80
    %s95 = sphi 0, %s81
    %s103 = sphi 0, %s105
    %s106 = sphi 0, %s103
    %s107 = sphi 0, %s106
    %s123 = sphi 0, %s107
  $region4: #{ninasr_forward.8} parent=0 // loop_header_branch
    %12 = sbr.rel (%p10) target = $region8
  $region5: #{ninasr_forward.8} parent=0 // loop_body
    %s14 = ssub.s32 %s9, 1
    %s15 = ssub.s32 %s9, 2
    %s22 = sadd.s32 1, %s17
    %p23 = scmp.ge.s32.totalorder %s22, 1
    %s24 = scalar_select %p23, 0, %s22
    %s25 = sadd.s32 1, %s16
    %s26 = scalar_select %p23, %s25, %s16
    %p27 = scmp.ge.s32.totalorder %s26, 2
    %s28 = scalar_select %p27, 0, %s26
    %s29 = ssub.s32 %s16, %s28
    %s30 = ssub.s32 %s17, %s24
    %s31 = sor.u32 %s29, %s30
    %p32 = scmp.eq.s32.totalorder %s31, 0
    %s34 = sadd.s32 %s33, 1
    %s35 = scalar_select %p32, %s33, %s34
    %p38 = pneg %p32
    %p39 = scmp.eq.s32.totalorder %s9, 1
    %p40 = por %p38, %p39
    %p41 = scmp.ne.s32.totalorder %s33, %s36
    %p42 = scmp.eq.s32.totalorder %s9, 0
    %p43 = por %p41, %p42
    %p44 = scmp.ne.s32.totalorder %s33, %s36
    %p45 = scmp.eq.s32.totalorder %s14, 1
    %p46 = por %p44, %p45
    %p47 = scmp.ne.s32.totalorder %s36, %s37
    %p48 = scmp.eq.s32.totalorder %s14, 0
    %p49 = por %p47, %p48
    %p50 = scmp.ne.s32.totalorder %s36, %s37
    %p51 = scmp.eq.s32.totalorder %s15, 1
    %p52 = por %p50, %p51
    %p54 = scmp.ne.s32.totalorder %s37, %s53
    %p55 = scmp.eq.s32.totalorder %s15, 0
    %p56 = por %p54, %p55
    %s58 = sadd.s32 %s57, 1
    %p61 = scmp.eq.s32.totalorder %s9, 1
    %p62 = scmp.ne.s32.totalorder %s57, %s59
    %p63 = scmp.eq.s32.totalorder %s9, 0
    %p64 = por %p62, %p63
    %p65 = scmp.ne.s32.totalorder %s57, %s59
    %p66 = scmp.eq.s32.totalorder %s14, 1
    %p67 = por %p65, %p66
    %p68 = scmp.ne.s32.totalorder %s59, %s60
    %p69 = scmp.eq.s32.totalorder %s14, 0
    %p70 = por %p68, %p69
    %p71 = scmp.ne.s32.totalorder %s59, %s60
    %p72 = scmp.eq.s32.totalorder %s15, 1
    %p73 = por %p71, %p72
    %p75 = scmp.ne.s32.totalorder %s60, %s74
    %p76 = scmp.eq.s32.totalorder %s15, 0
    %p77 = por %p75, %p76
    %s79 = sadd.s32 %s78, 1
    %p82 = scmp.eq.s32.totalorder %s9, 1
    %p83 = scmp.ne.s32.totalorder %s78, %s80
    %p84 = scmp.eq.s32.totalorder %s9, 0
    %p85 = por %p83, %p84
    %p86 = scmp.ne.s32.totalorder %s78, %s80
    %p87 = scmp.eq.s32.totalorder %s14, 1
    %p88 = por %p86, %p87
    %p89 = scmp.ne.s32.totalorder %s80, %s81
    %p90 = scmp.eq.s32.totalorder %s14, 0
    %p91 = por %p89, %p90
    %p92 = scmp.ne.s32.totalorder %s80, %s81
    %p93 = scmp.eq.s32.totalorder %s15, 1
    %p94 = por %p92, %p93
    %p96 = scmp.ne.s32.totalorder %s81, %s95
    %p97 = scmp.eq.s32.totalorder %s15, 0
    %p98 = por %p96, %p97
    %s99 = ssub.s32 %s16, %s28
    %s100 = ssub.s32 %s17, %s24
    %s101 = sor.u32 %s99, %s100
    %p102 = scmp.eq.s32.totalorder %s101, 0
    %s104 = sadd.s32 %s103, 1
    %s105 = scalar_select %p102, %s103, %s104
    %p108 = pneg %p102
    %p109 = scmp.eq.s32.totalorder %s9, 1
    %p110 = por %p108, %p109
    %p111 = scmp.ne.s32.totalorder %s103, %s106
    %p112 = scmp.eq.s32.totalorder %s9, 0
    %p113 = por %p111, %p112
    %p114 = scmp.ne.s32.totalorder %s103, %s106
    %p115 = scmp.eq.s32.totalorder %s14, 1
    %p116 = por %p114, %p115
    %p117 = scmp.ne.s32.totalorder %s106, %s107
    %p118 = scmp.eq.s32.totalorder %s14, 0
    %p119 = por %p117, %p118
    %p120 = scmp.ne.s32.totalorder %s106, %s107
    %p121 = scmp.eq.s32.totalorder %s15, 1
    %p122 = por %p120, %p121
    %p124 = scmp.ne.s32.totalorder %s107, %s123
    %p125 = scmp.eq.s32.totalorder %s15, 0
    %p126 = por %p124, %p125
    %p127 = scmp.le.s32.totalorder 1, %s9
    %p128 = scmp.lt.s32.totalorder %s9, 3
    %p129 = pnand %p127, %p128
    %p130 = pneg %p129
    // Predicated region
    $region9: #{ninasr_forward.8} parent=5 // pred_check
      _
    $region10: #{ninasr_forward.8} parent=5 // pred_check_branch
      %132 = sbr.rel (%p129) target = $region12
    $region11: #{ninasr_forward.8} parent=5 // pred_region
      %s133 = ssub.s32 %s9, 1
      // Predicated region
      $region13: #{ninasr_forward.8} parent=11 // pred_check
        %p134 = pneg %p70
      $region14: #{ninasr_forward.8} parent=11 // pred_check_branch
        %136 = sbr.rel (%p134) target = $region16
      $region15: #{ninasr_forward.8} parent=11 // pred_region
        _
      $region16: #{ninasr_forward.8} parent=11 // pred_fallthru
        _
      // Predicated region
      $region17: #{ninasr_forward.8} parent=11 // pred_check
        %p137 = pneg %p91
      $region18: #{ninasr_forward.8} parent=11 // pred_check_branch
        %139 = sbr.rel (%p137) target = $region20
      $region19: #{ninasr_forward.8} parent=11 // pred_region
        _
      $region20: #{ninasr_forward.8} parent=11 // pred_fallthru
        _
    $region12: #{ninasr_forward.8} parent=5 // pred_fallthru
      _
    %p140 = scmp.lt.s32.totalorder %s9, 2
    // Predicated region
    $region21: #{ninasr_forward.8} parent=5 // pred_check
      %p141 = pneg %p140
    $region22: #{ninasr_forward.8} parent=5 // pred_check_branch
      %143 = sbr.rel (%p141) target = $region24
    $region23: #{ninasr_forward.8} parent=5 // pred_region
      // Predicated region
      $region25: #{ninasr_forward.8} parent=23 // pred_check
        %p144 = pneg %p43
      $region26: #{ninasr_forward.8} parent=23 // pred_check_branch
        %146 = sbr.rel (%p144) target = $region28
      $region27: #{ninasr_forward.8} parent=23 // pred_region
        %p147 = scmp.lt.s32.totalorder %s16, 1
        %s148 = scalar_select %p147, %s16, 1
        %p149 = scmp.lt.s32.totalorder %s17, 0
        %s150 = scalar_select %p149, %s17, 0
        %s151 = smul.addr %s150, 6
        %s152 = smul.addr %s148, 6
        %s153 = sadd.s32 %s151, %s152
        %s154 = smul.addr %s153, 8
        %s155 = scalar_lea.vmem %s0, %s154
      $region28: #{ninasr_forward.8} parent=23 // pred_fallthru
        _
    $region24: #{ninasr_forward.8} parent=5 // pred_fallthru
      _
    %p156 = scmp.le.s32.totalorder 1, %s9
    %p157 = scmp.lt.s32.totalorder %s9, 3
    %p158 = pnand %p156, %p157
    %p159 = pneg %p158
    // Predicated region
    $region29: #{ninasr_forward.8} parent=5 // pred_check
      _
    $region30: #{ninasr_forward.8} parent=5 // pred_check_branch
      %161 = sbr.rel (%p158) target = $region32
    $region31: #{ninasr_forward.8} parent=5 // pred_region
      %s162 = ssub.s32 %s9, 1
      %p163 = scmp.lt.s32.totalorder %s18, 1
      %s164 = scalar_select %p163, %s18, 1
      %p165 = scmp.lt.s32.totalorder %s19, 0
      %s166 = scalar_select %p165, %s19, 0
      %s167 = smul.addr %s166, 6
      %s168 = smul.addr %s164, 6
      %s169 = sadd.s32 %s167, %s168
      %s170 = smul.addr %s169, 8
      %s171 = scalar_lea.vmem %s0, %s170
      %p172 = pneg %p49
      %p173 = pneg %p46
      %p174 = pneg %p70
      %p175 = pneg %p67
      %p176 = pneg %p91
      %p177 = pneg %p88
      %p178 = pneg %p119
      %p179 = pneg %p116
      %p180 = scmp.lt.s32.totalorder %s18, 1
      %s181 = scalar_select %p180, %s18, 1
      %p182 = scmp.lt.s32.totalorder %s19, 0
      %s183 = scalar_select %p182, %s19, 0
      %s184 = smul.addr %s183, 3
      %s185 = smul.addr %s181, 3
      %s186 = sadd.s32 %s184, %s185
      %s187 = smul.addr %s186, 8
      %s188 = scalar_lea.vmem %s3, %s187
      %p189 = scmp.lt.s32.totalorder %s18, 1
      %s190 = scalar_select %p189, %s18, 1
      %p191 = scmp.lt.s32.totalorder %s19, 0
      %s192 = scalar_select %p191, %s19, 0
      %s193 = smul.addr %s192, 6
      %s194 = smul.addr %s190, 6
      %s195 = sadd.s32 %s193, %s194
      %s196 = smul.addr %s195, 8
      %s197 = scalar_lea.vmem %s0, %s196
      %p198 = scmp.lt.s32.totalorder %s18, 1
      %s199 = scalar_select %p198, %s18, 1
      %p200 = scmp.lt.s32.totalorder %s19, 0
      %s201 = scalar_select %p200, %s19, 0
      %s202 = smul.addr %s201, 3
      %s203 = smul.addr %s199, 3
      %s204 = sadd.s32 %s202, %s203
      %s205 = smul.addr %s204, 8
      %s206 = scalar_lea.vmem %s3, %s205
      %v208 = vld [vmem:[%s197] sm:$0xff]
      %v209 = vld [vmem:[%s197 + $0x8] sm:$0xff]
      %v210 = vld [vmem:[%s197 + $0x10] sm:$0xff]
      %v211 = vld [vmem:[%s197 + $0x18] sm:$0xff]
      %v212 = vld [vmem:[%s197 + $0x20] sm:$0xff]
      %v213 = vld [vmem:[%s197 + $0x28] sm:$0xff]
      %v214 = vpack.c.bf16 %v209, %v208
      %v215 = vpack.c.bf16 %v210, %v210
      %v216 = vpack.c.bf16 %v212, %v211
      %v217 = vpack.c.bf16 %v213, %v213
      %218 = vst [vmem:[#allocation2] sm:$0xff] %v214
      %vm219 = vcmask 257024
      %220 = vst.msk [vmem:[#allocation2 + $0x8] sm:$0xf] %vm219, %v215
      %221 = vst [vmem:[#allocation2 + $0xc] sm:$0xff] %v216
      %222 = vst.msk [vmem:[#allocation2 + $0x14] sm:$0xf] %vm219, %v217
      %v223 = vld [vmem:[%s197] sm:$0xff]
      %v224 = vld [vmem:[%s197 + $0x8] sm:$0xff]
      %v225 = vld [vmem:[%s197 + $0x10] sm:$0xff]
      %v226 = vld [vmem:[%s197 + $0x18] sm:$0xff]
      %v227 = vld [vmem:[%s197 + $0x20] sm:$0xff]
      %v228 = vld [vmem:[%s197 + $0x28] sm:$0xff]
      %v229 = vpack.c.bf16 %v224, %v223
      %v230 = vpack.c.bf16 %v225, %v225
      %v231 = vpack.c.bf16 %v227, %v226
      %v232 = vpack.c.bf16 %v228, %v228
      %237 = vrot.lane.b32.xlu0 %v229, 127
      %v238 = vpop.permute.xlu0 %237
      %239 = vrot.lane.b32.xlu0 %v230, 127
      %v240 = vpop.permute.xlu0 %239
      %241 = vrot.lane.b32.xlu0 %v231, 127
      %v242 = vpop.permute.xlu0 %241
      %243 = vrot.lane.b32.xlu0 %v232, 127
      %v244 = vpop.permute.xlu0 %243
      %v245 = vrot.slane %v238, 4
      %v246 = vrot.slane %v240, 4
      %v247 = vrot.slane %v242, 4
      %v248 = vrot.slane %v244, 4
      %vm249 = vcmask 1043456
      %v250 = vsel %vm249, %v245, %v246
      %vm251 = vcmask 1039360
      %v252 = vsel %vm251, %v238, %v250
      %v253 = vsel %vm249, %v247, %v248
      %v254 = vsel %vm251, %v242, %v253
      %259 = vst [vmem:[#allocation2 + $0x18] sm:$0xff] %v252
      %260 = vst.msk [vmem:[#allocation2 + $0x20] sm:$0xf] %vm219, %v240
      %261 = vst [vmem:[#allocation2 + $0x24] sm:$0xff] %v254
      %262 = vst.msk [vmem:[#allocation2 + $0x2c] sm:$0xf] %vm219, %v244
      %v263 = vld [vmem:[%s197] sm:$0xff]
      %v264 = vld [vmem:[%s197 + $0x8] sm:$0xff]
      %v265 = vld [vmem:[%s197 + $0x10] sm:$0xff]
      %v266 = vld [vmem:[%s197 + $0x18] sm:$0xff]
      %v267 = vld [vmem:[%s197 + $0x20] sm:$0xff]
      %v268 = vld [vmem:[%s197 + $0x28] sm:$0xff]
      %v269 = vpack.c.bf16 %v264, %v263
      %v270 = vpack.c.bf16 %v265, %v265
      %v271 = vpack.c.bf16 %v267, %v266
      %v272 = vpack.c.bf16 %v268, %v268
      %277 = vrot.lane.b32.xlu0 %v269, 126
      %v278 = vpop.permute.xlu0 %277
      %279 = vrot.lane.b32.xlu0 %v270, 126
      %v280 = vpop.permute.xlu0 %279
      %281 = vrot.lane.b32.xlu0 %v271, 126
      %v282 = vpop.permute.xlu0 %281
      %283 = vrot.lane.b32.xlu0 %v272, 126
      %v284 = vpop.permute.xlu0 %283
      %v285 = vrot.slane %v278, 4
      %v286 = vrot.slane %v280, 4
      %v287 = vrot.slane %v282, 4
      %v288 = vrot.slane %v284, 4
      %v289 = vsel %vm249, %v285, %v286
      %vm290 = vcmask 1031168
      %v291 = vsel %vm290, %v278, %v289
      %v292 = vsel %vm249, %v287, %v288
      %v293 = vsel %vm290, %v282, %v292
      %298 = vst [vmem:[#allocation2 + $0x30] sm:$0xff] %v291
      %299 = vst.msk [vmem:[#allocation2 + $0x38] sm:$0xf] %vm219, %v280
      %300 = vst [vmem:[#allocation2 + $0x3c] sm:$0xff] %v293
      %301 = vst.msk [vmem:[#allocation2 + $0x44] sm:$0xf] %vm219, %v284
      %v302 = vld [vmem:[%s197] sm:$0xff]
      %v303 = vld [vmem:[%s197 + $0x8] sm:$0xff]
      %v304 = vld [vmem:[%s197 + $0x10] sm:$0xff]
      %v305 = vld [vmem:[%s197 + $0x18] sm:$0xff]
      %v306 = vld [vmem:[%s197 + $0x20] sm:$0xff]
      %v307 = vld [vmem:[%s197 + $0x28] sm:$0xff]
      %v308 = vpack.c.bf16 %v303, %v302
      %v309 = vpack.c.bf16 %v304, %v304
      %v310 = vpack.c.bf16 %v306, %v305
      %v311 = vpack.c.bf16 %v307, %v307
      %316 = vrot.lane.b32.xlu0 %v308, 110
      %v317 = vpop.permute.xlu0 %316
      %318 = vrot.lane.b32.xlu0 %v309, 110
      %v319 = vpop.permute.xlu0 %318
      %320 = vrot.lane.b32.xlu0 %v310, 110
      %v321 = vpop.permute.xlu0 %320
      %322 = vrot.lane.b32.xlu0 %v311, 110
      %v323 = vpop.permute.xlu0 %322
      %v324 = vrot.slane %v317, 4
      %v325 = vrot.slane %v319, 4
      %v326 = vrot.slane %v321, 4
      %v327 = vrot.slane %v323, 4
      %v328 = vsel %vm249, %v324, %v325
      %vm329 = vcmask 900096
      %v330 = vsel %vm329, %v317, %v328
      %v331 = vsel %vm249, %v326, %v327
      %v332 = vsel %vm329, %v321, %v331
      %337 = vst [vmem:[#allocation2 + $0x48] sm:$0xff] %v330
      %338 = vst.msk [vmem:[#allocation2 + $0x50] sm:$0xf] %vm219, %v319
      %339 = vst [vmem:[#allocation2 + $0x54] sm:$0xff] %v332
      %340 = vst.msk [vmem:[#allocation2 + $0x5c] sm:$0xf] %vm219, %v323
      %v341 = vld [vmem:[%s197] sm:$0xff]
      %v342 = vld [vmem:[%s197 + $0x8] sm:$0xff]
      %v343 = vld [vmem:[%s197 + $0x10] sm:$0xff]
      %v344 = vld [vmem:[%s197 + $0x18] sm:$0xff]
      %v345 = vld [vmem:[%s197 + $0x20] sm:$0xff]
      %v346 = vld [vmem:[%s197 + $0x28] sm:$0xff]
      %v347 = vpack.c.bf16 %v342, %v341
      %v348 = vpack.c.bf16 %v343, %v343
      %v349 = vpack.c.bf16 %v345, %v344
      %v350 = vpack.c.bf16 %v346, %v346
      %355 = vrot.lane.b32.xlu0 %v347, 109
      %v356 = vpop.permute.xlu0 %355
      %357 = vrot.lane.b32.xlu0 %v348, 109
      %v358 = vpop.permute.xlu0 %357
      %359 = vrot.lane.b32.xlu0 %v349, 109
      %v360 = vpop.permute.xlu0 %359
      %361 = vrot.lane.b32.xlu0 %v350, 109
      %v362 = vpop.permute.xlu0 %361
      %v363 = vrot.slane %v356, 4
      %v364 = vrot.slane %v358, 4
      %v365 = vrot.slane %v360, 4
      %v366 = vrot.slane %v362, 4
      %v367 = vsel %vm249, %v363, %v364
      %vm368 = vcmask 891904
      %v369 = vsel %vm368, %v356, %v367
      %v370 = vsel %vm249, %v365, %v366
      %v371 = vsel %vm368, %v360, %v370
      %376 = vst [vmem:[#allocation2 + $0x60] sm:$0xff] %v369
      %377 = vst.msk [vmem:[#allocation2 + $0x68] sm:$0xf] %vm219, %v358
      %378 = vst [vmem:[#allocation2 + $0x6c] sm:$0xff] %v371
      %379 = vst.msk [vmem:[#allocation2 + $0x74] sm:$0xf] %vm219, %v362
      %v380 = vld [vmem:[%s197] sm:$0xff]
      %v381 = vld [vmem:[%s197 + $0x8] sm:$0xff]
      %v382 = vld [vmem:[%s197 + $0x10] sm:$0xff]
      %v383 = vld [vmem:[%s197 + $0x18] sm:$0xff]
      %v384 = vld [vmem:[%s197 + $0x20] sm:$0xff]
      %v385 = vld [vmem:[%s197 + $0x28] sm:$0xff]
      %v386 = vpack.c.bf16 %v381, %v380
      %v387 = vpack.c.bf16 %v382, %v382
      %v388 = vpack.c.bf16 %v384, %v383
      %v389 = vpack.c.bf16 %v385, %v385
      %394 = vrot.lane.b32.xlu0 %v386, 108
      %v395 = vpop.permute.xlu0 %394
      %396 = vrot.lane.b32.xlu0 %v387, 108
      %v397 = vpop.permute.xlu0 %396
      %398 = vrot.lane.b32.xlu0 %v388, 108
      %v399 = vpop.permute.xlu0 %398
      %400 = vrot.lane.b32.xlu0 %v389, 108
      %v401 = vpop.permute.xlu0 %400
      %v402 = vrot.slane %v395, 4
      %v403 = vrot.slane %v397, 4
      %v404 = vrot.slane %v399, 4
      %v405 = vrot.slane %v401, 4
      %v406 = vsel %vm249, %v402, %v403
      %vm407 = vcmask 883712
      %v408 = vsel %vm407, %v395, %v406
      %v409 = vsel %vm249, %v404, %v405
      %v410 = vsel %vm407, %v399, %v409
      %415 = vst [vmem:[#allocation2 + $0x78] sm:$0xff] %v408
      %416 = vst.msk [vmem:[#allocation2 + $0x80] sm:$0xf] %vm219, %v397
      %417 = vst [vmem:[#allocation2 + $0x84] sm:$0xff] %v410
      %418 = vst.msk [vmem:[#allocation2 + $0x8c] sm:$0xf] %vm219, %v401
      %v419 = vld [vmem:[%s197] sm:$0xff]
      %v420 = vld [vmem:[%s197 + $0x8] sm:$0xff]
      %v421 = vld [vmem:[%s197 + $0x10] sm:$0xff]
      %v422 = vld [vmem:[%s197 + $0x18] sm:$0xff]
      %v423 = vld [vmem:[%s197 + $0x20] sm:$0xff]
      %v424 = vld [vmem:[%s197 + $0x28] sm:$0xff]
      %v425 = vpack.c.bf16 %v420, %v419
      %v426 = vpack.c.bf16 %v421, %v421
      %v427 = vpack.c.bf16 %v423, %v422
      %v428 = vpack.c.bf16 %v424, %v424
      %433 = vrot.lane.b32.xlu0 %v425, 92
      %v434 = vpop.permute.xlu0 %433
      %435 = vrot.lane.b32.xlu0 %v426, 92
      %v436 = vpop.permute.xlu0 %435
      %437 = vrot.lane.b32.xlu0 %v427, 92
      %v438 = vpop.permute.xlu0 %437
      %439 = vrot.lane.b32.xlu0 %v428, 92
      %v440 = vpop.permute.xlu0 %439
      %v441 = vrot.slane %v434, 4
      %v442 = vrot.slane %v436, 4
      %v443 = vrot.slane %v438, 4
      %v444 = vrot.slane %v440, 4
      %v445 = vsel %vm249, %v441, %v442
      %vm446 = vcmask 752640
      %v447 = vsel %vm446, %v434, %v445
      %v448 = vsel %vm249, %v443, %v444
      %v449 = vsel %vm446, %v438, %v448
      %454 = vst [vmem:[#allocation2 + $0x90] sm:$0xff] %v447
      %455 = vst.msk [vmem:[#allocation2 + $0x98] sm:$0xf] %vm219, %v436
      %456 = vst [vmem:[#allocation2 + $0x9c] sm:$0xff] %v449
      %457 = vst.msk [vmem:[#allocation2 + $0xa4] sm:$0xf] %vm219, %v440
      %v458 = vld [vmem:[%s197] sm:$0xff]
      %v459 = vld [vmem:[%s197 + $0x8] sm:$0xff]
      %v460 = vld [vmem:[%s197 + $0x10] sm:$0xff]
      %v461 = vld [vmem:[%s197 + $0x18] sm:$0xff]
      %v462 = vld [vmem:[%s197 + $0x20] sm:$0xff]
      %v463 = vld [vmem:[%s197 + $0x28] sm:$0xff]
      %v464 = vpack.c.bf16 %v459, %v458
      %v465 = vpack.c.bf16 %v460, %v460
      %v466 = vpack.c.bf16 %v462, %v461
      %v467 = vpack.c.bf16 %v463, %v463
      %472 = vrot.lane.b32.xlu0 %v464, 91
      %v473 = vpop.permute.xlu0 %472
      %474 = vrot.lane.b32.xlu0 %v465, 91
      %v475 = vpop.permute.xlu0 %474
      %476 = vrot.lane.b32.xlu0 %v466, 91
      %v477 = vpop.permute.xlu0 %476
      %478 = vrot.lane.b32.xlu0 %v467, 91
      %v479 = vpop.permute.xlu0 %478
      %v480 = vrot.slane %v473, 4
      %v481 = vrot.slane %v475, 4
      %v482 = vrot.slane %v477, 4
      %v483 = vrot.slane %v479, 4
      %v484 = vsel %vm249, %v480, %v481
      %vm485 = vcmask 744448
      %v486 = vsel %vm485, %v473, %v484
      %v487 = vsel %vm249, %v482, %v483
      %v488 = vsel %vm485, %v477, %v487
      %493 = vst [vmem:[#allocation2 + $0xa8] sm:$0xff] %v486
      %494 = vst.msk [vmem:[#allocation2 + $0xb0] sm:$0xf] %vm219, %v475
      %495 = vst [vmem:[#allocation2 + $0xb4] sm:$0xff] %v488
      %496 = vst.msk [vmem:[#allocation2 + $0xbc] sm:$0xf] %vm219, %v479
      %v497 = vld [vmem:[%s197] sm:$0xff]
      %v498 = vld [vmem:[%s197 + $0x8] sm:$0xff]
      %v499 = vld [vmem:[%s197 + $0x10] sm:$0xff]
      %v500 = vld [vmem:[%s197 + $0x18] sm:$0xff]
      %v501 = vld [vmem:[%s197 + $0x20] sm:$0xff]
      %v502 = vld [vmem:[%s197 + $0x28] sm:$0xff]
      %v503 = vpack.c.bf16 %v498, %v497
      %v504 = vpack.c.bf16 %v499, %v499
      %v505 = vpack.c.bf16 %v501, %v500
      %v506 = vpack.c.bf16 %v502, %v502
      %511 = vrot.lane.b32.xlu0 %v503, 90
      %v512 = vpop.permute.xlu0 %511
      %513 = vrot.lane.b32.xlu0 %v504, 90
      %v514 = vpop.permute.xlu0 %513
      %515 = vrot.lane.b32.xlu0 %v505, 90
      %v516 = vpop.permute.xlu0 %515
      %517 = vrot.lane.b32.xlu0 %v506, 90
      %v518 = vpop.permute.xlu0 %517
      %v519 = vrot.slane %v512, 4
      %v520 = vrot.slane %v514, 4
      %v521 = vrot.slane %v516, 4
      %v522 = vrot.slane %v518, 4
      %v523 = vsel %vm249, %v519, %v520
      %vm524 = vcmask 736256
      %v525 = vsel %vm524, %v512, %v523
      %v526 = vsel %vm249, %v521, %v522
      %v527 = vsel %vm524, %v516, %v526
      %532 = vst [vmem:[#allocation2 + $0xc0] sm:$0xff] %v525
      %533 = vst.msk [vmem:[#allocation2 + $0xc8] sm:$0xf] %vm219, %v514
      %534 = vst [vmem:[#allocation2 + $0xcc] sm:$0xff] %v527
      %535 = vst.msk [vmem:[#allocation2 + $0xd4] sm:$0xf] %vm219, %v518
      %v536 = vld [vmem:[%s1] sm:$0xff]
      %v537 = vld [vmem:[#allocation2] sm:$0xff]
      %v538 = vld [vmem:[#allocation2 + $0x8] sm:$0xf]
      %v539 = vld [vmem:[#allocation2 + $0xc] sm:$0xff]
      %v540 = vld [vmem:[#allocation2 + $0x14] sm:$0xf]
      %v541 = vld [vmem:[#allocation2 + $0x18] sm:$0xff]
      %v542 = vld [vmem:[#allocation2 + $0x20] sm:$0xf]
      %v543 = vld [vmem:[#allocation2 + $0x24] sm:$0xff]
      %v544 = vld [vmem:[#allocation2 + $0x2c] sm:$0xf]
      %v545 = vld [vmem:[#allocation2 + $0x30] sm:$0xff]
      %v546 = vld [vmem:[#allocation2 + $0x38] sm:$0xf]
      %v547 = vld [vmem:[#allocation2 + $0x3c] sm:$0xff]
      %v548 = vld [vmem:[#allocation2 + $0x44] sm:$0xf]
      %v549 = vld [vmem:[#allocation2 + $0x48] sm:$0xff]
      %v550 = vld [vmem:[#allocation2 + $0x50] sm:$0xf]
      %v551 = vld [vmem:[#allocation2 + $0x54] sm:$0xff]
      %v552 = vld [vmem:[#allocation2 + $0x5c] sm:$0xf]
      %v553 = vld [vmem:[#allocation2 + $0x60] sm:$0xff]
      %v554 = vld [vmem:[#allocation2 + $0x68] sm:$0xf]
      %v555 = vld [vmem:[#allocation2 + $0x6c] sm:$0xff]
      %v556 = vld [vmem:[#allocation2 + $0x74] sm:$0xf]
      %v557 = vld [vmem:[#allocation2 + $0x78] sm:$0xff]
      %v558 = vld [vmem:[#allocation2 + $0x80] sm:$0xf]
      %v559 = vld [vmem:[#allocation2 + $0x84] sm:$0xff]
      %v560 = vld [vmem:[#allocation2 + $0x8c] sm:$0xf]
      %v561 = vld [vmem:[#allocation2 + $0x90] sm:$0xff]
      %v562 = vld [vmem:[#allocation2 + $0x98] sm:$0xf]
      %v563 = vld [vmem:[#allocation2 + $0x9c] sm:$0xff]
      %v564 = vld [vmem:[#allocation2 + $0xa4] sm:$0xf]
      %v565 = vld [vmem:[#allocation2 + $0xa8] sm:$0xff]
      %v566 = vld [vmem:[#allocation2 + $0xb0] sm:$0xf]
      %v567 = vld [vmem:[#allocation2 + $0xb4] sm:$0xff]
      %v568 = vld [vmem:[#allocation2 + $0xbc] sm:$0xf]
      %v569 = vld [vmem:[#allocation2 + $0xc0] sm:$0xff]
      %v570 = vld [vmem:[#allocation2 + $0xc8] sm:$0xf]
      %v571 = vld [vmem:[#allocation2 + $0xcc] sm:$0xff]
      %v572 = vld [vmem:[#allocation2 + $0xd4] sm:$0xf]
      %v574 = vunpack.c.l.b16 %v536
      %v575 = vunpack.c.h.b16 %v536
      %v576 = vpack.c.b16 %v574, %v574
      %v577 = vpack.c.b16 %v575, %v575
      %v615 = vunpack.c.l.b16 %v537
      %v616 = vunpack.c.h.b16 %v537
      %v617 = vunpack.c.l.b16 %v538
      %v618 = vunpack.c.l.b16 %v539
      %v619 = vunpack.c.h.b16 %v539
      %v620 = vunpack.c.l.b16 %v540
      %v621 = vunpack.c.l.b16 %v541
      %v622 = vunpack.c.h.b16 %v541
      %v623 = vunpack.c.l.b16 %v542
      %v624 = vunpack.c.l.b16 %v543
      %v625 = vunpack.c.h.b16 %v543
      %v626 = vunpack.c.l.b16 %v544
      %v627 = vunpack.c.l.b16 %v545
      %v628 = vunpack.c.h.b16 %v545
      %v629 = vunpack.c.l.b16 %v546
      %v630 = vunpack.c.l.b16 %v547
      %v631 = vunpack.c.h.b16 %v547
      %v632 = vunpack.c.l.b16 %v548
      %v633 = vunpack.c.l.b16 %v549
      %v634 = vunpack.c.h.b16 %v549
      %v635 = vunpack.c.l.b16 %v550
      %v636 = vunpack.c.l.b16 %v551
      %v637 = vunpack.c.h.b16 %v551
      %v638 = vunpack.c.l.b16 %v552
      %v639 = vunpack.c.l.b16 %v553
      %v640 = vunpack.c.h.b16 %v553
      %v641 = vunpack.c.l.b16 %v554
      %v642 = vunpack.c.l.b16 %v555
      %v643 = vunpack.c.h.b16 %v555
      %v644 = vunpack.c.l.b16 %v556
      %v645 = vunpack.c.l.b16 %v557
      %v646 = vunpack.c.h.b16 %v557
      %v647 = vunpack.c.l.b16 %v558
      %v648 = vunpack.c.l.b16 %v559
      %v649 = vunpack.c.h.b16 %v559
      %v650 = vunpack.c.l.b16 %v560
      %v651 = vunpack.c.l.b16 %v561
      %v652 = vunpack.c.h.b16 %v561
      %v653 = vunpack.c.l.b16 %v562
      %v654 = vunpack.c.l.b16 %v563
      %v655 = vunpack.c.h.b16 %v563
      %v656 = vunpack.c.l.b16 %v564
      %v657 = vunpack.c.l.b16 %v565
      %v658 = vunpack.c.h.b16 %v565
      %v659 = vunpack.c.l.b16 %v566
      %v660 = vunpack.c.l.b16 %v567
      %v661 = vunpack.c.h.b16 %v567
      %v662 = vunpack.c.l.b16 %v568
      %v663 = vunpack.c.l.b16 %v569
      %v664 = vunpack.c.h.b16 %v569
      %v665 = vunpack.c.l.b16 %v570
      %v666 = vunpack.c.l.b16 %v571
      %v667 = vunpack.c.h.b16 %v571
      %v668 = vunpack.c.l.b16 %v572
      %v669 = vpack.c.b16 %v618, %v615
      %v670 = vpack.c.b16 %v619, %v616
      %v671 = vpack.c.b16 %v620, %v617
      %v672 = vpack.c.b16 %v624, %v621
      %v673 = vpack.c.b16 %v625, %v622
      %v674 = vpack.c.b16 %v626, %v623
      %v675 = vpack.c.b16 %v630, %v627
      %v676 = vpack.c.b16 %v631, %v628
      %v677 = vpack.c.b16 %v632, %v629
      %v678 = vpack.c.b16 %v636, %v633
      %v679 = vpack.c.b16 %v637, %v634
      %v680 = vpack.c.b16 %v638, %v635
      %v681 = vpack.c.b16 %v642, %v639
      %v682 = vpack.c.b16 %v643, %v640
      %v683 = vpack.c.b16 %v644, %v641
      %v684 = vpack.c.b16 %v648, %v645
      %v685 = vpack.c.b16 %v649, %v646
      %v686 = vpack.c.b16 %v650, %v647
      %v687 = vpack.c.b16 %v654, %v651
      %v688 = vpack.c.b16 %v655, %v652
      %v689 = vpack.c.b16 %v656, %v653
      %v690 = vpack.c.b16 %v660, %v657
      %v691 = vpack.c.b16 %v661, %v658
      %v692 = vpack.c.b16 %v662, %v659
      %v693 = vpack.c.b16 %v666, %v663
      %v694 = vpack.c.b16 %v667, %v664
      %v695 = vpack.c.b16 %v668, %v665
      %vm723 = vcmask 130048
      %v725 = vsel %vm723, %v577, 0
      %727 = vmatpush.bf16.msra.mxu0 %v690
      %728 = vmatpush.bf16.msra.mxu0 %v687
      %729 = vmatpush.bf16.msra.mxu0 %v684
      %730 = vmatpush.bf16.msra.mxu0 %v681
      %731 = vmatpush.bf16.msra.mxu0 %v678
      %732 = vmatpush.bf16.msra.mxu0 %v675
      %733 = vmatpush.bf16.msra.mxu0 %v672
      %734 = vmatpush.bf16.msra.mxu0 %v669
      %735 = vmatmul.bf16.gmra.mxu0 %v576
      %v736 = vpop.f32.mrf.mxu0
      %v737 = vadd.f32 0.0, %v736
      %v738 = vpop.f32.mrf.mxu0
      %739 = vdwg.mxu0
      %740 = vmatpush.bf16.msra.mxu0 0
      %741 = vmatpush.bf16.msra.mxu0 0
      %742 = vmatpush.bf16.msra.mxu0 0
      %743 = vmatpush.bf16.msra.mxu0 0
      %744 = vmatpush.bf16.msra.mxu0 0
      %745 = vmatpush.bf16.msra.mxu0 0
      %746 = vmatpush.bf16.msra.mxu0 0
      %747 = vmatpush.bf16.msra.mxu0 %v693
      %748 = vmatmul.bf16.gmra.mxu0 %v725
      %v749 = vpop.f32.mrf.mxu0
      %v750 = vadd.f32 %v737, %v749
      %v751 = vpop.f32.mrf.mxu0
      %752 = vdwg.mxu0
      %753 = vmatpush.bf16.msra.mxu0 %v691
      %754 = vmatpush.bf16.msra.mxu0 %v688
      %755 = vmatpush.bf16.msra.mxu0 %v685
      %756 = vmatpush.bf16.msra.mxu0 %v682
      %757 = vmatpush.bf16.msra.mxu0 %v679
      %758 = vmatpush.bf16.msra.mxu0 %v676
      %759 = vmatpush.bf16.msra.mxu0 %v673
      %760 = vmatpush.bf16.msra.mxu0 %v670
      %761 = vmatmul.bf16.gmra.mxu0 %v576
      %v762 = vpop.f32.mrf.mxu0
      %v763 = vadd.f32 0.0, %v762
      %v764 = vpop.f32.mrf.mxu0
      %765 = vdwg.mxu0
      %766 = vmatpush.bf16.msra.mxu0 0
      %767 = vmatpush.bf16.msra.mxu0 0
      %768 = vmatpush.bf16.msra.mxu0 0
      %769 = vmatpush.bf16.msra.mxu0 0
      %770 = vmatpush.bf16.msra.mxu0 0
      %771 = vmatpush.bf16.msra.mxu0 0
      %772 = vmatpush.bf16.msra.mxu0 0
      %773 = vmatpush.bf16.msra.mxu0 %v694
      %774 = vmatmul.bf16.gmra.mxu0 %v725
      %v775 = vpop.f32.mrf.mxu0
      %v776 = vadd.f32 %v763, %v775
      %v777 = vpop.f32.mrf.mxu0
      %778 = vdwg.mxu0
      %779 = vmatpush.bf16.msra.mxu0 %v692
      %780 = vmatpush.bf16.msra.mxu0 %v689
      %781 = vmatpush.bf16.msra.mxu0 %v686
      %782 = vmatpush.bf16.msra.mxu0 %v683
      %783 = vmatpush.bf16.msra.mxu0 %v680
      %784 = vmatpush.bf16.msra.mxu0 %v677
      %785 = vmatpush.bf16.msra.mxu0 %v674
      %786 = vmatpush.bf16.msra.mxu0 %v671
      %787 = vmatmul.bf16.gmra.mxu0 %v576
      %v788 = vpop.f32.mrf.mxu0
      %v789 = vadd.f32 0.0, %v788
      %v790 = vpop.f32.mrf.mxu0
      %791 = vdwg.mxu0
      %792 = vmatpush.bf16.msra.mxu0 0
      %793 = vmatpush.bf16.msra.mxu0 0
      %794 = vmatpush.bf16.msra.mxu0 0
      %795 = vmatpush.bf16.msra.mxu0 0
      %796 = vmatpush.bf16.msra.mxu0 0
      %797 = vmatpush.bf16.msra.mxu0 0
      %798 = vmatpush.bf16.msra.mxu0 0
      %799 = vmatpush.bf16.msra.mxu0 %v695
      %800 = vmatmul.bf16.gmra.mxu0 %v725
      %v801 = vpop.f32.mrf.mxu0
      %v802 = vadd.f32 %v789, %v801
      %v803 = vpop.f32.mrf.mxu0
      %804 = vdwg.mxu0
      %805 = vst [vmem:[%s206] sm:$0xff] %v750
      %806 = vst [vmem:[%s206 + $0x8] sm:$0xff] %v776
      %vm807 = vcmask 261120
      %808 = vst.msk [vmem:[%s206 + $0x10] sm:$0xff] %vm807, %v802
      %p809 = scmp.lt.s32.totalorder %s18, 1
      %s810 = scalar_select %p809, %s18, 1
      %p811 = scmp.lt.s32.totalorder %s19, 0
      %s812 = scalar_select %p811, %s19, 0
      %s813 = smul.addr %s812, 3
      %s814 = smul.addr %s810, 3
      %s815 = sadd.s32 %s813, %s814
      %s816 = smul.addr %s815, 8
      %s817 = scalar_lea.vmem %s3, %s816
      // Predicated region
      $region33: #{ninasr_forward.8} parent=31 // pred_check
        %p818 = pneg %p116
      $region34: #{ninasr_forward.8} parent=31 // pred_check_branch
        %820 = sbr.rel (%p818) target = $region36
      $region35: #{ninasr_forward.8} parent=31 // pred_region
        _
      $region36: #{ninasr_forward.8} parent=31 // pred_fallthru
        _
    $region32: #{ninasr_forward.8} parent=5 // pred_fallthru
      _
    %p821 = scmp.le.s32.totalorder 2, %s9
    // Predicated region
    $region37: #{ninasr_forward.8} parent=5 // pred_check
      %p822 = pneg %p821
    $region38: #{ninasr_forward.8} parent=5 // pred_check_branch
      %824 = sbr.rel (%p822) target = $region40
    $region39: #{ninasr_forward.8} parent=5 // pred_region
      %s825 = ssub.s32 %s9, 2
      // Predicated region
      $region41: #{ninasr_forward.8} parent=39 // pred_check
        %p826 = pneg %p122
      $region42: #{ninasr_forward.8} parent=39 // pred_check_branch
        %828 = sbr.rel (%p826) target = $region44
      $region43: #{ninasr_forward.8} parent=39 // pred_region
        %p829 = scmp.lt.s32.totalorder %s20, 1
        %s830 = scalar_select %p829, %s20, 1
        %p831 = scmp.lt.s32.totalorder %s21, 0
        %s832 = scalar_select %p831, %s21, 0
        %s833 = smul.addr %s832, 3
        %s834 = smul.addr %s830, 3
        %s835 = sadd.s32 %s833, %s834
        %s836 = smul.addr %s835, 8
        %s837 = scalar_lea.vmem %s3, %s836
      $region44: #{ninasr_forward.8} parent=39 // pred_fallthru
        _
    $region40: #{ninasr_forward.8} parent=5 // pred_fallthru
      _
  $region6: #{ninasr_forward.8} parent=0 // loop_footer
    %s13 = sadd.s32 1, %s9
  $region7: #{ninasr_forward.8} parent=0 // loop_footer_branch
    %8 = sbr.rel target = $region3
  $region8: #{ninasr_forward.8} parent=0 // loop_exit
    _

// kernel: ninasr_forward.11
$region0: #{ninasr_forward.11}
  #allocation0 [shape = 'u32[]', space=smem, size = 0x4, offset = 0x4, fixed_abs, tag = 'smem constant byte address 0x4 - core index']
  #allocation1 [shape = 'u32[72,128]{1,0:T(1,128)}', space=vmem, size = 0x9000, scoped, tag = 'internal scratch']
  #allocation2 [shape = 'bf16[72,288]{1,0:T(8,128)(2,1)}', space=vmem, size = 0xd800, scoped, tag = 'scratch operand']
  %s0 = inlined_call_operand.vmem [shape: f32[2,1,8,326], index: 0, kind: input, shape index: {}]
  %s1 = inlined_call_operand.vmem [shape: bf16[12,72], index: 1, kind: input, shape index: {}]
  %s2 = inlined_call_operand.vmem [shape: f32[12,1], index: 2, kind: input, shape index: {}]
  %s3 = inlined_call_operand.vmem [shape: f32[2,1,12,288], index: 3, kind: output, shape index: {}]
  %s4 = sld [smem:[#allocation0]]
  $region45: #{ninasr_forward.11} parent=0
    _
  %s6 = ssub.s32 1, %s4
  %s7 = scalar_select 0, %s6, %s4
  loop: start=0, step=1, limit=4
  $region2: #{ninasr_forward.11} parent=0 // loop_pre_header
    _
  $region3: #{ninasr_forward.11} parent=0 // loop_header
    %s9 = sphi 0, %s13
    %p10 = scmp.ge.s32.totalorder %s9, 4
    %s16 = sphi 0, %s28
    %s17 = sphi 0, %s24
    %s18 = sphi 0, %s16
    %s19 = sphi 0, %s17
    %s20 = sphi 0, %s18
    %s21 = sphi 0, %s19
    %s33 = sphi 0, %s35
    %s36 = sphi 0, %s33
    %s37 = sphi 0, %s36
    %s53 = sphi 0, %s37
    %s57 = sphi 0, %s57
    %s59 = sphi 0, %s57
    %s60 = sphi 0, %s59
    %s74 = sphi 0, %s60
    %s78 = sphi 0, %s78
    %s80 = sphi 0, %s78
    %s81 = sphi 0, %s80
    %s95 = sphi 0, %s81
    %s103 = sphi 0, %s105
    %s106 = sphi 0, %s103
    %s107 = sphi 0, %s106
    %s123 = sphi 0, %s107
  $region4: #{ninasr_forward.11} parent=0 // loop_header_branch
    %12 = sbr.rel (%p10) target = $region8
  $region5: #{ninasr_forward.11} parent=0 // loop_body
    %s14 = ssub.s32 %s9, 1
    %s15 = ssub.s32 %s9, 2
    %s22 = sadd.s32 1, %s17
    %p23 = scmp.ge.s32.totalorder %s22, 1
    %s24 = scalar_select %p23, 0, %s22
    %s25 = sadd.s32 1, %s16
    %s26 = scalar_select %p23, %s25, %s16
    %p27 = scmp.ge.s32.totalorder %s26, 2
    %s28 = scalar_select %p27, 0, %s26
    %s29 = ssub.s32 %s16, %s28
    %s30 = ssub.s32 %s17, %s24
    %s31 = sor.u32 %s29, %s30
    %p32 = scmp.eq.s32.totalorder %s31, 0
    %s34 = sadd.s32 %s33, 1
    %s35 = scalar_select %p32, %s33, %s34
    %p38 = pneg %p32
    %p39 = scmp.eq.s32.totalorder %s9, 1
    %p40 = por %p38, %p39
    %p41 = scmp.ne.s32.totalorder %s33, %s36
    %p42 = scmp.eq.s32.totalorder %s9, 0
    %p43 = por %p41, %p42
    %p44 = scmp.ne.s32.totalorder %s33, %s36
    %p45 = scmp.eq.s32.totalorder %s14, 1
    %p46 = por %p44, %p45
    %p47 = scmp.ne.s32.totalorder %s36, %s37
    %p48 = scmp.eq.s32.totalorder %s14, 0
    %p49 = por %p47, %p48
    %p50 = scmp.ne.s32.totalorder %s36, %s37
    %p51 = scmp.eq.s32.totalorder %s15, 1
    %p52 = por %p50, %p51
    %p54 = scmp.ne.s32.totalorder %s37, %s53
    %p55 = scmp.eq.s32.totalorder %s15, 0
    %p56 = por %p54, %p55
    %s58 = sadd.s32 %s57, 1
    %p61 = scmp.eq.s32.totalorder %s9, 1
    %p62 = scmp.ne.s32.totalorder %s57, %s59
    %p63 = scmp.eq.s32.totalorder %s9, 0
    %p64 = por %p62, %p63
    %p65 = scmp.ne.s32.totalorder %s57, %s59
    %p66 = scmp.eq.s32.totalorder %s14, 1
    %p67 = por %p65, %p66
    %p68 = scmp.ne.s32.totalorder %s59, %s60
    %p69 = scmp.eq.s32.totalorder %s14, 0
    %p70 = por %p68, %p69
    %p71 = scmp.ne.s32.totalorder %s59, %s60
    %p72 = scmp.eq.s32.totalorder %s15, 1
    %p73 = por %p71, %p72
    %p75 = scmp.ne.s32.totalorder %s60, %s74
    %p76 = scmp.eq.s32.totalorder %s15, 0
    %p77 = por %p75, %p76
    %s79 = sadd.s32 %s78, 1
    %p82 = scmp.eq.s32.totalorder %s9, 1
    %p83 = scmp.ne.s32.totalorder %s78, %s80
    %p84 = scmp.eq.s32.totalorder %s9, 0
    %p85 = por %p83, %p84
    %p86 = scmp.ne.s32.totalorder %s78, %s80
    %p87 = scmp.eq.s32.totalorder %s14, 1
    %p88 = por %p86, %p87
    %p89 = scmp.ne.s32.totalorder %s80, %s81
    %p90 = scmp.eq.s32.totalorder %s14, 0
    %p91 = por %p89, %p90
    %p92 = scmp.ne.s32.totalorder %s80, %s81
    %p93 = scmp.eq.s32.totalorder %s15, 1
    %p94 = por %p92, %p93
    %p96 = scmp.ne.s32.totalorder %s81, %s95
    %p97 = scmp.eq.s32.totalorder %s15, 0
    %p98 = por %p96, %p97
    %s99 = ssub.s32 %s16, %s28
    %s100 = ssub.s32 %s17, %s24
    %s101 = sor.u32 %s99, %s100
    %p102 = scmp.eq.s32.totalorder %s101, 0
    %s104 = sadd.s32 %s103, 1
    %s105 = scalar_select %p102, %s103, %s104
    %p108 = pneg %p102
    %p109 = scmp.eq.s32.totalorder %s9, 1
    %p110 = por %p108, %p109
    %p111 = scmp.ne.s32.totalorder %s103, %s106
    %p112 = scmp.eq.s32.totalorder %s9, 0
    %p113 = por %p111, %p112
    %p114 = scmp.ne.s32.totalorder %s103, %s106
    %p115 = scmp.eq.s32.totalorder %s14, 1
    %p116 = por %p114, %p115
    %p117 = scmp.ne.s32.totalorder %s106, %s107
    %p118 = scmp.eq.s32.totalorder %s14, 0
    %p119 = por %p117, %p118
    %p120 = scmp.ne.s32.totalorder %s106, %s107
    %p121 = scmp.eq.s32.totalorder %s15, 1
    %p122 = por %p120, %p121
    %p124 = scmp.ne.s32.totalorder %s107, %s123
    %p125 = scmp.eq.s32.totalorder %s15, 0
    %p126 = por %p124, %p125
    %p127 = scmp.le.s32.totalorder 1, %s9
    %p128 = scmp.lt.s32.totalorder %s9, 3
    %p129 = pnand %p127, %p128
    %p130 = pneg %p129
    // Predicated region
    $region9: #{ninasr_forward.11} parent=5 // pred_check
      _
    $region10: #{ninasr_forward.11} parent=5 // pred_check_branch
      %132 = sbr.rel (%p129) target = $region12
    $region11: #{ninasr_forward.11} parent=5 // pred_region
      %s133 = ssub.s32 %s9, 1
      // Predicated region
      $region13: #{ninasr_forward.11} parent=11 // pred_check
        %p134 = pneg %p70
      $region14: #{ninasr_forward.11} parent=11 // pred_check_branch
        %136 = sbr.rel (%p134) target = $region16
      $region15: #{ninasr_forward.11} parent=11 // pred_region
        _
      $region16: #{ninasr_forward.11} parent=11 // pred_fallthru
        _
      // Predicated region
      $region17: #{ninasr_forward.11} parent=11 // pred_check
        %p137 = pneg %p91
      $region18: #{ninasr_forward.11} parent=11 // pred_check_branch
        %139 = sbr.rel (%p137) target = $region20
      $region19: #{ninasr_forward.11} parent=11 // pred_region
        _
      $region20: #{ninasr_forward.11} parent=11 // pred_fallthru
        _
    $region12: #{ninasr_forward.11} parent=5 // pred_fallthru
      _
    %p140 = scmp.lt.s32.totalorder %s9, 2
    // Predicated region
    $region21: #{ninasr_forward.11} parent=5 // pred_check
      %p141 = pneg %p140
    $region22: #{ninasr_forward.11} parent=5 // pred_check_branch
      %143 = sbr.rel (%p141) target = $region24
    $region23: #{ninasr_forward.11} parent=5 // pred_region
      // Predicated region
      $region25: #{ninasr_forward.11} parent=23 // pred_check
        %p144 = pneg %p43
      $region26: #{ninasr_forward.11} parent=23 // pred_check_branch
        %146 = sbr.rel (%p144) target = $region28
      $region27: #{ninasr_forward.11} parent=23 // pred_region
        %p147 = scmp.lt.s32.totalorder %s16, 1
        %s148 = scalar_select %p147, %s16, 1
        %p149 = scmp.lt.s32.totalorder %s17, 0
        %s150 = scalar_select %p149, %s17, 0
        %s151 = smul.addr %s150, 3
        %s152 = smul.addr %s148, 3
        %s153 = sadd.s32 %s151, %s152
        %s154 = smul.addr %s153, 8
        %s155 = scalar_lea.vmem %s0, %s154
      $region28: #{ninasr_forward.11} parent=23 // pred_fallthru
        _
    $region24: #{ninasr_forward.11} parent=5 // pred_fallthru
      _
    %p156 = scmp.le.s32.totalorder 1, %s9
    %p157 = scmp.lt.s32.totalorder %s9, 3
    %p158 = pnand %p156, %p157
    %p159 = pneg %p158
    // Predicated region
    $region29: #{ninasr_forward.11} parent=5 // pred_check
      _
    $region30: #{ninasr_forward.11} parent=5 // pred_check_branch
      %161 = sbr.rel (%p158) target = $region32
    $region31: #{ninasr_forward.11} parent=5 // pred_region
      %s162 = ssub.s32 %s9, 1
      %p163 = scmp.lt.s32.totalorder %s18, 1
      %s164 = scalar_select %p163, %s18, 1
      %p165 = scmp.lt.s32.totalorder %s19, 0
      %s166 = scalar_select %p165, %s19, 0
      %s167 = smul.addr %s166, 3
      %s168 = smul.addr %s164, 3
      %s169 = sadd.s32 %s167, %s168
      %s170 = smul.addr %s169, 8
      %s171 = scalar_lea.vmem %s0, %s170
      %p172 = pneg %p49
      %p173 = pneg %p46
      %p174 = pneg %p70
      %p175 = pneg %p67
      %p176 = pneg %p91
      %p177 = pneg %p88
      %p178 = pneg %p119
      %p179 = pneg %p116
      %p180 = scmp.lt.s32.totalorder %s18, 1
      %s181 = scalar_select %p180, %s18, 1
      %p182 = scmp.lt.s32.totalorder %s19, 0
      %s183 = scalar_select %p182, %s19, 0
      %s184 = smul.addr %s183, 6
      %s185 = smul.addr %s181, 6
      %s186 = sadd.s32 %s184, %s185
      %s187 = smul.addr %s186, 8
      %s188 = scalar_lea.vmem %s3, %s187
      %p189 = scmp.lt.s32.totalorder %s18, 1
      %s190 = scalar_select %p189, %s18, 1
      %p191 = scmp.lt.s32.totalorder %s19, 0
      %s192 = scalar_select %p191, %s19, 0
      %s193 = smul.addr %s192, 3
      %s194 = smul.addr %s190, 3
      %s195 = sadd.s32 %s193, %s194
      %s196 = smul.addr %s195, 8
      %s197 = scalar_lea.vmem %s0, %s196
      %p198 = scmp.lt.s32.totalorder %s18, 1
      %s199 = scalar_select %p198, %s18, 1
      %p200 = scmp.lt.s32.totalorder %s19, 0
      %s201 = scalar_select %p200, %s19, 0
      %s202 = smul.addr %s201, 6
      %s203 = smul.addr %s199, 6
      %s204 = sadd.s32 %s202, %s203
      %s205 = smul.addr %s204, 8
      %s206 = scalar_lea.vmem %s3, %s205
      %v208 = vld [vmem:[%s197] sm:$0xff]
      %v209 = vld [vmem:[%s197 + $0x8] sm:$0xff]
      %v210 = vld [vmem:[%s197 + $0x10] sm:$0xff]
      %v211 = vpack.c.bf16 %v209, %v208
      %v212 = vpack.c.bf16 %v210, %v210
      %213 = vst [vmem:[#allocation2] sm:$0xff] %v211
      %vm214 = vcmask 257024
      %215 = vst.msk [vmem:[#allocation2 + $0x8] sm:$0xf] %vm214, %v212
      %v216 = vld [vmem:[%s197] sm:$0xff]
      %v217 = vld [vmem:[%s197 + $0x8] sm:$0xff]
      %v218 = vld [vmem:[%s197 + $0x10] sm:$0xff]
      %v219 = vpack.c.bf16 %v217, %v216
      %v220 = vpack.c.bf16 %v218, %v218
      %223 = vrot.lane.b32.xlu0 %v219, 127
      %v224 = vpop.permute.xlu0 %223
      %225 = vrot.lane.b32.xlu0 %v220, 127
      %v226 = vpop.permute.xlu0 %225
      %v227 = vrot.slane %v224, 4
      %v228 = vrot.slane %v226, 4
      %vm229 = vcmask 1043456
      %v230 = vsel %vm229, %v227, %v228
      %vm231 = vcmask 1039360
      %v232 = vsel %vm231, %v224, %v230
      %235 = vst [vmem:[#allocation2 + $0xc] sm:$0xff] %v232
      %236 = vst.msk [vmem:[#allocation2 + $0x14] sm:$0xf] %vm214, %v226
      %v237 = vld [vmem:[%s197] sm:$0xff]
      %v238 = vld [vmem:[%s197 + $0x8] sm:$0xff]
      %v239 = vld [vmem:[%s197 + $0x10] sm:$0xff]
      %v240 = vpack.c.bf16 %v238, %v237
      %v241 = vpack.c.bf16 %v239, %v239
      %244 = vrot.lane.b32.xlu0 %v240, 126
      %v245 = vpop.permute.xlu0 %244
      %246 = vrot.lane.b32.xlu0 %v241, 126
      %v247 = vpop.permute.xlu0 %246
      %v248 = vrot.slane %v245, 4
      %v249 = vrot.slane %v247, 4
      %v250 = vsel %vm229, %v248, %v249
      %vm251 = vcmask 1031168
      %v252 = vsel %vm251, %v245, %v250
      %255 = vst [vmem:[#allocation2 + $0x18] sm:$0xff] %v252
      %256 = vst.msk [vmem:[#allocation2 + $0x20] sm:$0xf] %vm214, %v247
      %v257 = vld [vmem:[%s197] sm:$0xff]
      %v258 = vld [vmem:[%s197 + $0x8] sm:$0xff]
      %v259 = vld [vmem:[%s197 + $0x10] sm:$0xff]
      %v260 = vpack.c.bf16 %v258, %v257
      %v261 = vpack.c.bf16 %v259, %v259
      %264 = vrot.lane.b32.xlu0 %v260, 110
      %v265 = vpop.permute.xlu0 %264
      %266 = vrot.lane.b32.xlu0 %v261, 110
      %v267 = vpop.permute.xlu0 %266
      %v268 = vrot.slane %v265, 4
      %v269 = vrot.slane %v267, 4
      %v270 = vsel %vm229, %v268, %v269
      %vm271 = vcmask 900096
      %v272 = vsel %vm271, %v265, %v270
      %275 = vst [vmem:[#allocation2 + $0x24] sm:$0xff] %v272
      %276 = vst.msk [vmem:[#allocation2 + $0x2c] sm:$0xf] %vm214, %v267
      %v277 = vld [vmem:[%s197] sm:$0xff]
      %v278 = vld [vmem:[%s197 + $0x8] sm:$0xff]
      %v279 = vld [vmem:[%s197 + $0x10] sm:$0xff]
      %v280 = vpack.c.bf16 %v278, %v277
      %v281 = vpack.c.bf16 %v279, %v279
      %284 = vrot.lane.b32.xlu0 %v280, 109
      %v285 = vpop.permute.xlu0 %284
      %286 = vrot.lane.b32.xlu0 %v281, 109
      %v287 = vpop.permute.xlu0 %286
      %v288 = vrot.slane %v285, 4
      %v289 = vrot.slane %v287, 4
      %v290 = vsel %vm229, %v288, %v289
      %vm291 = vcmask 891904
      %v292 = vsel %vm291, %v285, %v290
      %295 = vst [vmem:[#allocation2 + $0x30] sm:$0xff] %v292
      %296 = vst.msk [vmem:[#allocation2 + $0x38] sm:$0xf] %vm214, %v287
      %v297 = vld [vmem:[%s197] sm:$0xff]
      %v298 = vld [vmem:[%s197 + $0x8] sm:$0xff]
      %v299 = vld [vmem:[%s197 + $0x10] sm:$0xff]
      %v300 = vpack.c.bf16 %v298, %v297
      %v301 = vpack.c.bf16 %v299, %v299
      %304 = vrot.lane.b32.xlu0 %v300, 108
      %v305 = vpop.permute.xlu0 %304
      %306 = vrot.lane.b32.xlu0 %v301, 108
      %v307 = vpop.permute.xlu0 %306
      %v308 = vrot.slane %v305, 4
      %v309 = vrot.slane %v307, 4
      %v310 = vsel %vm229, %v308, %v309
      %vm311 = vcmask 883712
      %v312 = vsel %vm311, %v305, %v310
      %315 = vst [vmem:[#allocation2 + $0x3c] sm:$0xff] %v312
      %316 = vst.msk [vmem:[#allocation2 + $0x44] sm:$0xf] %vm214, %v307
      %v317 = vld [vmem:[%s197] sm:$0xff]
      %v318 = vld [vmem:[%s197 + $0x8] sm:$0xff]
      %v319 = vld [vmem:[%s197 + $0x10] sm:$0xff]
      %v320 = vpack.c.bf16 %v318, %v317
      %v321 = vpack.c.bf16 %v319, %v319
      %324 = vrot.lane.b32.xlu0 %v320, 92
      %v325 = vpop.permute.xlu0 %324
      %326 = vrot.lane.b32.xlu0 %v321, 92
      %v327 = vpop.permute.xlu0 %326
      %v328 = vrot.slane %v325, 4
      %v329 = vrot.slane %v327, 4
      %v330 = vsel %vm229, %v328, %v329
      %vm331 = vcmask 752640
      %v332 = vsel %vm331, %v325, %v330
      %335 = vst [vmem:[#allocation2 + $0x48] sm:$0xff] %v332
      %336 = vst.msk [vmem:[#allocation2 + $0x50] sm:$0xf] %vm214, %v327
      %v337 = vld [vmem:[%s197] sm:$0xff]
      %v338 = vld [vmem:[%s197 + $0x8] sm:$0xff]
      %v339 = vld [vmem:[%s197 + $0x10] sm:$0xff]
      %v340 = vpack.c.bf16 %v338, %v337
      %v341 = vpack.c.bf16 %v339, %v339
      %344 = vrot.lane.b32.xlu0 %v340, 91
      %v345 = vpop.permute.xlu0 %344
      %346 = vrot.lane.b32.xlu0 %v341, 91
      %v347 = vpop.permute.xlu0 %346
      %v348 = vrot.slane %v345, 4
      %v349 = vrot.slane %v347, 4
      %v350 = vsel %vm229, %v348, %v349
      %vm351 = vcmask 744448
      %v352 = vsel %vm351, %v345, %v350
      %355 = vst [vmem:[#allocation2 + $0x54] sm:$0xff] %v352
      %356 = vst.msk [vmem:[#allocation2 + $0x5c] sm:$0xf] %vm214, %v347
      %v357 = vld [vmem:[%s197] sm:$0xff]
      %v358 = vld [vmem:[%s197 + $0x8] sm:$0xff]
      %v359 = vld [vmem:[%s197 + $0x10] sm:$0xff]
      %v360 = vpack.c.bf16 %v358, %v357
      %v361 = vpack.c.bf16 %v359, %v359
      %364 = vrot.lane.b32.xlu0 %v360, 90
      %v365 = vpop.permute.xlu0 %364
      %366 = vrot.lane.b32.xlu0 %v361, 90
      %v367 = vpop.permute.xlu0 %366
      %v368 = vrot.slane %v365, 4
      %v369 = vrot.slane %v367, 4
      %v370 = vsel %vm229, %v368, %v369
      %vm371 = vcmask 736256
      %v372 = vsel %vm371, %v365, %v370
      %375 = vst [vmem:[#allocation2 + $0x60] sm:$0xff] %v372
      %376 = vst.msk [vmem:[#allocation2 + $0x68] sm:$0xf] %vm214, %v367
      %v377 = vld [vmem:[%s1] sm:$0xf]
      %v378 = vld [vmem:[%s1 + $0x4] sm:$0x3]
      %v379 = vld [vmem:[#allocation2] sm:$0xff]
      %v380 = vld [vmem:[#allocation2 + $0x8] sm:$0xf]
      %v381 = vld [vmem:[#allocation2 + $0xc] sm:$0xff]
      %v382 = vld [vmem:[#allocation2 + $0x14] sm:$0xf]
      %v383 = vld [vmem:[#allocation2 + $0x18] sm:$0xff]
      %v384 = vld [vmem:[#allocation2 + $0x20] sm:$0xf]
      %v385 = vld [vmem:[#allocation2 + $0x24] sm:$0xff]
      %v386 = vld [vmem:[#allocation2 + $0x2c] sm:$0xf]
      %v387 = vld [vmem:[#allocation2 + $0x30] sm:$0xff]
      %v388 = vld [vmem:[#allocation2 + $0x38] sm:$0xf]
      %v389 = vld [vmem:[#allocation2 + $0x3c] sm:$0xff]
      %v390 = vld [vmem:[#allocation2 + $0x44] sm:$0xf]
      %v391 = vld [vmem:[#allocation2 + $0x48] sm:$0xff]
      %v392 = vld [vmem:[#allocation2 + $0x50] sm:$0xf]
      %v393 = vld [vmem:[#allocation2 + $0x54] sm:$0xff]
      %v394 = vld [vmem:[#allocation2 + $0x5c] sm:$0xf]
      %v395 = vld [vmem:[#allocation2 + $0x60] sm:$0xff]
      %v396 = vld [vmem:[#allocation2 + $0x68] sm:$0xf]
      %v397 = vld [vmem:[%s2] sm:$0xff]
      %v398 = vld [vmem:[%s2 + $0x8] sm:$0xf]
      %400 = vset.pattern.permute.xlu0 0
      %401 = vperm.xlu0 %400, %v397
      %v402 = vpop.permute.xlu0 %401
      %405 = vset.pattern.permute.xlu0 0
      %406 = vperm.xlu0 %405, %v398
      %v407 = vpop.permute.xlu0 %406
      %v411 = vunpack.c.l.b16 %v377
      %v412 = vunpack.c.l.b16 %v378
      %v413 = vpack.c.b16 %v412, %v411
      %v432 = vunpack.c.l.b16 %v379
      %v433 = vunpack.c.h.b16 %v379
      %v434 = vunpack.c.l.b16 %v380
      %v435 = vunpack.c.l.b16 %v381
      %v436 = vunpack.c.h.b16 %v381
      %v437 = vunpack.c.l.b16 %v382
      %v438 = vunpack.c.l.b16 %v383
      %v439 = vunpack.c.h.b16 %v383
      %v440 = vunpack.c.l.b16 %v384
      %v441 = vunpack.c.l.b16 %v385
      %v442 = vunpack.c.h.b16 %v385
      %v443 = vunpack.c.l.b16 %v386
      %v444 = vunpack.c.l.b16 %v387
      %v445 = vunpack.c.h.b16 %v387
      %v446 = vunpack.c.l.b16 %v388
      %v447 = vunpack.c.l.b16 %v389
      %v448 = vunpack.c.h.b16 %v389
      %v449 = vunpack.c.l.b16 %v390
      %v450 = vunpack.c.l.b16 %v391
      %v451 = vunpack.c.h.b16 %v391
      %v452 = vunpack.c.l.b16 %v392
      %v453 = vunpack.c.l.b16 %v393
      %v454 = vunpack.c.h.b16 %v393
      %v455 = vunpack.c.l.b16 %v394
      %v456 = vunpack.c.l.b16 %v395
      %v457 = vunpack.c.h.b16 %v395
      %v458 = vunpack.c.l.b16 %v396
      %v459 = vpack.c.b16 %v435, %v432
      %v460 = vpack.c.b16 %v436, %v433
      %v461 = vpack.c.b16 %v437, %v434
      %v462 = vpack.c.b16 %v441, %v438
      %v463 = vpack.c.b16 %v442, %v439
      %v464 = vpack.c.b16 %v443, %v440
      %v465 = vpack.c.b16 %v447, %v444
      %v466 = vpack.c.b16 %v448, %v445
      %v467 = vpack.c.b16 %v449, %v446
      %v468 = vpack.c.b16 %v453, %v450
      %v469 = vpack.c.b16 %v454, %v451
      %v470 = vpack.c.b16 %v455, %v452
      %v471 = vpack.c.b16 %v456, %v456
      %v472 = vpack.c.b16 %v457, %v457
      %v473 = vpack.c.b16 %v458, %v458
      %vm486 = vcmask 588800
      %v488 = vsel %vm486, %v413, 0
      %vm490 = vcmask 1043456
      %v492 = vsel %vm490, %v471, 0
      %v495 = vsel %vm490, %v472, 0
      %v498 = vsel %vm490, %v473, 0
      %500 = vmatpush.bf16.msra.mxu0 0
      %501 = vmatpush.bf16.msra.mxu0 0
      %502 = vmatpush.bf16.msra.mxu0 0
      %503 = vmatpush.bf16.msra.mxu0 %v492
      %504 = vmatpush.bf16.msra.mxu0 %v468
      %505 = vmatpush.bf16.msra.mxu0 %v465
      %506 = vmatpush.bf16.msra.mxu0 %v462
      %507 = vmatpush.bf16.msra.mxu0 %v459
      %508 = vmatmul.bf16.gmra.mxu0 %v488
      %v509 = vpop.f32.mrf.mxu0
      %v510 = vadd.f32 %v402, %v509
      %v511 = vpop.f32.mrf.mxu0
      %v512 = vadd.f32 %v407, %v511
      %513 = vdwg.mxu0
      %514 = vmatpush.bf16.msra.mxu0 0
      %515 = vmatpush.bf16.msra.mxu0 0
      %516 = vmatpush.bf16.msra.mxu0 0
      %517 = vmatpush.bf16.msra.mxu0 %v495
      %518 = vmatpush.bf16.msra.mxu0 %v469
      %519 = vmatpush.bf16.msra.mxu0 %v466
      %520 = vmatpush.bf16.msra.mxu0 %v463
      %521 = vmatpush.bf16.msra.mxu0 %v460
      %522 = vmatmul.bf16.gmra.mxu0 %v488
      %v523 = vpop.f32.mrf.mxu0
      %v524 = vadd.f32 %v402, %v523
      %v525 = vpop.f32.mrf.mxu0
      %v526 = vadd.f32 %v407, %v525
      %527 = vdwg.mxu0
      %528 = vmatpush.bf16.msra.mxu0 0
      %529 = vmatpush.bf16.msra.mxu0 0
      %530 = vmatpush.bf16.msra.mxu0 0
      %531 = vmatpush.bf16.msra.mxu0 %v498
      %532 = vmatpush.bf16.msra.mxu0 %v470
      %533 = vmatpush.bf16.msra.mxu0 %v467
      %534 = vmatpush.bf16.msra.mxu0 %v464
      %535 = vmatpush.bf16.msra.mxu0 %v461
      %536 = vmatmul.bf16.gmra.mxu0 %v488
      %v537 = vpop.f32.mrf.mxu0
      %v538 = vadd.f32 %v402, %v537
      %v539 = vpop.f32.mrf.mxu0
      %v540 = vadd.f32 %v407, %v539
      %541 = vdwg.mxu0
      %542 = vst [vmem:[%s206] sm:$0xff] %v510
      %543 = vst [vmem:[%s206 + $0x8] sm:$0xff] %v524
      %vm544 = vcmask 261120
      %545 = vst.msk [vmem:[%s206 + $0x10] sm:$0xff] %vm544, %v538
      %546 = vst [vmem:[%s206 + $0x18] sm:$0xf] %v512
      %547 = vst [vmem:[%s206 + $0x20] sm:$0xf] %v526
      %548 = vst.msk [vmem:[%s206 + $0x28] sm:$0xf] %vm214, %v540
      %p549 = scmp.lt.s32.totalorder %s18, 1
      %s550 = scalar_select %p549, %s18, 1
      %p551 = scmp.lt.s32.totalorder %s19, 0
      %s552 = scalar_select %p551, %s19, 0
      %s553 = smul.addr %s552, 6
      %s554 = smul.addr %s550, 6
      %s555 = sadd.s32 %s553, %s554
      %s556 = smul.addr %s555, 8
      %s557 = scalar_lea.vmem %s3, %s556
      // Predicated region
      $region33: #{ninasr_forward.11} parent=31 // pred_check
        %p558 = pneg %p116
      $region34: #{ninasr_forward.11} parent=31 // pred_check_branch
        %560 = sbr.rel (%p558) target = $region36
      $region35: #{ninasr_forward.11} parent=31 // pred_region
        _
      $region36: #{ninasr_forward.11} parent=31 // pred_fallthru
        _
    $region32: #{ninasr_forward.11} parent=5 // pred_fallthru
      _
    %p561 = scmp.le.s32.totalorder 2, %s9
    // Predicated region
    $region37: #{ninasr_forward.11} parent=5 // pred_check
      %p562 = pneg %p561
    $region38: #{ninasr_forward.11} parent=5 // pred_check_branch
      %564 = sbr.rel (%p562) target = $region40
    $region39: #{ninasr_forward.11} parent=5 // pred_region
      %s565 = ssub.s32 %s9, 2
      // Predicated region
      $region41: #{ninasr_forward.11} parent=39 // pred_check
        %p566 = pneg %p122
      $region42: #{ninasr_forward.11} parent=39 // pred_check_branch
        %568 = sbr.rel (%p566) target = $region44
      $region43: #{ninasr_forward.11} parent=39 // pred_region
        %p569 = scmp.lt.s32.totalorder %s20, 1
        %s570 = scalar_select %p569, %s20, 1
        %p571 = scmp.lt.s32.totalorder %s21, 0
        %s572 = scalar_select %p571, %s21, 0
        %s573 = smul.addr %s572, 6
        %s574 = smul.addr %s570, 6
        %s575 = sadd.s32 %s573, %s574
        %s576 = smul.addr %s575, 8
        %s577 = scalar_lea.vmem %s3, %s576
      $region44: #{ninasr_forward.11} parent=39 // pred_fallthru
        _
    $region40: #{ninasr_forward.11} parent=5 // pred_fallthru
      _
  $region6: #{ninasr_forward.11} parent=0 // loop_footer
    %s13 = sadd.s32 1, %s9
  $region7: #{ninasr_forward.11} parent=0 // loop_footer_branch
    %8 = sbr.rel target = $region3
  $region8: #{ninasr_forward.11} parent=0 // loop_exit
    _

</llo_original>
